<compile_context>
chip_gen: v6e
topology: v6e:2x2x1
jax: 0.10.0
libtpu: 0.0.40
codegen_flags: <defaults>
</compile_context>

<pallas_src>
import jax
import jax.numpy as jnp
from jax import lax
from jax.experimental import pallas as pl
from jax.experimental.pallas import tpu as pltpu


# ---------------------------------------------------------------------------
# Fused kernel: BiLSTM (PyTorch gate order i, f, g, o) + attention + linear
# ---------------------------------------------------------------------------
def classifier_kernel(len_ref,     # [Bt, 1]    int32 sequence lengths
                      x_ref,       # [S, Bt, E] f32 time-major embedded input
                      w_ih_ref,    # [E, 8H]    bf16, cols: fwd(i,f,g,o)|bwd(i,f,g,o)
                      w_hh_ref,    # [2H, 8H]   bf16 block-diag (fwd | bwd)
                      b_ref,       # [1, 8H]    f32 (= b_ih + b_hh per direction)
                      w_att_ref,   # [2H, A]    bf16
                      b_att_ref,   # [1, A]     f32
                      v_ref,       # [A, 1]     bf16 attention context vector
                      w_out_ref,   # [2H, Cp]   bf16 (classes padded lane-dense)
                      b_out_ref,   # [1, Cp]    f32
                      out_ref,     # [Bt, Cp]   f32
                      xp_sc,       # [S*Bt, 8H] f32  hoisted input projection
                      h_all,       # [S, Bt, 2H] f32 hidden states (zero @ pad)
                      mask_sc,     # [S, Bt, 1] f32  valid mask (built in-kernel)
                      h_both,      # [Bt, 2H]   f32 hidden carry [h_fwd | h_bwd]
                      cf, cb):     # [Bt, H]    f32 cell carries
    S, Bt, E = x_ref.shape
    H = cf.shape[1]
    G = 4 * H
    D = 2 * H
    f32 = jnp.float32
    bf16 = jnp.bfloat16

    # ---- (1) hoisted input projection: one bf16 MXU matmul for all steps and
    #      both directions, into a single 2-D scratch (no split / no 3-D reshape)
    x2d = x_ref[...].reshape(S * Bt, E).astype(bf16)
    xp_sc[...] = (jnp.dot(x2d, w_ih_ref[...], preferred_element_type=f32)
                  + b_ref[...])

    h_both[...] = jnp.zeros_like(h_both)
    cf[...] = jnp.zeros_like(cf)
    cb[...] = jnp.zeros_like(cb)
    lens = len_ref[...]                                     # [Bt, 1] int32

    def combine(g, c_prev, h_prev, keep):
        i = jax.nn.sigmoid(g[:, 0 * H:1 * H])
        f = jax.nn.sigmoid(g[:, 1 * H:2 * H])
        gg = jnp.tanh(g[:, 2 * H:3 * H])
        o = jax.nn.sigmoid(g[:, 3 * H:4 * H])
        c_new = f * c_prev + i * gg
        h_new = o * jnp.tanh(c_new)
        # padded steps keep previous state (pack_padded_sequence emulation)
        return jnp.where(keep, h_new, h_prev), jnp.where(keep, c_new, c_prev)

    def step(t, carry):
        tb = S - 1 - t
        keep_f = t < lens                                   # [Bt, 1] bool
        keep_b = tb < lens

        # ---- (2) single merged MXU push per step; the carry already holds
        #      [h_f | h_b] so there is no lane concat on the critical path.
        h_prev = h_both[...]                                # [Bt, 2H] f32
        gates = jnp.dot(h_prev.astype(bf16), w_hh_ref[...],
                        preferred_element_type=f32)         # [Bt, 8H]

        rf = pl.multiple_of(t * Bt, 8)                      # fwd uses time t
        rb = pl.multiple_of(tb * Bt, 8)                     # bwd uses S-1-t
        g_f = gates[:, :G] + xp_sc[pl.ds(rf, Bt), :G]
        g_b = gates[:, G:] + xp_sc[pl.ds(rb, Bt), G:]

        hf_new, cf_new = combine(g_f, cf[...], h_prev[:, :H], keep_f)
        hb_new, cb_new = combine(g_b, cb[...], h_prev[:, H:], keep_b)
        cf[...] = cf_new
        cb[...] = cb_new
        h_both[:, :H] = hf_new
        h_both[:, H:] = hb_new

        # hidden states (zeros at padded positions) go straight into the
        # combined [S, Bt, 2H] buffer -> no post-loop concat, stays in VMEM.
        h_all[t, :, :H] = jnp.where(keep_f, hf_new, 0.0)
        h_all[tb, :, H:] = jnp.where(keep_b, hb_new, 0.0)
        mask_sc[t] = keep_f.astype(f32)
        return carry

    # Fully unroll short static sequences so the LLO scheduler can interleave
    # the independent fwd/bwd chains; cap the unroll factor for long S.
    lax.fori_loop(0, S, step, 0, unroll=(S if S <= 16 else 4))

    # ---- (3) fused masked additive attention + output linear + bias
    h2d = h_all[...].reshape(S * Bt, D)
    proj = jnp.tanh(jnp.dot(h2d.astype(bf16), w_att_ref[...],
                            preferred_element_type=f32) + b_att_ref[...])
    # context-vector scores on the MXU (no broadcasted multiply + XLU reduce)
    scores = jnp.dot(proj.astype(bf16), v_ref[...],
                     preferred_element_type=f32)            # [S*Bt, 1]
    scores = scores.reshape(S, Bt, 1)

    m3 = mask_sc[...]                                       # [S, Bt, 1]
    scores = jnp.where(m3 > 0.0, scores, f32(-1e30))
    scores = scores - jnp.max(scores, axis=0, keepdims=True)
    e = jnp.exp(scores) * m3
    denom = jnp.maximum(jnp.sum(e, axis=0, keepdims=True), f32(1e-30))
    att = e / denom                                         # [S, Bt, 1]

    ctx = jnp.sum(att * h_all[...], axis=0)                 # [Bt, 2H]
    out_ref[...] = (jnp.dot(ctx.astype(bf16), w_out_ref[...],
                            preferred_element_type=f32) + b_out_ref[...])


# ---------------------------------------------------------------------------
# Parameters & weight packing
# ---------------------------------------------------------------------------
def make_params(key, V, E, H, A, C):
    ks = jax.random.split(key, 9)

    def init(k, shape, scale=0.1):
        return jax.random.normal(k, shape, dtype=jnp.float32) * scale

    return dict(
        emb=init(ks[0], (V, E)),
        wf_ih=init(ks[1], (E, 4 * H)),
        wf_hh=init(ks[2], (H, 4 * H)),
        bf=jnp.zeros((1, 4 * H), jnp.float32),
        wb_ih=init(ks[3], (E, 4 * H)),
        wb_hh=init(ks[4], (H, 4 * H)),
        bb=jnp.zeros((1, 4 * H), jnp.float32),
        w_att=init(ks[5], (2 * H, A)),
        b_att=jnp.zeros((1, A), jnp.float32),
        v_att=init(ks[6], (1, 1, A)),
        w_out=init(ks[7], (2 * H, C)),
        b_out=init(ks[8], (1, C)),
    )


def _pack_params(p, c_pad):
    H = p["wf_hh"].shape[0]
    G = 4 * H
    C = p["w_out"].shape[1]
    bf16 = jnp.bfloat16
    w_ih = jnp.concatenate([p["wf_ih"], p["wb_ih"]], axis=1).astype(bf16)     # [E, 8H]
    zero = jnp.zeros((H, G), jnp.float32)
    w_hh = jnp.concatenate(
        [jnp.concatenate([p["wf_hh"], zero], axis=1),
         jnp.concatenate([zero, p["wb_hh"]], axis=1)], axis=0).astype(bf16)   # [2H, 8H]
    # NOTE: when porting real PyTorch weights, this single packed bias must be
    #       b_ih + b_hh for each direction.
    b = jnp.concatenate([p["bf"], p["bb"]], axis=1)                           # [1, 8H] f32
    w_att = p["w_att"].astype(bf16)
    v_col = p["v_att"].reshape(-1, 1).astype(bf16)                            # [A, 1]
    w_out = (jnp.zeros((2 * H, c_pad), jnp.float32)
             .at[:, :C].set(p["w_out"]).astype(bf16))                         # [2H, Cp]
    b_out = jnp.zeros((1, c_pad), jnp.float32).at[:, :C].set(p["b_out"])      # [1, Cp]
    return w_ih, w_hh, b, w_att, p["b_att"], v_col, w_out, b_out


# ---------------------------------------------------------------------------
# Wrapper
# ---------------------------------------------------------------------------
def classifier_forward(review, length, mask, params, *, bt=128):
    # `mask` is the standard right-padded length mask (same information as
    # `length`); the kernel rebuilds it in-registers from `length`, which also
    # drives the pack_padded_sequence state gating.
    del mask
    B, S = review.shape
    H = params["wf_hh"].shape[0]
    E = params["emb"].shape[1]
    C = params["w_out"].shape[1]
    C_pad = max(128, ((C + 127) // 128) * 128)      # lane-dense output stores

    # batch tile: sublane-aligned, no bigger than the (padded) batch.
    bt = max(8, min(((bt + 7) // 8) * 8, ((B + 7) // 8) * 8))
    B_pad = ((B + bt - 1) // bt) * bt
    pad = B_pad - B
    review_p = jnp.pad(review, ((0, pad), (0, 0)))
    len_p = jnp.pad(length.astype(jnp.int32), (0, pad)).reshape(B_pad, 1)

    # embedding gather directly time-major: transpose the tiny int32 id
    # matrix, never the float activations.
    x_tm = jnp.take(params["emb"], review_p.T, axis=0)                 # [S, B_pad, E]

    w_ih, w_hh, b, w_att, b_att, v_col, w_out, b_out = _pack_params(params, C_pad)

    def full_spec(a):
        return pl.BlockSpec(a.shape, lambda i, nd=a.ndim: (0,) * nd)

    nb = B_pad // bt
    # Per-grid-step VMEM: ~S*bt*(8H+2H)*4 bytes of scratch + the [S,bt,E] input
    # block.  On v7x (64 MiB VMEM) shrink bt (or chunk the hoisted projection
    # over S) when this approaches the scoped limit, and keep nb >= 2 so the
    # 'parallel' batch axis can shard across both TensorCores.
    logits_p = pl.pallas_call(
        classifier_kernel,
        out_shape=jax.ShapeDtypeStruct((B_pad, C_pad), jnp.float32),
        grid=(nb,),
        in_specs=[
            pl.BlockSpec((bt, 1), lambda i: (i, 0)),          # lengths
            pl.BlockSpec((S, bt, E), lambda i: (0, i, 0)),    # embedded input
            full_spec(w_ih), full_spec(w_hh), full_spec(b),
            full_spec(w_att), full_spec(b_att), full_spec(v_col),
            full_spec(w_out), full_spec(b_out),
        ],
        out_specs=pl.BlockSpec((bt, C_pad), lambda i: (i, 0)),
        scratch_shapes=[
            pltpu.VMEM((S * bt, 8 * H), jnp.float32),   # xp (fwd|bwd input proj)
            pltpu.VMEM((S, bt, 2 * H), jnp.float32),    # h_all (fwd|bwd)
            pltpu.VMEM((S, bt, 1), jnp.float32),        # valid mask
            pltpu.VMEM((bt, 2 * H), jnp.float32),       # h carry (fwd|bwd)
            pltpu.VMEM((bt, H), jnp.float32),           # c fwd
            pltpu.VMEM((bt, H), jnp.float32),           # c bwd
        ],
        compiler_params=pltpu.CompilerParams(
            dimension_semantics=("parallel",),
            vmem_limit_bytes=32 * 1024 * 1024,
        ),
    )(len_p, x_tm, w_ih, w_hh, b, w_att, b_att, v_col, w_out, b_out)

    return logits_p[:B, :C]


if __name__ == "__main__":
    V, E, H, A, C = 50, 32, 32, 32, 5     # vocab, emb, lstm hidden, attn, classes
    B, S = 4, 8                           # batch, seq

    key = jax.random.PRNGKey(0)
    kp, kr = jax.random.split(key)
    params = make_params(kp, V, E, H, A, C)

    review = jax.random.randint(kr, (B, S), 0, V, dtype=jnp.int32)
    length = jnp.array([8, 6, 5, 3], dtype=jnp.int32)
    mask = (jnp.arange(S)[None, :] < length[:, None]).astype(jnp.float32)

    fwd = jax.jit(lambda r, l, m: classifier_forward(r, l, m, params))
    out = jax.block_until_ready(fwd(review, length, mask))
    assert out.shape == (B, C) and out.dtype == jnp.float32
    print("KERNEL_OK")
</pallas_src>

<mosaic_0001>
module attributes {stable_mosaic.version = 11 : i64} {
  func.func @classifier_kernel(%arg0: i32, %arg1: memref<8x1xi32, #tpu.memory_space<vmem>>, %arg2: memref<8x8x32xf32, #tpu.memory_space<vmem>>, %arg3: memref<32x256xbf16, #tpu.memory_space<vmem>>, %arg4: memref<64x256xbf16, #tpu.memory_space<vmem>>, %arg5: memref<1x256xf32, #tpu.memory_space<vmem>>, %arg6: memref<64x32xbf16, #tpu.memory_space<vmem>>, %arg7: memref<1x32xf32, #tpu.memory_space<vmem>>, %arg8: memref<32x1xbf16, #tpu.memory_space<vmem>>, %arg9: memref<64x128xbf16, #tpu.memory_space<vmem>>, %arg10: memref<1x128xf32, #tpu.memory_space<vmem>>, %arg11: memref<8x128xf32, #tpu.memory_space<vmem>>, %arg12: memref<64x256xf32, #tpu.memory_space<vmem>>, %arg13: memref<8x8x64xf32, #tpu.memory_space<vmem>>, %arg14: memref<8x8x1xf32, #tpu.memory_space<vmem>>, %arg15: memref<8x64xf32, #tpu.memory_space<vmem>>, %arg16: memref<8x32xf32, #tpu.memory_space<vmem>>, %arg17: memref<8x32xf32, #tpu.memory_space<vmem>>) attributes {dimension_semantics = [#tpu.dimension_semantics<parallel>], iteration_bounds = array<i64: 1>, scalar_prefetch = 0 : i64, scratch_operands = 6 : i64, tpu.core_type = #tpu.core_type<tc>, window_params = [{transform_indices = @transform_0, window_bounds = array<i64: 8, 1>}, {transform_indices = @transform_1, window_bounds = array<i64: 8, 8, 32>}, {pipeline_mode = #tpu.pipeline_mode<synchronous>, transform_indices = @transform_2, window_bounds = array<i64: 32, 256>}, {pipeline_mode = #tpu.pipeline_mode<synchronous>, transform_indices = @transform_3, window_bounds = array<i64: 64, 256>}, {pipeline_mode = #tpu.pipeline_mode<synchronous>, transform_indices = @transform_4, window_bounds = array<i64: 1, 256>}, {pipeline_mode = #tpu.pipeline_mode<synchronous>, transform_indices = @transform_5, window_bounds = array<i64: 64, 32>}, {pipeline_mode = #tpu.pipeline_mode<synchronous>, transform_indices = @transform_6, window_bounds = array<i64: 1, 32>}, {pipeline_mode = #tpu.pipeline_mode<synchronous>, transform_indices = @transform_7, window_bounds = array<i64: 32, 1>}, {pipeline_mode = #tpu.pipeline_mode<synchronous>, transform_indices = @transform_8, window_bounds = array<i64: 64, 128>}, {pipeline_mode = #tpu.pipeline_mode<synchronous>, transform_indices = @transform_9, window_bounds = array<i64: 1, 128>}, {transform_indices = @transform_10, window_bounds = array<i64: 8, 128>}]} {
    %c0 = arith.constant 0 : index
    %c0_0 = arith.constant 0 : index
    %c0_1 = arith.constant 0 : index
    %0 = vector.load %arg2[%c0, %c0_0, %c0_1] : memref<8x8x32xf32, #tpu.memory_space<vmem>>, vector<8x8x32xf32>
    %1 = vector.shape_cast %0 : vector<8x8x32xf32> to vector<64x32xf32>
    %2 = arith.truncf %1 : vector<64x32xf32> to vector<64x32xbf16>
    %c0_2 = arith.constant 0 : index
    %c0_3 = arith.constant 0 : index
    %3 = vector.load %arg3[%c0_2, %c0_3] : memref<32x256xbf16, #tpu.memory_space<vmem>>, vector<32x256xbf16>
    %cst = arith.constant dense<0.000000e+00> : vector<64x256xf32>
    %4 = tpu.matmul %2, %3, %cst {dimension_numbers = #tpu.dot_dimension_numbers<[1], [0], [0], [1], [0, 0, 1, 1], [], []>} : vector<64x32xbf16>, vector<32x256xbf16>, vector<64x256xf32> -> vector<64x256xf32>
    %c0_4 = arith.constant 0 : index
    %c0_5 = arith.constant 0 : index
    %5 = vector.load %arg5[%c0_4, %c0_5] : memref<1x256xf32, #tpu.memory_space<vmem>>, vector<1x256xf32>
    %6 = vector.broadcast %5 : vector<1x256xf32> to vector<64x256xf32>
    %7 = arith.addf %4, %6 : vector<64x256xf32>
    %c0_6 = arith.constant 0 : index
    %c0_7 = arith.constant 0 : index
    %8 = vector.load %arg12[%c0_6, %c0_7] : memref<64x256xf32, #tpu.memory_space<vmem>>, vector<64x256xf32>
    tpu.vector_store %arg12[%c0_6, %c0_7], %7 {strides = array<i32>} : memref<64x256xf32, #tpu.memory_space<vmem>>, vector<64x256xf32>,
    %cst_8 = arith.constant 0.000000e+00 : f32
    %9 = vector.broadcast %cst_8 : f32 to vector<8x64xf32>
    %c0_9 = arith.constant 0 : index
    %c0_10 = arith.constant 0 : index
    %10 = vector.load %arg15[%c0_9, %c0_10] : memref<8x64xf32, #tpu.memory_space<vmem>>, vector<8x64xf32>
    tpu.vector_store %arg15[%c0_9, %c0_10], %9 {strides = array<i32>} : memref<8x64xf32, #tpu.memory_space<vmem>>, vector<8x64xf32>,
    %cst_11 = arith.constant 0.000000e+00 : f32
    %11 = vector.broadcast %cst_11 : f32 to vector<8x32xf32>
    %c0_12 = arith.constant 0 : index
    %c0_13 = arith.constant 0 : index
    %12 = vector.load %arg16[%c0_12, %c0_13] : memref<8x32xf32, #tpu.memory_space<vmem>>, vector<8x32xf32>
    tpu.vector_store %arg16[%c0_12, %c0_13], %11 {strides = array<i32>} : memref<8x32xf32, #tpu.memory_space<vmem>>, vector<8x32xf32>,
    %cst_14 = arith.constant 0.000000e+00 : f32
    %13 = vector.broadcast %cst_14 : f32 to vector<8x32xf32>
    %c0_15 = arith.constant 0 : index
    %c0_16 = arith.constant 0 : index
    %14 = vector.load %arg17[%c0_15, %c0_16] : memref<8x32xf32, #tpu.memory_space<vmem>>, vector<8x32xf32>
    tpu.vector_store %arg17[%c0_15, %c0_16], %13 {strides = array<i32>} : memref<8x32xf32, #tpu.memory_space<vmem>>, vector<8x32xf32>,
    %c0_17 = arith.constant 0 : index
    %c0_18 = arith.constant 0 : index
    %15 = vector.load %arg1[%c0_17, %c0_18] : memref<8x1xi32, #tpu.memory_space<vmem>>, vector<8x1xi32>
    %c0_i32 = arith.constant 0 : i32
    %c7_i32 = arith.constant 7 : i32
    %16 = arith.subi %c7_i32, %c0_i32 : i32
    %17 = vector.broadcast %c0_i32 : i32 to vector<8x1xi32>
    %18 = arith.cmpi slt, %17, %15 : vector<8x1xi32>
    %19 = vector.broadcast %16 : i32 to vector<8x1xi32>
    %20 = arith.cmpi slt, %19, %15 : vector<8x1xi32>
    %c0_19 = arith.constant 0 : index
    %c0_20 = arith.constant 0 : index
    %21 = vector.load %arg15[%c0_19, %c0_20] : memref<8x64xf32, #tpu.memory_space<vmem>>, vector<8x64xf32>
    %22 = arith.truncf %21 : vector<8x64xf32> to vector<8x64xbf16>
    %c0_21 = arith.constant 0 : index
    %c0_22 = arith.constant 0 : index
    %23 = vector.load %arg4[%c0_21, %c0_22] : memref<64x256xbf16, #tpu.memory_space<vmem>>, vector<64x256xbf16>
    %cst_23 = arith.constant dense<0.000000e+00> : vector<8x256xf32>
    %24 = tpu.matmul %22, %23, %cst_23 {dimension_numbers = #tpu.dot_dimension_numbers<[1], [0], [0], [1], [0, 0, 1, 1], [], []>} : vector<8x64xbf16>, vector<64x256xbf16>, vector<8x256xf32> -> vector<8x256xf32>
    %c8_i32 = arith.constant 8 : i32
    %25 = arith.muli %c0_i32, %c8_i32 : i32
    %26 = tpu.assume_multiple %25, 8 : i32
    %c8_i32_24 = arith.constant 8 : i32
    %27 = arith.muli %16, %c8_i32_24 : i32
    %28 = tpu.assume_multiple %27, 8 : i32
    %29 = vector.extract_strided_slice %24 {offsets = [0, 0], sizes = [8, 128], strides = [1, 1]} : vector<8x256xf32> to vector<8x128xf32>
    %30 = arith.index_cast %26 : i32 to index
    %c0_25 = arith.constant 0 : index
    %31 = vector.load %arg12[%30, %c0_25] : memref<64x256xf32, #tpu.memory_space<vmem>>, vector<8x128xf32>
    %32 = arith.addf %29, %31 : vector<8x128xf32>
    %33 = vector.extract_strided_slice %24 {offsets = [0, 128], sizes = [8, 128], strides = [1, 1]} : vector<8x256xf32> to vector<8x128xf32>
    %34 = arith.index_cast %28 : i32 to index
    %c128 = arith.constant 128 : index
    %35 = vector.load %arg12[%34, %c128] : memref<64x256xf32, #tpu.memory_space<vmem>>, vector<8x128xf32>
    %36 = arith.addf %33, %35 : vector<8x128xf32>
    %c0_26 = arith.constant 0 : index
    %c0_27 = arith.constant 0 : index
    %37 = vector.load %arg16[%c0_26, %c0_27] : memref<8x32xf32, #tpu.memory_space<vmem>>, vector<8x32xf32>
    %38 = vector.extract_strided_slice %21 {offsets = [0, 0], sizes = [8, 32], strides = [1, 1]} : vector<8x64xf32> to vector<8x32xf32>
    %39 = vector.extract_strided_slice %32 {offsets = [0, 0], sizes = [8, 32], strides = [1, 1]} : vector<8x128xf32> to vector<8x32xf32>
    %40 = arith.negf %39 : vector<8x32xf32>
    %41 = math.exp %40 : vector<8x32xf32>
    %cst_28 = arith.constant 1.000000e+00 : f32
    %42 = vector.broadcast %cst_28 : f32 to vector<8x32xf32>
    %43 = arith.addf %42, %41 : vector<8x32xf32>
    %44 = arith.divf %42, %43 : vector<8x32xf32>
    %45 = vector.extract_strided_slice %32 {offsets = [0, 32], sizes = [8, 32], strides = [1, 1]} : vector<8x128xf32> to vector<8x32xf32>
    %46 = arith.negf %45 : vector<8x32xf32>
    %47 = math.exp %46 : vector<8x32xf32>
    %cst_29 = arith.constant 1.000000e+00 : f32
    %48 = vector.broadcast %cst_29 : f32 to vector<8x32xf32>
    %49 = arith.addf %48, %47 : vector<8x32xf32>
    %50 = arith.divf %48, %49 : vector<8x32xf32>
    %51 = vector.extract_strided_slice %32 {offsets = [0, 64], sizes = [8, 32], strides = [1, 1]} : vector<8x128xf32> to vector<8x32xf32>
    %52 = math.tanh %51 : vector<8x32xf32>
    %53 = vector.extract_strided_slice %32 {offsets = [0, 96], sizes = [8, 32], strides = [1, 1]} : vector<8x128xf32> to vector<8x32xf32>
    %54 = arith.negf %53 : vector<8x32xf32>
    %55 = math.exp %54 : vector<8x32xf32>
    %cst_30 = arith.constant 1.000000e+00 : f32
    %56 = vector.broadcast %cst_30 : f32 to vector<8x32xf32>
    %57 = arith.addf %56, %55 : vector<8x32xf32>
    %58 = arith.divf %56, %57 : vector<8x32xf32>
    %59 = arith.mulf %50, %37 : vector<8x32xf32>
    %60 = arith.mulf %44, %52 : vector<8x32xf32>
    %61 = arith.addf %59, %60 : vector<8x32xf32>
    %62 = math.tanh %61 : vector<8x32xf32>
    %63 = arith.mulf %58, %62 : vector<8x32xf32>
    %64 = vector.shape_cast %18 : vector<8x1xi1> to vector<8x1xi1>
    %65 = vector.broadcast %64 : vector<8x1xi1> to vector<8x32xi1>
    %66 = arith.select %65, %63, %38 : vector<8x32xi1>, vector<8x32xf32>
    %67 = vector.shape_cast %18 : vector<8x1xi1> to vector<8x1xi1>
    %68 = vector.broadcast %67 : vector<8x1xi1> to vector<8x32xi1>
    %69 = arith.select %68, %61, %37 : vector<8x32xi1>, vector<8x32xf32>
    %c0_31 = arith.constant 0 : index
    %c0_32 = arith.constant 0 : index
    %70 = vector.load %arg17[%c0_31, %c0_32] : memref<8x32xf32, #tpu.memory_space<vmem>>, vector<8x32xf32>
    %71 = vector.extract_strided_slice %21 {offsets = [0, 32], sizes = [8, 32], strides = [1, 1]} : vector<8x64xf32> to vector<8x32xf32>
    %72 = vector.extract_strided_slice %36 {offsets = [0, 0], sizes = [8, 32], strides = [1, 1]} : vector<8x128xf32> to vector<8x32xf32>
    %73 = arith.negf %72 : vector<8x32xf32>
    %74 = math.exp %73 : vector<8x32xf32>
    %cst_33 = arith.constant 1.000000e+00 : f32
    %75 = vector.broadcast %cst_33 : f32 to vector<8x32xf32>
    %76 = arith.addf %75, %74 : vector<8x32xf32>
    %77 = arith.divf %75, %76 : vector<8x32xf32>
    %78 = vector.extract_strided_slice %36 {offsets = [0, 32], sizes = [8, 32], strides = [1, 1]} : vector<8x128xf32> to vector<8x32xf32>
    %79 = arith.negf %78 : vector<8x32xf32>
    %80 = math.exp %79 : vector<8x32xf32>
    %cst_34 = arith.constant 1.000000e+00 : f32
    %81 = vector.broadcast %cst_34 : f32 to vector<8x32xf32>
    %82 = arith.addf %81, %80 : vector<8x32xf32>
    %83 = arith.divf %81, %82 : vector<8x32xf32>
    %84 = vector.extract_strided_slice %36 {offsets = [0, 64], sizes = [8, 32], strides = [1, 1]} : vector<8x128xf32> to vector<8x32xf32>
    %85 = math.tanh %84 : vector<8x32xf32>
    %86 = vector.extract_strided_slice %36 {offsets = [0, 96], sizes = [8, 32], strides = [1, 1]} : vector<8x128xf32> to vector<8x32xf32>
    %87 = arith.negf %86 : vector<8x32xf32>
    %88 = math.exp %87 : vector<8x32xf32>
    %cst_35 = arith.constant 1.000000e+00 : f32
    %89 = vector.broadcast %cst_35 : f32 to vector<8x32xf32>
    %90 = arith.addf %89, %88 : vector<8x32xf32>
    %91 = arith.divf %89, %90 : vector<8x32xf32>
    %92 = arith.mulf %83, %70 : vector<8x32xf32>
    %93 = arith.mulf %77, %85 : vector<8x32xf32>
    %94 = arith.addf %92, %93 : vector<8x32xf32>
    %95 = math.tanh %94 : vector<8x32xf32>
    %96 = arith.mulf %91, %95 : vector<8x32xf32>
    %97 = vector.shape_cast %20 : vector<8x1xi1> to vector<8x1xi1>
    %98 = vector.broadcast %97 : vector<8x1xi1> to vector<8x32xi1>
    %99 = arith.select %98, %96, %71 : vector<8x32xi1>, vector<8x32xf32>
    %100 = vector.shape_cast %20 : vector<8x1xi1> to vector<8x1xi1>
    %101 = vector.broadcast %100 : vector<8x1xi1> to vector<8x32xi1>
    %102 = arith.select %101, %94, %70 : vector<8x32xi1>, vector<8x32xf32>
    %c0_36 = arith.constant 0 : index
    %c0_37 = arith.constant 0 : index
    %103 = vector.load %arg16[%c0_36, %c0_37] : memref<8x32xf32, #tpu.memory_space<vmem>>, vector<8x32xf32>
    tpu.vector_store %arg16[%c0_36, %c0_37], %69 {strides = array<i32>} : memref<8x32xf32, #tpu.memory_space<vmem>>, vector<8x32xf32>,
    %c0_38 = arith.constant 0 : index
    %c0_39 = arith.constant 0 : index
    %104 = vector.load %arg17[%c0_38, %c0_39] : memref<8x32xf32, #tpu.memory_space<vmem>>, vector<8x32xf32>
    tpu.vector_store %arg17[%c0_38, %c0_39], %102 {strides = array<i32>} : memref<8x32xf32, #tpu.memory_space<vmem>>, vector<8x32xf32>,
    %c0_40 = arith.constant 0 : index
    %c0_41 = arith.constant 0 : index
    %105 = vector.load %arg15[%c0_40, %c0_41] : memref<8x64xf32, #tpu.memory_space<vmem>>, vector<8x32xf32>
    tpu.vector_store %arg15[%c0_40, %c0_41], %66 {strides = array<i32>} : memref<8x64xf32, #tpu.memory_space<vmem>>, vector<8x32xf32>,
    %c0_42 = arith.constant 0 : index
    %c32 = arith.constant 32 : index
    %106 = vector.load %arg15[%c0_42, %c32] : memref<8x64xf32, #tpu.memory_space<vmem>>, vector<8x32xf32>
    tpu.vector_store %arg15[%c0_42, %c32], %99 {strides = array<i32>} : memref<8x64xf32, #tpu.memory_space<vmem>>, vector<8x32xf32>,
    %cst_43 = arith.constant 0.000000e+00 : f32
    %107 = vector.shape_cast %18 : vector<8x1xi1> to vector<8x1xi1>
    %108 = vector.broadcast %107 : vector<8x1xi1> to vector<8x32xi1>
    %109 = vector.broadcast %cst_43 : f32 to vector<8x32xf32>
    %110 = arith.select %108, %66, %109 : vector<8x32xi1>, vector<8x32xf32>
    %111 = arith.index_cast %c0_i32 : i32 to index
    %c0_44 = arith.constant 0 : index
    %c0_45 = arith.constant 0 : index
    %112 = vector.load %arg13[%111, %c0_44, %c0_45] : memref<8x8x64xf32, #tpu.memory_space<vmem>>, vector<1x8x32xf32>
    %113 = vector.shape_cast %112 : vector<1x8x32xf32> to vector<8x32xf32>
    %114 = vector.shape_cast %110 : vector<8x32xf32> to vector<1x8x32xf32>
    tpu.vector_store %arg13[%111, %c0_44, %c0_45], %114 {strides = array<i32>} : memref<8x8x64xf32, #tpu.memory_space<vmem>>, vector<1x8x32xf32>,
    %cst_46 = arith.constant 0.000000e+00 : f32
    %115 = vector.shape_cast %20 : vector<8x1xi1> to vector<8x1xi1>
    %116 = vector.broadcast %115 : vector<8x1xi1> to vector<8x32xi1>
    %117 = vector.broadcast %cst_46 : f32 to vector<8x32xf32>
    %118 = arith.select %116, %99, %117 : vector<8x32xi1>, vector<8x32xf32>
    %119 = arith.index_cast %16 : i32 to index
    %c0_47 = arith.constant 0 : index
    %c32_48 = arith.constant 32 : index
    %120 = vector.load %arg13[%119, %c0_47, %c32_48] : memref<8x8x64xf32, #tpu.memory_space<vmem>>, vector<1x8x32xf32>
    %121 = vector.shape_cast %120 : vector<1x8x32xf32> to vector<8x32xf32>
    %122 = vector.shape_cast %118 : vector<8x32xf32> to vector<1x8x32xf32>
    tpu.vector_store %arg13[%119, %c0_47, %c32_48], %122 {strides = array<i32>} : memref<8x8x64xf32, #tpu.memory_space<vmem>>, vector<1x8x32xf32>,
    %123 = arith.extui %18 : vector<8x1xi1> to vector<8x1xi32>
    %124 = arith.sitofp %123 : vector<8x1xi32> to vector<8x1xf32>
    %125 = arith.index_cast %c0_i32 : i32 to index
    %c0_49 = arith.constant 0 : index
    %c0_50 = arith.constant 0 : index
    %126 = vector.load %arg14[%125, %c0_49, %c0_50] : memref<8x8x1xf32, #tpu.memory_space<vmem>>, vector<1x8x1xf32>
    %127 = vector.shape_cast %126 : vector<1x8x1xf32> to vector<8x1xf32>
    %128 = vector.shape_cast %124 : vector<8x1xf32> to vector<1x8x1xf32>
    tpu.vector_store %arg14[%125, %c0_49, %c0_50], %128 {strides = array<i32>} : memref<8x8x1xf32, #tpu.memory_space<vmem>>, vector<1x8x1xf32>,
    %c1_i32 = arith.constant 1 : i32
    %c7_i32_51 = arith.constant 7 : i32
    %129 = arith.subi %c7_i32_51, %c1_i32 : i32
    %130 = vector.broadcast %c1_i32 : i32 to vector<8x1xi32>
    %131 = arith.cmpi slt, %130, %15 : vector<8x1xi32>
    %132 = vector.broadcast %129 : i32 to vector<8x1xi32>
    %133 = arith.cmpi slt, %132, %15 : vector<8x1xi32>
    %c0_52 = arith.constant 0 : index
    %c0_53 = arith.constant 0 : index
    %134 = vector.load %arg15[%c0_52, %c0_53] : memref<8x64xf32, #tpu.memory_space<vmem>>, vector<8x64xf32>
    %135 = arith.truncf %134 : vector<8x64xf32> to vector<8x64xbf16>
    %c0_54 = arith.constant 0 : index
    %c0_55 = arith.constant 0 : index
    %136 = vector.load %arg4[%c0_54, %c0_55] : memref<64x256xbf16, #tpu.memory_space<vmem>>, vector<64x256xbf16>
    %cst_56 = arith.constant dense<0.000000e+00> : vector<8x256xf32>
    %137 = tpu.matmul %135, %136, %cst_56 {dimension_numbers = #tpu.dot_dimension_numbers<[1], [0], [0], [1], [0, 0, 1, 1], [], []>} : vector<8x64xbf16>, vector<64x256xbf16>, vector<8x256xf32> -> vector<8x256xf32>
    %c8_i32_57 = arith.constant 8 : i32
    %138 = arith.muli %c1_i32, %c8_i32_57 : i32
    %139 = tpu.assume_multiple %138, 8 : i32
    %c8_i32_58 = arith.constant 8 : i32
    %140 = arith.muli %129, %c8_i32_58 : i32
    %141 = tpu.assume_multiple %140, 8 : i32
    %142 = vector.extract_strided_slice %137 {offsets = [0, 0], sizes = [8, 128], strides = [1, 1]} : vector<8x256xf32> to vector<8x128xf32>
    %143 = arith.index_cast %139 : i32 to index
    %c0_59 = arith.constant 0 : index
    %144 = vector.load %arg12[%143, %c0_59] : memref<64x256xf32, #tpu.memory_space<vmem>>, vector<8x128xf32>
    %145 = arith.addf %142, %144 : vector<8x128xf32>
    %146 = vector.extract_strided_slice %137 {offsets = [0, 128], sizes = [8, 128], strides = [1, 1]} : vector<8x256xf32> to vector<8x128xf32>
    %147 = arith.index_cast %141 : i32 to index
    %c128_60 = arith.constant 128 : index
    %148 = vector.load %arg12[%147, %c128_60] : memref<64x256xf32, #tpu.memory_space<vmem>>, vector<8x128xf32>
    %149 = arith.addf %146, %148 : vector<8x128xf32>
    %c0_61 = arith.constant 0 : index
    %c0_62 = arith.constant 0 : index
    %150 = vector.load %arg16[%c0_61, %c0_62] : memref<8x32xf32, #tpu.memory_space<vmem>>, vector<8x32xf32>
    %151 = vector.extract_strided_slice %134 {offsets = [0, 0], sizes = [8, 32], strides = [1, 1]} : vector<8x64xf32> to vector<8x32xf32>
    %152 = vector.extract_strided_slice %145 {offsets = [0, 0], sizes = [8, 32], strides = [1, 1]} : vector<8x128xf32> to vector<8x32xf32>
    %153 = arith.negf %152 : vector<8x32xf32>
    %154 = math.exp %153 : vector<8x32xf32>
    %cst_63 = arith.constant 1.000000e+00 : f32
    %155 = vector.broadcast %cst_63 : f32 to vector<8x32xf32>
    %156 = arith.addf %155, %154 : vector<8x32xf32>
    %157 = arith.divf %155, %156 : vector<8x32xf32>
    %158 = vector.extract_strided_slice %145 {offsets = [0, 32], sizes = [8, 32], strides = [1, 1]} : vector<8x128xf32> to vector<8x32xf32>
    %159 = arith.negf %158 : vector<8x32xf32>
    %160 = math.exp %159 : vector<8x32xf32>
    %cst_64 = arith.constant 1.000000e+00 : f32
    %161 = vector.broadcast %cst_64 : f32 to vector<8x32xf32>
    %162 = arith.addf %161, %160 : vector<8x32xf32>
    %163 = arith.divf %161, %162 : vector<8x32xf32>
    %164 = vector.extract_strided_slice %145 {offsets = [0, 64], sizes = [8, 32], strides = [1, 1]} : vector<8x128xf32> to vector<8x32xf32>
    %165 = math.tanh %164 : vector<8x32xf32>
    %166 = vector.extract_strided_slice %145 {offsets = [0, 96], sizes = [8, 32], strides = [1, 1]} : vector<8x128xf32> to vector<8x32xf32>
    %167 = arith.negf %166 : vector<8x32xf32>
    %168 = math.exp %167 : vector<8x32xf32>
    %cst_65 = arith.constant 1.000000e+00 : f32
    %169 = vector.broadcast %cst_65 : f32 to vector<8x32xf32>
    %170 = arith.addf %169, %168 : vector<8x32xf32>
    %171 = arith.divf %169, %170 : vector<8x32xf32>
    %172 = arith.mulf %163, %150 : vector<8x32xf32>
    %173 = arith.mulf %157, %165 : vector<8x32xf32>
    %174 = arith.addf %172, %173 : vector<8x32xf32>
    %175 = math.tanh %174 : vector<8x32xf32>
    %176 = arith.mulf %171, %175 : vector<8x32xf32>
    %177 = vector.shape_cast %131 : vector<8x1xi1> to vector<8x1xi1>
    %178 = vector.broadcast %177 : vector<8x1xi1> to vector<8x32xi1>
    %179 = arith.select %178, %176, %151 : vector<8x32xi1>, vector<8x32xf32>
    %180 = vector.shape_cast %131 : vector<8x1xi1> to vector<8x1xi1>
    %181 = vector.broadcast %180 : vector<8x1xi1> to vector<8x32xi1>
    %182 = arith.select %181, %174, %150 : vector<8x32xi1>, vector<8x32xf32>
    %c0_66 = arith.constant 0 : index
    %c0_67 = arith.constant 0 : index
    %183 = vector.load %arg17[%c0_66, %c0_67] : memref<8x32xf32, #tpu.memory_space<vmem>>, vector<8x32xf32>
    %184 = vector.extract_strided_slice %134 {offsets = [0, 32], sizes = [8, 32], strides = [1, 1]} : vector<8x64xf32> to vector<8x32xf32>
    %185 = vector.extract_strided_slice %149 {offsets = [0, 0], sizes = [8, 32], strides = [1, 1]} : vector<8x128xf32> to vector<8x32xf32>
    %186 = arith.negf %185 : vector<8x32xf32>
    %187 = math.exp %186 : vector<8x32xf32>
    %cst_68 = arith.constant 1.000000e+00 : f32
    %188 = vector.broadcast %cst_68 : f32 to vector<8x32xf32>
    %189 = arith.addf %188, %187 : vector<8x32xf32>
    %190 = arith.divf %188, %189 : vector<8x32xf32>
    %191 = vector.extract_strided_slice %149 {offsets = [0, 32], sizes = [8, 32], strides = [1, 1]} : vector<8x128xf32> to vector<8x32xf32>
    %192 = arith.negf %191 : vector<8x32xf32>
    %193 = math.exp %192 : vector<8x32xf32>
    %cst_69 = arith.constant 1.000000e+00 : f32
    %194 = vector.broadcast %cst_69 : f32 to vector<8x32xf32>
    %195 = arith.addf %194, %193 : vector<8x32xf32>
    %196 = arith.divf %194, %195 : vector<8x32xf32>
    %197 = vector.extract_strided_slice %149 {offsets = [0, 64], sizes = [8, 32], strides = [1, 1]} : vector<8x128xf32> to vector<8x32xf32>
    %198 = math.tanh %197 : vector<8x32xf32>
    %199 = vector.extract_strided_slice %149 {offsets = [0, 96], sizes = [8, 32], strides = [1, 1]} : vector<8x128xf32> to vector<8x32xf32>
    %200 = arith.negf %199 : vector<8x32xf32>
    %201 = math.exp %200 : vector<8x32xf32>
    %cst_70 = arith.constant 1.000000e+00 : f32
    %202 = vector.broadcast %cst_70 : f32 to vector<8x32xf32>
    %203 = arith.addf %202, %201 : vector<8x32xf32>
    %204 = arith.divf %202, %203 : vector<8x32xf32>
    %205 = arith.mulf %196, %183 : vector<8x32xf32>
    %206 = arith.mulf %190, %198 : vector<8x32xf32>
    %207 = arith.addf %205, %206 : vector<8x32xf32>
    %208 = math.tanh %207 : vector<8x32xf32>
    %209 = arith.mulf %204, %208 : vector<8x32xf32>
    %210 = vector.shape_cast %133 : vector<8x1xi1> to vector<8x1xi1>
    %211 = vector.broadcast %210 : vector<8x1xi1> to vector<8x32xi1>
    %212 = arith.select %211, %209, %184 : vector<8x32xi1>, vector<8x32xf32>
    %213 = vector.shape_cast %133 : vector<8x1xi1> to vector<8x1xi1>
    %214 = vector.broadcast %213 : vector<8x1xi1> to vector<8x32xi1>
    %215 = arith.select %214, %207, %183 : vector<8x32xi1>, vector<8x32xf32>
    %c0_71 = arith.constant 0 : index
    %c0_72 = arith.constant 0 : index
    %216 = vector.load %arg16[%c0_71, %c0_72] : memref<8x32xf32, #tpu.memory_space<vmem>>, vector<8x32xf32>
    tpu.vector_store %arg16[%c0_71, %c0_72], %182 {strides = array<i32>} : memref<8x32xf32, #tpu.memory_space<vmem>>, vector<8x32xf32>,
    %c0_73 = arith.constant 0 : index
    %c0_74 = arith.constant 0 : index
    %217 = vector.load %arg17[%c0_73, %c0_74] : memref<8x32xf32, #tpu.memory_space<vmem>>, vector<8x32xf32>
    tpu.vector_store %arg17[%c0_73, %c0_74], %215 {strides = array<i32>} : memref<8x32xf32, #tpu.memory_space<vmem>>, vector<8x32xf32>,
    %c0_75 = arith.constant 0 : index
    %c0_76 = arith.constant 0 : index
    %218 = vector.load %arg15[%c0_75, %c0_76] : memref<8x64xf32, #tpu.memory_space<vmem>>, vector<8x32xf32>
    tpu.vector_store %arg15[%c0_75, %c0_76], %179 {strides = array<i32>} : memref<8x64xf32, #tpu.memory_space<vmem>>, vector<8x32xf32>,
    %c0_77 = arith.constant 0 : index
    %c32_78 = arith.constant 32 : index
    %219 = vector.load %arg15[%c0_77, %c32_78] : memref<8x64xf32, #tpu.memory_space<vmem>>, vector<8x32xf32>
    tpu.vector_store %arg15[%c0_77, %c32_78], %212 {strides = array<i32>} : memref<8x64xf32, #tpu.memory_space<vmem>>, vector<8x32xf32>,
    %cst_79 = arith.constant 0.000000e+00 : f32
    %220 = vector.shape_cast %131 : vector<8x1xi1> to vector<8x1xi1>
    %221 = vector.broadcast %220 : vector<8x1xi1> to vector<8x32xi1>
    %222 = vector.broadcast %cst_79 : f32 to vector<8x32xf32>
    %223 = arith.select %221, %179, %222 : vector<8x32xi1>, vector<8x32xf32>
    %224 = arith.index_cast %c1_i32 : i32 to index
    %c0_80 = arith.constant 0 : index
    %c0_81 = arith.constant 0 : index
    %225 = vector.load %arg13[%224, %c0_80, %c0_81] : memref<8x8x64xf32, #tpu.memory_space<vmem>>, vector<1x8x32xf32>
    %226 = vector.shape_cast %225 : vector<1x8x32xf32> to vector<8x32xf32>
    %227 = vector.shape_cast %223 : vector<8x32xf32> to vector<1x8x32xf32>
    tpu.vector_store %arg13[%224, %c0_80, %c0_81], %227 {strides = array<i32>} : memref<8x8x64xf32, #tpu.memory_space<vmem>>, vector<1x8x32xf32>,
    %cst_82 = arith.constant 0.000000e+00 : f32
    %228 = vector.shape_cast %133 : vector<8x1xi1> to vector<8x1xi1>
    %229 = vector.broadcast %228 : vector<8x1xi1> to vector<8x32xi1>
    %230 = vector.broadcast %cst_82 : f32 to vector<8x32xf32>
    %231 = arith.select %229, %212, %230 : vector<8x32xi1>, vector<8x32xf32>
    %232 = arith.index_cast %129 : i32 to index
    %c0_83 = arith.constant 0 : index
    %c32_84 = arith.constant 32 : index
    %233 = vector.load %arg13[%232, %c0_83, %c32_84] : memref<8x8x64xf32, #tpu.memory_space<vmem>>, vector<1x8x32xf32>
    %234 = vector.shape_cast %233 : vector<1x8x32xf32> to vector<8x32xf32>
    %235 = vector.shape_cast %231 : vector<8x32xf32> to vector<1x8x32xf32>
    tpu.vector_store %arg13[%232, %c0_83, %c32_84], %235 {strides = array<i32>} : memref<8x8x64xf32, #tpu.memory_space<vmem>>, vector<1x8x32xf32>,
    %236 = arith.extui %131 : vector<8x1xi1> to vector<8x1xi32>
    %237 = arith.sitofp %236 : vector<8x1xi32> to vector<8x1xf32>
    %238 = arith.index_cast %c1_i32 : i32 to index
    %c0_85 = arith.constant 0 : index
    %c0_86 = arith.constant 0 : index
    %239 = vector.load %arg14[%238, %c0_85, %c0_86] : memref<8x8x1xf32, #tpu.memory_space<vmem>>, vector<1x8x1xf32>
    %240 = vector.shape_cast %239 : vector<1x8x1xf32> to vector<8x1xf32>
    %241 = vector.shape_cast %237 : vector<8x1xf32> to vector<1x8x1xf32>
    tpu.vector_store %arg14[%238, %c0_85, %c0_86], %241 {strides = array<i32>} : memref<8x8x1xf32, #tpu.memory_space<vmem>>, vector<1x8x1xf32>,
    %c2_i32 = arith.constant 2 : i32
    %c7_i32_87 = arith.constant 7 : i32
    %242 = arith.subi %c7_i32_87, %c2_i32 : i32
    %243 = vector.broadcast %c2_i32 : i32 to vector<8x1xi32>
    %244 = arith.cmpi slt, %243, %15 : vector<8x1xi32>
    %245 = vector.broadcast %242 : i32 to vector<8x1xi32>
    %246 = arith.cmpi slt, %245, %15 : vector<8x1xi32>
    %c0_88 = arith.constant 0 : index
    %c0_89 = arith.constant 0 : index
    %247 = vector.load %arg15[%c0_88, %c0_89] : memref<8x64xf32, #tpu.memory_space<vmem>>, vector<8x64xf32>
    %248 = arith.truncf %247 : vector<8x64xf32> to vector<8x64xbf16>
    %c0_90 = arith.constant 0 : index
    %c0_91 = arith.constant 0 : index
    %249 = vector.load %arg4[%c0_90, %c0_91] : memref<64x256xbf16, #tpu.memory_space<vmem>>, vector<64x256xbf16>
    %cst_92 = arith.constant dense<0.000000e+00> : vector<8x256xf32>
    %250 = tpu.matmul %248, %249, %cst_92 {dimension_numbers = #tpu.dot_dimension_numbers<[1], [0], [0], [1], [0, 0, 1, 1], [], []>} : vector<8x64xbf16>, vector<64x256xbf16>, vector<8x256xf32> -> vector<8x256xf32>
    %c8_i32_93 = arith.constant 8 : i32
    %251 = arith.muli %c2_i32, %c8_i32_93 : i32
    %252 = tpu.assume_multiple %251, 8 : i32
    %c8_i32_94 = arith.constant 8 : i32
    %253 = arith.muli %242, %c8_i32_94 : i32
    %254 = tpu.assume_multiple %253, 8 : i32
    %255 = vector.extract_strided_slice %250 {offsets = [0, 0], sizes = [8, 128], strides = [1, 1]} : vector<8x256xf32> to vector<8x128xf32>
    %256 = arith.index_cast %252 : i32 to index
    %c0_95 = arith.constant 0 : index
    %257 = vector.load %arg12[%256, %c0_95] : memref<64x256xf32, #tpu.memory_space<vmem>>, vector<8x128xf32>
    %258 = arith.addf %255, %257 : vector<8x128xf32>
    %259 = vector.extract_strided_slice %250 {offsets = [0, 128], sizes = [8, 128], strides = [1, 1]} : vector<8x256xf32> to vector<8x128xf32>
    %260 = arith.index_cast %254 : i32 to index
    %c128_96 = arith.constant 128 : index
    %261 = vector.load %arg12[%260, %c128_96] : memref<64x256xf32, #tpu.memory_space<vmem>>, vector<8x128xf32>
    %262 = arith.addf %259, %261 : vector<8x128xf32>
    %c0_97 = arith.constant 0 : index
    %c0_98 = arith.constant 0 : index
    %263 = vector.load %arg16[%c0_97, %c0_98] : memref<8x32xf32, #tpu.memory_space<vmem>>, vector<8x32xf32>
    %264 = vector.extract_strided_slice %247 {offsets = [0, 0], sizes = [8, 32], strides = [1, 1]} : vector<8x64xf32> to vector<8x32xf32>
    %265 = vector.extract_strided_slice %258 {offsets = [0, 0], sizes = [8, 32], strides = [1, 1]} : vector<8x128xf32> to vector<8x32xf32>
    %266 = arith.negf %265 : vector<8x32xf32>
    %267 = math.exp %266 : vector<8x32xf32>
    %cst_99 = arith.constant 1.000000e+00 : f32
    %268 = vector.broadcast %cst_99 : f32 to vector<8x32xf32>
    %269 = arith.addf %268, %267 : vector<8x32xf32>
    %270 = arith.divf %268, %269 : vector<8x32xf32>
    %271 = vector.extract_strided_slice %258 {offsets = [0, 32], sizes = [8, 32], strides = [1, 1]} : vector<8x128xf32> to vector<8x32xf32>
    %272 = arith.negf %271 : vector<8x32xf32>
    %273 = math.exp %272 : vector<8x32xf32>
    %cst_100 = arith.constant 1.000000e+00 : f32
    %274 = vector.broadcast %cst_100 : f32 to vector<8x32xf32>
    %275 = arith.addf %274, %273 : vector<8x32xf32>
    %276 = arith.divf %274, %275 : vector<8x32xf32>
    %277 = vector.extract_strided_slice %258 {offsets = [0, 64], sizes = [8, 32], strides = [1, 1]} : vector<8x128xf32> to vector<8x32xf32>
    %278 = math.tanh %277 : vector<8x32xf32>
    %279 = vector.extract_strided_slice %258 {offsets = [0, 96], sizes = [8, 32], strides = [1, 1]} : vector<8x128xf32> to vector<8x32xf32>
    %280 = arith.negf %279 : vector<8x32xf32>
    %281 = math.exp %280 : vector<8x32xf32>
    %cst_101 = arith.constant 1.000000e+00 : f32
    %282 = vector.broadcast %cst_101 : f32 to vector<8x32xf32>
    %283 = arith.addf %282, %281 : vector<8x32xf32>
    %284 = arith.divf %282, %283 : vector<8x32xf32>
    %285 = arith.mulf %276, %263 : vector<8x32xf32>
    %286 = arith.mulf %270, %278 : vector<8x32xf32>
    %287 = arith.addf %285, %286 : vector<8x32xf32>
    %288 = math.tanh %287 : vector<8x32xf32>
    %289 = arith.mulf %284, %288 : vector<8x32xf32>
    %290 = vector.shape_cast %244 : vector<8x1xi1> to vector<8x1xi1>
    %291 = vector.broadcast %290 : vector<8x1xi1> to vector<8x32xi1>
    %292 = arith.select %291, %289, %264 : vector<8x32xi1>, vector<8x32xf32>
    %293 = vector.shape_cast %244 : vector<8x1xi1> to vector<8x1xi1>
    %294 = vector.broadcast %293 : vector<8x1xi1> to vector<8x32xi1>
    %295 = arith.select %294, %287, %263 : vector<8x32xi1>, vector<8x32xf32>
    %c0_102 = arith.constant 0 : index
    %c0_103 = arith.constant 0 : index
    %296 = vector.load %arg17[%c0_102, %c0_103] : memref<8x32xf32, #tpu.memory_space<vmem>>, vector<8x32xf32>
    %297 = vector.extract_strided_slice %247 {offsets = [0, 32], sizes = [8, 32], strides = [1, 1]} : vector<8x64xf32> to vector<8x32xf32>
    %298 = vector.extract_strided_slice %262 {offsets = [0, 0], sizes = [8, 32], strides = [1, 1]} : vector<8x128xf32> to vector<8x32xf32>
    %299 = arith.negf %298 : vector<8x32xf32>
    %300 = math.exp %299 : vector<8x32xf32>
    %cst_104 = arith.constant 1.000000e+00 : f32
    %301 = vector.broadcast %cst_104 : f32 to vector<8x32xf32>
    %302 = arith.addf %301, %300 : vector<8x32xf32>
    %303 = arith.divf %301, %302 : vector<8x32xf32>
    %304 = vector.extract_strided_slice %262 {offsets = [0, 32], sizes = [8, 32], strides = [1, 1]} : vector<8x128xf32> to vector<8x32xf32>
    %305 = arith.negf %304 : vector<8x32xf32>
    %306 = math.exp %305 : vector<8x32xf32>
    %cst_105 = arith.constant 1.000000e+00 : f32
    %307 = vector.broadcast %cst_105 : f32 to vector<8x32xf32>
    %308 = arith.addf %307, %306 : vector<8x32xf32>
    %309 = arith.divf %307, %308 : vector<8x32xf32>
    %310 = vector.extract_strided_slice %262 {offsets = [0, 64], sizes = [8, 32], strides = [1, 1]} : vector<8x128xf32> to vector<8x32xf32>
    %311 = math.tanh %310 : vector<8x32xf32>
    %312 = vector.extract_strided_slice %262 {offsets = [0, 96], sizes = [8, 32], strides = [1, 1]} : vector<8x128xf32> to vector<8x32xf32>
    %313 = arith.negf %312 : vector<8x32xf32>
    %314 = math.exp %313 : vector<8x32xf32>
    %cst_106 = arith.constant 1.000000e+00 : f32
    %315 = vector.broadcast %cst_106 : f32 to vector<8x32xf32>
    %316 = arith.addf %315, %314 : vector<8x32xf32>
    %317 = arith.divf %315, %316 : vector<8x32xf32>
    %318 = arith.mulf %309, %296 : vector<8x32xf32>
    %319 = arith.mulf %303, %311 : vector<8x32xf32>
    %320 = arith.addf %318, %319 : vector<8x32xf32>
    %321 = math.tanh %320 : vector<8x32xf32>
    %322 = arith.mulf %317, %321 : vector<8x32xf32>
    %323 = vector.shape_cast %246 : vector<8x1xi1> to vector<8x1xi1>
    %324 = vector.broadcast %323 : vector<8x1xi1> to vector<8x32xi1>
    %325 = arith.select %324, %322, %297 : vector<8x32xi1>, vector<8x32xf32>
    %326 = vector.shape_cast %246 : vector<8x1xi1> to vector<8x1xi1>
    %327 = vector.broadcast %326 : vector<8x1xi1> to vector<8x32xi1>
    %328 = arith.select %327, %320, %296 : vector<8x32xi1>, vector<8x32xf32>
    %c0_107 = arith.constant 0 : index
    %c0_108 = arith.constant 0 : index
    %329 = vector.load %arg16[%c0_107, %c0_108] : memref<8x32xf32, #tpu.memory_space<vmem>>, vector<8x32xf32>
    tpu.vector_store %arg16[%c0_107, %c0_108], %295 {strides = array<i32>} : memref<8x32xf32, #tpu.memory_space<vmem>>, vector<8x32xf32>,
    %c0_109 = arith.constant 0 : index
    %c0_110 = arith.constant 0 : index
    %330 = vector.load %arg17[%c0_109, %c0_110] : memref<8x32xf32, #tpu.memory_space<vmem>>, vector<8x32xf32>
    tpu.vector_store %arg17[%c0_109, %c0_110], %328 {strides = array<i32>} : memref<8x32xf32, #tpu.memory_space<vmem>>, vector<8x32xf32>,
    %c0_111 = arith.constant 0 : index
    %c0_112 = arith.constant 0 : index
    %331 = vector.load %arg15[%c0_111, %c0_112] : memref<8x64xf32, #tpu.memory_space<vmem>>, vector<8x32xf32>
    tpu.vector_store %arg15[%c0_111, %c0_112], %292 {strides = array<i32>} : memref<8x64xf32, #tpu.memory_space<vmem>>, vector<8x32xf32>,
    %c0_113 = arith.constant 0 : index
    %c32_114 = arith.constant 32 : index
    %332 = vector.load %arg15[%c0_113, %c32_114] : memref<8x64xf32, #tpu.memory_space<vmem>>, vector<8x32xf32>
    tpu.vector_store %arg15[%c0_113, %c32_114], %325 {strides = array<i32>} : memref<8x64xf32, #tpu.memory_space<vmem>>, vector<8x32xf32>,
    %cst_115 = arith.constant 0.000000e+00 : f32
    %333 = vector.shape_cast %244 : vector<8x1xi1> to vector<8x1xi1>
    %334 = vector.broadcast %333 : vector<8x1xi1> to vector<8x32xi1>
    %335 = vector.broadcast %cst_115 : f32 to vector<8x32xf32>
    %336 = arith.select %334, %292, %335 : vector<8x32xi1>, vector<8x32xf32>
    %337 = arith.index_cast %c2_i32 : i32 to index
    %c0_116 = arith.constant 0 : index
    %c0_117 = arith.constant 0 : index
    %338 = vector.load %arg13[%337, %c0_116, %c0_117] : memref<8x8x64xf32, #tpu.memory_space<vmem>>, vector<1x8x32xf32>
    %339 = vector.shape_cast %338 : vector<1x8x32xf32> to vector<8x32xf32>
    %340 = vector.shape_cast %336 : vector<8x32xf32> to vector<1x8x32xf32>
    tpu.vector_store %arg13[%337, %c0_116, %c0_117], %340 {strides = array<i32>} : memref<8x8x64xf32, #tpu.memory_space<vmem>>, vector<1x8x32xf32>,
    %cst_118 = arith.constant 0.000000e+00 : f32
    %341 = vector.shape_cast %246 : vector<8x1xi1> to vector<8x1xi1>
    %342 = vector.broadcast %341 : vector<8x1xi1> to vector<8x32xi1>
    %343 = vector.broadcast %cst_118 : f32 to vector<8x32xf32>
    %344 = arith.select %342, %325, %343 : vector<8x32xi1>, vector<8x32xf32>
    %345 = arith.index_cast %242 : i32 to index
    %c0_119 = arith.constant 0 : index
    %c32_120 = arith.constant 32 : index
    %346 = vector.load %arg13[%345, %c0_119, %c32_120] : memref<8x8x64xf32, #tpu.memory_space<vmem>>, vector<1x8x32xf32>
    %347 = vector.shape_cast %346 : vector<1x8x32xf32> to vector<8x32xf32>
    %348 = vector.shape_cast %344 : vector<8x32xf32> to vector<1x8x32xf32>
    tpu.vector_store %arg13[%345, %c0_119, %c32_120], %348 {strides = array<i32>} : memref<8x8x64xf32, #tpu.memory_space<vmem>>, vector<1x8x32xf32>,
    %349 = arith.extui %244 : vector<8x1xi1> to vector<8x1xi32>
    %350 = arith.sitofp %349 : vector<8x1xi32> to vector<8x1xf32>
    %351 = arith.index_cast %c2_i32 : i32 to index
    %c0_121 = arith.constant 0 : index
    %c0_122 = arith.constant 0 : index
    %352 = vector.load %arg14[%351, %c0_121, %c0_122] : memref<8x8x1xf32, #tpu.memory_space<vmem>>, vector<1x8x1xf32>
    %353 = vector.shape_cast %352 : vector<1x8x1xf32> to vector<8x1xf32>
    %354 = vector.shape_cast %350 : vector<8x1xf32> to vector<1x8x1xf32>
    tpu.vector_store %arg14[%351, %c0_121, %c0_122], %354 {strides = array<i32>} : memref<8x8x1xf32, #tpu.memory_space<vmem>>, vector<1x8x1xf32>,
    %c3_i32 = arith.constant 3 : i32
    %c7_i32_123 = arith.constant 7 : i32
    %355 = arith.subi %c7_i32_123, %c3_i32 : i32
    %356 = vector.broadcast %c3_i32 : i32 to vector<8x1xi32>
    %357 = arith.cmpi slt, %356, %15 : vector<8x1xi32>
    %358 = vector.broadcast %355 : i32 to vector<8x1xi32>
    %359 = arith.cmpi slt, %358, %15 : vector<8x1xi32>
    %c0_124 = arith.constant 0 : index
    %c0_125 = arith.constant 0 : index
    %360 = vector.load %arg15[%c0_124, %c0_125] : memref<8x64xf32, #tpu.memory_space<vmem>>, vector<8x64xf32>
    %361 = arith.truncf %360 : vector<8x64xf32> to vector<8x64xbf16>
    %c0_126 = arith.constant 0 : index
    %c0_127 = arith.constant 0 : index
    %362 = vector.load %arg4[%c0_126, %c0_127] : memref<64x256xbf16, #tpu.memory_space<vmem>>, vector<64x256xbf16>
    %cst_128 = arith.constant dense<0.000000e+00> : vector<8x256xf32>
    %363 = tpu.matmul %361, %362, %cst_128 {dimension_numbers = #tpu.dot_dimension_numbers<[1], [0], [0], [1], [0, 0, 1, 1], [], []>} : vector<8x64xbf16>, vector<64x256xbf16>, vector<8x256xf32> -> vector<8x256xf32>
    %c8_i32_129 = arith.constant 8 : i32
    %364 = arith.muli %c3_i32, %c8_i32_129 : i32
    %365 = tpu.assume_multiple %364, 8 : i32
    %c8_i32_130 = arith.constant 8 : i32
    %366 = arith.muli %355, %c8_i32_130 : i32
    %367 = tpu.assume_multiple %366, 8 : i32
    %368 = vector.extract_strided_slice %363 {offsets = [0, 0], sizes = [8, 128], strides = [1, 1]} : vector<8x256xf32> to vector<8x128xf32>
    %369 = arith.index_cast %365 : i32 to index
    %c0_131 = arith.constant 0 : index
    %370 = vector.load %arg12[%369, %c0_131] : memref<64x256xf32, #tpu.memory_space<vmem>>, vector<8x128xf32>
    %371 = arith.addf %368, %370 : vector<8x128xf32>
    %372 = vector.extract_strided_slice %363 {offsets = [0, 128], sizes = [8, 128], strides = [1, 1]} : vector<8x256xf32> to vector<8x128xf32>
    %373 = arith.index_cast %367 : i32 to index
    %c128_132 = arith.constant 128 : index
    %374 = vector.load %arg12[%373, %c128_132] : memref<64x256xf32, #tpu.memory_space<vmem>>, vector<8x128xf32>
    %375 = arith.addf %372, %374 : vector<8x128xf32>
    %c0_133 = arith.constant 0 : index
    %c0_134 = arith.constant 0 : index
    %376 = vector.load %arg16[%c0_133, %c0_134] : memref<8x32xf32, #tpu.memory_space<vmem>>, vector<8x32xf32>
    %377 = vector.extract_strided_slice %360 {offsets = [0, 0], sizes = [8, 32], strides = [1, 1]} : vector<8x64xf32> to vector<8x32xf32>
    %378 = vector.extract_strided_slice %371 {offsets = [0, 0], sizes = [8, 32], strides = [1, 1]} : vector<8x128xf32> to vector<8x32xf32>
    %379 = arith.negf %378 : vector<8x32xf32>
    %380 = math.exp %379 : vector<8x32xf32>
    %cst_135 = arith.constant 1.000000e+00 : f32
    %381 = vector.broadcast %cst_135 : f32 to vector<8x32xf32>
    %382 = arith.addf %381, %380 : vector<8x32xf32>
    %383 = arith.divf %381, %382 : vector<8x32xf32>
    %384 = vector.extract_strided_slice %371 {offsets = [0, 32], sizes = [8, 32], strides = [1, 1]} : vector<8x128xf32> to vector<8x32xf32>
    %385 = arith.negf %384 : vector<8x32xf32>
    %386 = math.exp %385 : vector<8x32xf32>
    %cst_136 = arith.constant 1.000000e+00 : f32
    %387 = vector.broadcast %cst_136 : f32 to vector<8x32xf32>
    %388 = arith.addf %387, %386 : vector<8x32xf32>
    %389 = arith.divf %387, %388 : vector<8x32xf32>
    %390 = vector.extract_strided_slice %371 {offsets = [0, 64], sizes = [8, 32], strides = [1, 1]} : vector<8x128xf32> to vector<8x32xf32>
    %391 = math.tanh %390 : vector<8x32xf32>
    %392 = vector.extract_strided_slice %371 {offsets = [0, 96], sizes = [8, 32], strides = [1, 1]} : vector<8x128xf32> to vector<8x32xf32>
    %393 = arith.negf %392 : vector<8x32xf32>
    %394 = math.exp %393 : vector<8x32xf32>
    %cst_137 = arith.constant 1.000000e+00 : f32
    %395 = vector.broadcast %cst_137 : f32 to vector<8x32xf32>
    %396 = arith.addf %395, %394 : vector<8x32xf32>
    %397 = arith.divf %395, %396 : vector<8x32xf32>
    %398 = arith.mulf %389, %376 : vector<8x32xf32>
    %399 = arith.mulf %383, %391 : vector<8x32xf32>
    %400 = arith.addf %398, %399 : vector<8x32xf32>
    %401 = math.tanh %400 : vector<8x32xf32>
    %402 = arith.mulf %397, %401 : vector<8x32xf32>
    %403 = vector.shape_cast %357 : vector<8x1xi1> to vector<8x1xi1>
    %404 = vector.broadcast %403 : vector<8x1xi1> to vector<8x32xi1>
    %405 = arith.select %404, %402, %377 : vector<8x32xi1>, vector<8x32xf32>
    %406 = vector.shape_cast %357 : vector<8x1xi1> to vector<8x1xi1>
    %407 = vector.broadcast %406 : vector<8x1xi1> to vector<8x32xi1>
    %408 = arith.select %407, %400, %376 : vector<8x32xi1>, vector<8x32xf32>
    %c0_138 = arith.constant 0 : index
    %c0_139 = arith.constant 0 : index
    %409 = vector.load %arg17[%c0_138, %c0_139] : memref<8x32xf32, #tpu.memory_space<vmem>>, vector<8x32xf32>
    %410 = vector.extract_strided_slice %360 {offsets = [0, 32], sizes = [8, 32], strides = [1, 1]} : vector<8x64xf32> to vector<8x32xf32>
    %411 = vector.extract_strided_slice %375 {offsets = [0, 0], sizes = [8, 32], strides = [1, 1]} : vector<8x128xf32> to vector<8x32xf32>
    %412 = arith.negf %411 : vector<8x32xf32>
    %413 = math.exp %412 : vector<8x32xf32>
    %cst_140 = arith.constant 1.000000e+00 : f32
    %414 = vector.broadcast %cst_140 : f32 to vector<8x32xf32>
    %415 = arith.addf %414, %413 : vector<8x32xf32>
    %416 = arith.divf %414, %415 : vector<8x32xf32>
    %417 = vector.extract_strided_slice %375 {offsets = [0, 32], sizes = [8, 32], strides = [1, 1]} : vector<8x128xf32> to vector<8x32xf32>
    %418 = arith.negf %417 : vector<8x32xf32>
    %419 = math.exp %418 : vector<8x32xf32>
    %cst_141 = arith.constant 1.000000e+00 : f32
    %420 = vector.broadcast %cst_141 : f32 to vector<8x32xf32>
    %421 = arith.addf %420, %419 : vector<8x32xf32>
    %422 = arith.divf %420, %421 : vector<8x32xf32>
    %423 = vector.extract_strided_slice %375 {offsets = [0, 64], sizes = [8, 32], strides = [1, 1]} : vector<8x128xf32> to vector<8x32xf32>
    %424 = math.tanh %423 : vector<8x32xf32>
    %425 = vector.extract_strided_slice %375 {offsets = [0, 96], sizes = [8, 32], strides = [1, 1]} : vector<8x128xf32> to vector<8x32xf32>
    %426 = arith.negf %425 : vector<8x32xf32>
    %427 = math.exp %426 : vector<8x32xf32>
    %cst_142 = arith.constant 1.000000e+00 : f32
    %428 = vector.broadcast %cst_142 : f32 to vector<8x32xf32>
    %429 = arith.addf %428, %427 : vector<8x32xf32>
    %430 = arith.divf %428, %429 : vector<8x32xf32>
    %431 = arith.mulf %422, %409 : vector<8x32xf32>
    %432 = arith.mulf %416, %424 : vector<8x32xf32>
    %433 = arith.addf %431, %432 : vector<8x32xf32>
    %434 = math.tanh %433 : vector<8x32xf32>
    %435 = arith.mulf %430, %434 : vector<8x32xf32>
    %436 = vector.shape_cast %359 : vector<8x1xi1> to vector<8x1xi1>
    %437 = vector.broadcast %436 : vector<8x1xi1> to vector<8x32xi1>
    %438 = arith.select %437, %435, %410 : vector<8x32xi1>, vector<8x32xf32>
    %439 = vector.shape_cast %359 : vector<8x1xi1> to vector<8x1xi1>
    %440 = vector.broadcast %439 : vector<8x1xi1> to vector<8x32xi1>
    %441 = arith.select %440, %433, %409 : vector<8x32xi1>, vector<8x32xf32>
    %c0_143 = arith.constant 0 : index
    %c0_144 = arith.constant 0 : index
    %442 = vector.load %arg16[%c0_143, %c0_144] : memref<8x32xf32, #tpu.memory_space<vmem>>, vector<8x32xf32>
    tpu.vector_store %arg16[%c0_143, %c0_144], %408 {strides = array<i32>} : memref<8x32xf32, #tpu.memory_space<vmem>>, vector<8x32xf32>,
    %c0_145 = arith.constant 0 : index
    %c0_146 = arith.constant 0 : index
    %443 = vector.load %arg17[%c0_145, %c0_146] : memref<8x32xf32, #tpu.memory_space<vmem>>, vector<8x32xf32>
    tpu.vector_store %arg17[%c0_145, %c0_146], %441 {strides = array<i32>} : memref<8x32xf32, #tpu.memory_space<vmem>>, vector<8x32xf32>,
    %c0_147 = arith.constant 0 : index
    %c0_148 = arith.constant 0 : index
    %444 = vector.load %arg15[%c0_147, %c0_148] : memref<8x64xf32, #tpu.memory_space<vmem>>, vector<8x32xf32>
    tpu.vector_store %arg15[%c0_147, %c0_148], %405 {strides = array<i32>} : memref<8x64xf32, #tpu.memory_space<vmem>>, vector<8x32xf32>,
    %c0_149 = arith.constant 0 : index
    %c32_150 = arith.constant 32 : index
    %445 = vector.load %arg15[%c0_149, %c32_150] : memref<8x64xf32, #tpu.memory_space<vmem>>, vector<8x32xf32>
    tpu.vector_store %arg15[%c0_149, %c32_150], %438 {strides = array<i32>} : memref<8x64xf32, #tpu.memory_space<vmem>>, vector<8x32xf32>,
    %cst_151 = arith.constant 0.000000e+00 : f32
    %446 = vector.shape_cast %357 : vector<8x1xi1> to vector<8x1xi1>
    %447 = vector.broadcast %446 : vector<8x1xi1> to vector<8x32xi1>
    %448 = vector.broadcast %cst_151 : f32 to vector<8x32xf32>
    %449 = arith.select %447, %405, %448 : vector<8x32xi1>, vector<8x32xf32>
    %450 = arith.index_cast %c3_i32 : i32 to index
    %c0_152 = arith.constant 0 : index
    %c0_153 = arith.constant 0 : index
    %451 = vector.load %arg13[%450, %c0_152, %c0_153] : memref<8x8x64xf32, #tpu.memory_space<vmem>>, vector<1x8x32xf32>
    %452 = vector.shape_cast %451 : vector<1x8x32xf32> to vector<8x32xf32>
    %453 = vector.shape_cast %449 : vector<8x32xf32> to vector<1x8x32xf32>
    tpu.vector_store %arg13[%450, %c0_152, %c0_153], %453 {strides = array<i32>} : memref<8x8x64xf32, #tpu.memory_space<vmem>>, vector<1x8x32xf32>,
    %cst_154 = arith.constant 0.000000e+00 : f32
    %454 = vector.shape_cast %359 : vector<8x1xi1> to vector<8x1xi1>
    %455 = vector.broadcast %454 : vector<8x1xi1> to vector<8x32xi1>
    %456 = vector.broadcast %cst_154 : f32 to vector<8x32xf32>
    %457 = arith.select %455, %438, %456 : vector<8x32xi1>, vector<8x32xf32>
    %458 = arith.index_cast %355 : i32 to index
    %c0_155 = arith.constant 0 : index
    %c32_156 = arith.constant 32 : index
    %459 = vector.load %arg13[%458, %c0_155, %c32_156] : memref<8x8x64xf32, #tpu.memory_space<vmem>>, vector<1x8x32xf32>
    %460 = vector.shape_cast %459 : vector<1x8x32xf32> to vector<8x32xf32>
    %461 = vector.shape_cast %457 : vector<8x32xf32> to vector<1x8x32xf32>
    tpu.vector_store %arg13[%458, %c0_155, %c32_156], %461 {strides = array<i32>} : memref<8x8x64xf32, #tpu.memory_space<vmem>>, vector<1x8x32xf32>,
    %462 = arith.extui %357 : vector<8x1xi1> to vector<8x1xi32>
    %463 = arith.sitofp %462 : vector<8x1xi32> to vector<8x1xf32>
    %464 = arith.index_cast %c3_i32 : i32 to index
    %c0_157 = arith.constant 0 : index
    %c0_158 = arith.constant 0 : index
    %465 = vector.load %arg14[%464, %c0_157, %c0_158] : memref<8x8x1xf32, #tpu.memory_space<vmem>>, vector<1x8x1xf32>
    %466 = vector.shape_cast %465 : vector<1x8x1xf32> to vector<8x1xf32>
    %467 = vector.shape_cast %463 : vector<8x1xf32> to vector<1x8x1xf32>
    tpu.vector_store %arg14[%464, %c0_157, %c0_158], %467 {strides = array<i32>} : memref<8x8x1xf32, #tpu.memory_space<vmem>>, vector<1x8x1xf32>,
    %c4_i32 = arith.constant 4 : i32
    %c7_i32_159 = arith.constant 7 : i32
    %468 = arith.subi %c7_i32_159, %c4_i32 : i32
    %469 = vector.broadcast %c4_i32 : i32 to vector<8x1xi32>
    %470 = arith.cmpi slt, %469, %15 : vector<8x1xi32>
    %471 = vector.broadcast %468 : i32 to vector<8x1xi32>
    %472 = arith.cmpi slt, %471, %15 : vector<8x1xi32>
    %c0_160 = arith.constant 0 : index
    %c0_161 = arith.constant 0 : index
    %473 = vector.load %arg15[%c0_160, %c0_161] : memref<8x64xf32, #tpu.memory_space<vmem>>, vector<8x64xf32>
    %474 = arith.truncf %473 : vector<8x64xf32> to vector<8x64xbf16>
    %c0_162 = arith.constant 0 : index
    %c0_163 = arith.constant 0 : index
    %475 = vector.load %arg4[%c0_162, %c0_163] : memref<64x256xbf16, #tpu.memory_space<vmem>>, vector<64x256xbf16>
    %cst_164 = arith.constant dense<0.000000e+00> : vector<8x256xf32>
    %476 = tpu.matmul %474, %475, %cst_164 {dimension_numbers = #tpu.dot_dimension_numbers<[1], [0], [0], [1], [0, 0, 1, 1], [], []>} : vector<8x64xbf16>, vector<64x256xbf16>, vector<8x256xf32> -> vector<8x256xf32>
    %c8_i32_165 = arith.constant 8 : i32
    %477 = arith.muli %c4_i32, %c8_i32_165 : i32
    %478 = tpu.assume_multiple %477, 8 : i32
    %c8_i32_166 = arith.constant 8 : i32
    %479 = arith.muli %468, %c8_i32_166 : i32
    %480 = tpu.assume_multiple %479, 8 : i32
    %481 = vector.extract_strided_slice %476 {offsets = [0, 0], sizes = [8, 128], strides = [1, 1]} : vector<8x256xf32> to vector<8x128xf32>
    %482 = arith.index_cast %478 : i32 to index
    %c0_167 = arith.constant 0 : index
    %483 = vector.load %arg12[%482, %c0_167] : memref<64x256xf32, #tpu.memory_space<vmem>>, vector<8x128xf32>
    %484 = arith.addf %481, %483 : vector<8x128xf32>
    %485 = vector.extract_strided_slice %476 {offsets = [0, 128], sizes = [8, 128], strides = [1, 1]} : vector<8x256xf32> to vector<8x128xf32>
    %486 = arith.index_cast %480 : i32 to index
    %c128_168 = arith.constant 128 : index
    %487 = vector.load %arg12[%486, %c128_168] : memref<64x256xf32, #tpu.memory_space<vmem>>, vector<8x128xf32>
    %488 = arith.addf %485, %487 : vector<8x128xf32>
    %c0_169 = arith.constant 0 : index
    %c0_170 = arith.constant 0 : index
    %489 = vector.load %arg16[%c0_169, %c0_170] : memref<8x32xf32, #tpu.memory_space<vmem>>, vector<8x32xf32>
    %490 = vector.extract_strided_slice %473 {offsets = [0, 0], sizes = [8, 32], strides = [1, 1]} : vector<8x64xf32> to vector<8x32xf32>
    %491 = vector.extract_strided_slice %484 {offsets = [0, 0], sizes = [8, 32], strides = [1, 1]} : vector<8x128xf32> to vector<8x32xf32>
    %492 = arith.negf %491 : vector<8x32xf32>
    %493 = math.exp %492 : vector<8x32xf32>
    %cst_171 = arith.constant 1.000000e+00 : f32
    %494 = vector.broadcast %cst_171 : f32 to vector<8x32xf32>
    %495 = arith.addf %494, %493 : vector<8x32xf32>
    %496 = arith.divf %494, %495 : vector<8x32xf32>
    %497 = vector.extract_strided_slice %484 {offsets = [0, 32], sizes = [8, 32], strides = [1, 1]} : vector<8x128xf32> to vector<8x32xf32>
    %498 = arith.negf %497 : vector<8x32xf32>
    %499 = math.exp %498 : vector<8x32xf32>
    %cst_172 = arith.constant 1.000000e+00 : f32
    %500 = vector.broadcast %cst_172 : f32 to vector<8x32xf32>
    %501 = arith.addf %500, %499 : vector<8x32xf32>
    %502 = arith.divf %500, %501 : vector<8x32xf32>
    %503 = vector.extract_strided_slice %484 {offsets = [0, 64], sizes = [8, 32], strides = [1, 1]} : vector<8x128xf32> to vector<8x32xf32>
    %504 = math.tanh %503 : vector<8x32xf32>
    %505 = vector.extract_strided_slice %484 {offsets = [0, 96], sizes = [8, 32], strides = [1, 1]} : vector<8x128xf32> to vector<8x32xf32>
    %506 = arith.negf %505 : vector<8x32xf32>
    %507 = math.exp %506 : vector<8x32xf32>
    %cst_173 = arith.constant 1.000000e+00 : f32
    %508 = vector.broadcast %cst_173 : f32 to vector<8x32xf32>
    %509 = arith.addf %508, %507 : vector<8x32xf32>
    %510 = arith.divf %508, %509 : vector<8x32xf32>
    %511 = arith.mulf %502, %489 : vector<8x32xf32>
    %512 = arith.mulf %496, %504 : vector<8x32xf32>
    %513 = arith.addf %511, %512 : vector<8x32xf32>
    %514 = math.tanh %513 : vector<8x32xf32>
    %515 = arith.mulf %510, %514 : vector<8x32xf32>
    %516 = vector.shape_cast %470 : vector<8x1xi1> to vector<8x1xi1>
    %517 = vector.broadcast %516 : vector<8x1xi1> to vector<8x32xi1>
    %518 = arith.select %517, %515, %490 : vector<8x32xi1>, vector<8x32xf32>
    %519 = vector.shape_cast %470 : vector<8x1xi1> to vector<8x1xi1>
    %520 = vector.broadcast %519 : vector<8x1xi1> to vector<8x32xi1>
    %521 = arith.select %520, %513, %489 : vector<8x32xi1>, vector<8x32xf32>
    %c0_174 = arith.constant 0 : index
    %c0_175 = arith.constant 0 : index
    %522 = vector.load %arg17[%c0_174, %c0_175] : memref<8x32xf32, #tpu.memory_space<vmem>>, vector<8x32xf32>
    %523 = vector.extract_strided_slice %473 {offsets = [0, 32], sizes = [8, 32], strides = [1, 1]} : vector<8x64xf32> to vector<8x32xf32>
    %524 = vector.extract_strided_slice %488 {offsets = [0, 0], sizes = [8, 32], strides = [1, 1]} : vector<8x128xf32> to vector<8x32xf32>
    %525 = arith.negf %524 : vector<8x32xf32>
    %526 = math.exp %525 : vector<8x32xf32>
    %cst_176 = arith.constant 1.000000e+00 : f32
    %527 = vector.broadcast %cst_176 : f32 to vector<8x32xf32>
    %528 = arith.addf %527, %526 : vector<8x32xf32>
    %529 = arith.divf %527, %528 : vector<8x32xf32>
    %530 = vector.extract_strided_slice %488 {offsets = [0, 32], sizes = [8, 32], strides = [1, 1]} : vector<8x128xf32> to vector<8x32xf32>
    %531 = arith.negf %530 : vector<8x32xf32>
    %532 = math.exp %531 : vector<8x32xf32>
    %cst_177 = arith.constant 1.000000e+00 : f32
    %533 = vector.broadcast %cst_177 : f32 to vector<8x32xf32>
    %534 = arith.addf %533, %532 : vector<8x32xf32>
    %535 = arith.divf %533, %534 : vector<8x32xf32>
    %536 = vector.extract_strided_slice %488 {offsets = [0, 64], sizes = [8, 32], strides = [1, 1]} : vector<8x128xf32> to vector<8x32xf32>
    %537 = math.tanh %536 : vector<8x32xf32>
    %538 = vector.extract_strided_slice %488 {offsets = [0, 96], sizes = [8, 32], strides = [1, 1]} : vector<8x128xf32> to vector<8x32xf32>
    %539 = arith.negf %538 : vector<8x32xf32>
    %540 = math.exp %539 : vector<8x32xf32>
    %cst_178 = arith.constant 1.000000e+00 : f32
    %541 = vector.broadcast %cst_178 : f32 to vector<8x32xf32>
    %542 = arith.addf %541, %540 : vector<8x32xf32>
    %543 = arith.divf %541, %542 : vector<8x32xf32>
    %544 = arith.mulf %535, %522 : vector<8x32xf32>
    %545 = arith.mulf %529, %537 : vector<8x32xf32>
    %546 = arith.addf %544, %545 : vector<8x32xf32>
    %547 = math.tanh %546 : vector<8x32xf32>
    %548 = arith.mulf %543, %547 : vector<8x32xf32>
    %549 = vector.shape_cast %472 : vector<8x1xi1> to vector<8x1xi1>
    %550 = vector.broadcast %549 : vector<8x1xi1> to vector<8x32xi1>
    %551 = arith.select %550, %548, %523 : vector<8x32xi1>, vector<8x32xf32>
    %552 = vector.shape_cast %472 : vector<8x1xi1> to vector<8x1xi1>
    %553 = vector.broadcast %552 : vector<8x1xi1> to vector<8x32xi1>
    %554 = arith.select %553, %546, %522 : vector<8x32xi1>, vector<8x32xf32>
    %c0_179 = arith.constant 0 : index
    %c0_180 = arith.constant 0 : index
    %555 = vector.load %arg16[%c0_179, %c0_180] : memref<8x32xf32, #tpu.memory_space<vmem>>, vector<8x32xf32>
    tpu.vector_store %arg16[%c0_179, %c0_180], %521 {strides = array<i32>} : memref<8x32xf32, #tpu.memory_space<vmem>>, vector<8x32xf32>,
    %c0_181 = arith.constant 0 : index
    %c0_182 = arith.constant 0 : index
    %556 = vector.load %arg17[%c0_181, %c0_182] : memref<8x32xf32, #tpu.memory_space<vmem>>, vector<8x32xf32>
    tpu.vector_store %arg17[%c0_181, %c0_182], %554 {strides = array<i32>} : memref<8x32xf32, #tpu.memory_space<vmem>>, vector<8x32xf32>,
    %c0_183 = arith.constant 0 : index
    %c0_184 = arith.constant 0 : index
    %557 = vector.load %arg15[%c0_183, %c0_184] : memref<8x64xf32, #tpu.memory_space<vmem>>, vector<8x32xf32>
    tpu.vector_store %arg15[%c0_183, %c0_184], %518 {strides = array<i32>} : memref<8x64xf32, #tpu.memory_space<vmem>>, vector<8x32xf32>,
    %c0_185 = arith.constant 0 : index
    %c32_186 = arith.constant 32 : index
    %558 = vector.load %arg15[%c0_185, %c32_186] : memref<8x64xf32, #tpu.memory_space<vmem>>, vector<8x32xf32>
    tpu.vector_store %arg15[%c0_185, %c32_186], %551 {strides = array<i32>} : memref<8x64xf32, #tpu.memory_space<vmem>>, vector<8x32xf32>,
    %cst_187 = arith.constant 0.000000e+00 : f32
    %559 = vector.shape_cast %470 : vector<8x1xi1> to vector<8x1xi1>
    %560 = vector.broadcast %559 : vector<8x1xi1> to vector<8x32xi1>
    %561 = vector.broadcast %cst_187 : f32 to vector<8x32xf32>
    %562 = arith.select %560, %518, %561 : vector<8x32xi1>, vector<8x32xf32>
    %563 = arith.index_cast %c4_i32 : i32 to index
    %c0_188 = arith.constant 0 : index
    %c0_189 = arith.constant 0 : index
    %564 = vector.load %arg13[%563, %c0_188, %c0_189] : memref<8x8x64xf32, #tpu.memory_space<vmem>>, vector<1x8x32xf32>
    %565 = vector.shape_cast %564 : vector<1x8x32xf32> to vector<8x32xf32>
    %566 = vector.shape_cast %562 : vector<8x32xf32> to vector<1x8x32xf32>
    tpu.vector_store %arg13[%563, %c0_188, %c0_189], %566 {strides = array<i32>} : memref<8x8x64xf32, #tpu.memory_space<vmem>>, vector<1x8x32xf32>,
    %cst_190 = arith.constant 0.000000e+00 : f32
    %567 = vector.shape_cast %472 : vector<8x1xi1> to vector<8x1xi1>
    %568 = vector.broadcast %567 : vector<8x1xi1> to vector<8x32xi1>
    %569 = vector.broadcast %cst_190 : f32 to vector<8x32xf32>
    %570 = arith.select %568, %551, %569 : vector<8x32xi1>, vector<8x32xf32>
    %571 = arith.index_cast %468 : i32 to index
    %c0_191 = arith.constant 0 : index
    %c32_192 = arith.constant 32 : index
    %572 = vector.load %arg13[%571, %c0_191, %c32_192] : memref<8x8x64xf32, #tpu.memory_space<vmem>>, vector<1x8x32xf32>
    %573 = vector.shape_cast %572 : vector<1x8x32xf32> to vector<8x32xf32>
    %574 = vector.shape_cast %570 : vector<8x32xf32> to vector<1x8x32xf32>
    tpu.vector_store %arg13[%571, %c0_191, %c32_192], %574 {strides = array<i32>} : memref<8x8x64xf32, #tpu.memory_space<vmem>>, vector<1x8x32xf32>,
    %575 = arith.extui %470 : vector<8x1xi1> to vector<8x1xi32>
    %576 = arith.sitofp %575 : vector<8x1xi32> to vector<8x1xf32>
    %577 = arith.index_cast %c4_i32 : i32 to index
    %c0_193 = arith.constant 0 : index
    %c0_194 = arith.constant 0 : index
    %578 = vector.load %arg14[%577, %c0_193, %c0_194] : memref<8x8x1xf32, #tpu.memory_space<vmem>>, vector<1x8x1xf32>
    %579 = vector.shape_cast %578 : vector<1x8x1xf32> to vector<8x1xf32>
    %580 = vector.shape_cast %576 : vector<8x1xf32> to vector<1x8x1xf32>
    tpu.vector_store %arg14[%577, %c0_193, %c0_194], %580 {strides = array<i32>} : memref<8x8x1xf32, #tpu.memory_space<vmem>>, vector<1x8x1xf32>,
    %c5_i32 = arith.constant 5 : i32
    %c7_i32_195 = arith.constant 7 : i32
    %581 = arith.subi %c7_i32_195, %c5_i32 : i32
    %582 = vector.broadcast %c5_i32 : i32 to vector<8x1xi32>
    %583 = arith.cmpi slt, %582, %15 : vector<8x1xi32>
    %584 = vector.broadcast %581 : i32 to vector<8x1xi32>
    %585 = arith.cmpi slt, %584, %15 : vector<8x1xi32>
    %c0_196 = arith.constant 0 : index
    %c0_197 = arith.constant 0 : index
    %586 = vector.load %arg15[%c0_196, %c0_197] : memref<8x64xf32, #tpu.memory_space<vmem>>, vector<8x64xf32>
    %587 = arith.truncf %586 : vector<8x64xf32> to vector<8x64xbf16>
    %c0_198 = arith.constant 0 : index
    %c0_199 = arith.constant 0 : index
    %588 = vector.load %arg4[%c0_198, %c0_199] : memref<64x256xbf16, #tpu.memory_space<vmem>>, vector<64x256xbf16>
    %cst_200 = arith.constant dense<0.000000e+00> : vector<8x256xf32>
    %589 = tpu.matmul %587, %588, %cst_200 {dimension_numbers = #tpu.dot_dimension_numbers<[1], [0], [0], [1], [0, 0, 1, 1], [], []>} : vector<8x64xbf16>, vector<64x256xbf16>, vector<8x256xf32> -> vector<8x256xf32>
    %c8_i32_201 = arith.constant 8 : i32
    %590 = arith.muli %c5_i32, %c8_i32_201 : i32
    %591 = tpu.assume_multiple %590, 8 : i32
    %c8_i32_202 = arith.constant 8 : i32
    %592 = arith.muli %581, %c8_i32_202 : i32
    %593 = tpu.assume_multiple %592, 8 : i32
    %594 = vector.extract_strided_slice %589 {offsets = [0, 0], sizes = [8, 128], strides = [1, 1]} : vector<8x256xf32> to vector<8x128xf32>
    %595 = arith.index_cast %591 : i32 to index
    %c0_203 = arith.constant 0 : index
    %596 = vector.load %arg12[%595, %c0_203] : memref<64x256xf32, #tpu.memory_space<vmem>>, vector<8x128xf32>
    %597 = arith.addf %594, %596 : vector<8x128xf32>
    %598 = vector.extract_strided_slice %589 {offsets = [0, 128], sizes = [8, 128], strides = [1, 1]} : vector<8x256xf32> to vector<8x128xf32>
    %599 = arith.index_cast %593 : i32 to index
    %c128_204 = arith.constant 128 : index
    %600 = vector.load %arg12[%599, %c128_204] : memref<64x256xf32, #tpu.memory_space<vmem>>, vector<8x128xf32>
    %601 = arith.addf %598, %600 : vector<8x128xf32>
    %c0_205 = arith.constant 0 : index
    %c0_206 = arith.constant 0 : index
    %602 = vector.load %arg16[%c0_205, %c0_206] : memref<8x32xf32, #tpu.memory_space<vmem>>, vector<8x32xf32>
    %603 = vector.extract_strided_slice %586 {offsets = [0, 0], sizes = [8, 32], strides = [1, 1]} : vector<8x64xf32> to vector<8x32xf32>
    %604 = vector.extract_strided_slice %597 {offsets = [0, 0], sizes = [8, 32], strides = [1, 1]} : vector<8x128xf32> to vector<8x32xf32>
    %605 = arith.negf %604 : vector<8x32xf32>
    %606 = math.exp %605 : vector<8x32xf32>
    %cst_207 = arith.constant 1.000000e+00 : f32
    %607 = vector.broadcast %cst_207 : f32 to vector<8x32xf32>
    %608 = arith.addf %607, %606 : vector<8x32xf32>
    %609 = arith.divf %607, %608 : vector<8x32xf32>
    %610 = vector.extract_strided_slice %597 {offsets = [0, 32], sizes = [8, 32], strides = [1, 1]} : vector<8x128xf32> to vector<8x32xf32>
    %611 = arith.negf %610 : vector<8x32xf32>
    %612 = math.exp %611 : vector<8x32xf32>
    %cst_208 = arith.constant 1.000000e+00 : f32
    %613 = vector.broadcast %cst_208 : f32 to vector<8x32xf32>
    %614 = arith.addf %613, %612 : vector<8x32xf32>
    %615 = arith.divf %613, %614 : vector<8x32xf32>
    %616 = vector.extract_strided_slice %597 {offsets = [0, 64], sizes = [8, 32], strides = [1, 1]} : vector<8x128xf32> to vector<8x32xf32>
    %617 = math.tanh %616 : vector<8x32xf32>
    %618 = vector.extract_strided_slice %597 {offsets = [0, 96], sizes = [8, 32], strides = [1, 1]} : vector<8x128xf32> to vector<8x32xf32>
    %619 = arith.negf %618 : vector<8x32xf32>
    %620 = math.exp %619 : vector<8x32xf32>
    %cst_209 = arith.constant 1.000000e+00 : f32
    %621 = vector.broadcast %cst_209 : f32 to vector<8x32xf32>
    %622 = arith.addf %621, %620 : vector<8x32xf32>
    %623 = arith.divf %621, %622 : vector<8x32xf32>
    %624 = arith.mulf %615, %602 : vector<8x32xf32>
    %625 = arith.mulf %609, %617 : vector<8x32xf32>
    %626 = arith.addf %624, %625 : vector<8x32xf32>
    %627 = math.tanh %626 : vector<8x32xf32>
    %628 = arith.mulf %623, %627 : vector<8x32xf32>
    %629 = vector.shape_cast %583 : vector<8x1xi1> to vector<8x1xi1>
    %630 = vector.broadcast %629 : vector<8x1xi1> to vector<8x32xi1>
    %631 = arith.select %630, %628, %603 : vector<8x32xi1>, vector<8x32xf32>
    %632 = vector.shape_cast %583 : vector<8x1xi1> to vector<8x1xi1>
    %633 = vector.broadcast %632 : vector<8x1xi1> to vector<8x32xi1>
    %634 = arith.select %633, %626, %602 : vector<8x32xi1>, vector<8x32xf32>
    %c0_210 = arith.constant 0 : index
    %c0_211 = arith.constant 0 : index
    %635 = vector.load %arg17[%c0_210, %c0_211] : memref<8x32xf32, #tpu.memory_space<vmem>>, vector<8x32xf32>
    %636 = vector.extract_strided_slice %586 {offsets = [0, 32], sizes = [8, 32], strides = [1, 1]} : vector<8x64xf32> to vector<8x32xf32>
    %637 = vector.extract_strided_slice %601 {offsets = [0, 0], sizes = [8, 32], strides = [1, 1]} : vector<8x128xf32> to vector<8x32xf32>
    %638 = arith.negf %637 : vector<8x32xf32>
    %639 = math.exp %638 : vector<8x32xf32>
    %cst_212 = arith.constant 1.000000e+00 : f32
    %640 = vector.broadcast %cst_212 : f32 to vector<8x32xf32>
    %641 = arith.addf %640, %639 : vector<8x32xf32>
    %642 = arith.divf %640, %641 : vector<8x32xf32>
    %643 = vector.extract_strided_slice %601 {offsets = [0, 32], sizes = [8, 32], strides = [1, 1]} : vector<8x128xf32> to vector<8x32xf32>
    %644 = arith.negf %643 : vector<8x32xf32>
    %645 = math.exp %644 : vector<8x32xf32>
    %cst_213 = arith.constant 1.000000e+00 : f32
    %646 = vector.broadcast %cst_213 : f32 to vector<8x32xf32>
    %647 = arith.addf %646, %645 : vector<8x32xf32>
    %648 = arith.divf %646, %647 : vector<8x32xf32>
    %649 = vector.extract_strided_slice %601 {offsets = [0, 64], sizes = [8, 32], strides = [1, 1]} : vector<8x128xf32> to vector<8x32xf32>
    %650 = math.tanh %649 : vector<8x32xf32>
    %651 = vector.extract_strided_slice %601 {offsets = [0, 96], sizes = [8, 32], strides = [1, 1]} : vector<8x128xf32> to vector<8x32xf32>
    %652 = arith.negf %651 : vector<8x32xf32>
    %653 = math.exp %652 : vector<8x32xf32>
    %cst_214 = arith.constant 1.000000e+00 : f32
    %654 = vector.broadcast %cst_214 : f32 to vector<8x32xf32>
    %655 = arith.addf %654, %653 : vector<8x32xf32>
    %656 = arith.divf %654, %655 : vector<8x32xf32>
    %657 = arith.mulf %648, %635 : vector<8x32xf32>
    %658 = arith.mulf %642, %650 : vector<8x32xf32>
    %659 = arith.addf %657, %658 : vector<8x32xf32>
    %660 = math.tanh %659 : vector<8x32xf32>
    %661 = arith.mulf %656, %660 : vector<8x32xf32>
    %662 = vector.shape_cast %585 : vector<8x1xi1> to vector<8x1xi1>
    %663 = vector.broadcast %662 : vector<8x1xi1> to vector<8x32xi1>
    %664 = arith.select %663, %661, %636 : vector<8x32xi1>, vector<8x32xf32>
    %665 = vector.shape_cast %585 : vector<8x1xi1> to vector<8x1xi1>
    %666 = vector.broadcast %665 : vector<8x1xi1> to vector<8x32xi1>
    %667 = arith.select %666, %659, %635 : vector<8x32xi1>, vector<8x32xf32>
    %c0_215 = arith.constant 0 : index
    %c0_216 = arith.constant 0 : index
    %668 = vector.load %arg16[%c0_215, %c0_216] : memref<8x32xf32, #tpu.memory_space<vmem>>, vector<8x32xf32>
    tpu.vector_store %arg16[%c0_215, %c0_216], %634 {strides = array<i32>} : memref<8x32xf32, #tpu.memory_space<vmem>>, vector<8x32xf32>,
    %c0_217 = arith.constant 0 : index
    %c0_218 = arith.constant 0 : index
    %669 = vector.load %arg17[%c0_217, %c0_218] : memref<8x32xf32, #tpu.memory_space<vmem>>, vector<8x32xf32>
    tpu.vector_store %arg17[%c0_217, %c0_218], %667 {strides = array<i32>} : memref<8x32xf32, #tpu.memory_space<vmem>>, vector<8x32xf32>,
    %c0_219 = arith.constant 0 : index
    %c0_220 = arith.constant 0 : index
    %670 = vector.load %arg15[%c0_219, %c0_220] : memref<8x64xf32, #tpu.memory_space<vmem>>, vector<8x32xf32>
    tpu.vector_store %arg15[%c0_219, %c0_220], %631 {strides = array<i32>} : memref<8x64xf32, #tpu.memory_space<vmem>>, vector<8x32xf32>,
    %c0_221 = arith.constant 0 : index
    %c32_222 = arith.constant 32 : index
    %671 = vector.load %arg15[%c0_221, %c32_222] : memref<8x64xf32, #tpu.memory_space<vmem>>, vector<8x32xf32>
    tpu.vector_store %arg15[%c0_221, %c32_222], %664 {strides = array<i32>} : memref<8x64xf32, #tpu.memory_space<vmem>>, vector<8x32xf32>,
    %cst_223 = arith.constant 0.000000e+00 : f32
    %672 = vector.shape_cast %583 : vector<8x1xi1> to vector<8x1xi1>
    %673 = vector.broadcast %672 : vector<8x1xi1> to vector<8x32xi1>
    %674 = vector.broadcast %cst_223 : f32 to vector<8x32xf32>
    %675 = arith.select %673, %631, %674 : vector<8x32xi1>, vector<8x32xf32>
    %676 = arith.index_cast %c5_i32 : i32 to index
    %c0_224 = arith.constant 0 : index
    %c0_225 = arith.constant 0 : index
    %677 = vector.load %arg13[%676, %c0_224, %c0_225] : memref<8x8x64xf32, #tpu.memory_space<vmem>>, vector<1x8x32xf32>
    %678 = vector.shape_cast %677 : vector<1x8x32xf32> to vector<8x32xf32>
    %679 = vector.shape_cast %675 : vector<8x32xf32> to vector<1x8x32xf32>
    tpu.vector_store %arg13[%676, %c0_224, %c0_225], %679 {strides = array<i32>} : memref<8x8x64xf32, #tpu.memory_space<vmem>>, vector<1x8x32xf32>,
    %cst_226 = arith.constant 0.000000e+00 : f32
    %680 = vector.shape_cast %585 : vector<8x1xi1> to vector<8x1xi1>
    %681 = vector.broadcast %680 : vector<8x1xi1> to vector<8x32xi1>
    %682 = vector.broadcast %cst_226 : f32 to vector<8x32xf32>
    %683 = arith.select %681, %664, %682 : vector<8x32xi1>, vector<8x32xf32>
    %684 = arith.index_cast %581 : i32 to index
    %c0_227 = arith.constant 0 : index
    %c32_228 = arith.constant 32 : index
    %685 = vector.load %arg13[%684, %c0_227, %c32_228] : memref<8x8x64xf32, #tpu.memory_space<vmem>>, vector<1x8x32xf32>
    %686 = vector.shape_cast %685 : vector<1x8x32xf32> to vector<8x32xf32>
    %687 = vector.shape_cast %683 : vector<8x32xf32> to vector<1x8x32xf32>
    tpu.vector_store %arg13[%684, %c0_227, %c32_228], %687 {strides = array<i32>} : memref<8x8x64xf32, #tpu.memory_space<vmem>>, vector<1x8x32xf32>,
    %688 = arith.extui %583 : vector<8x1xi1> to vector<8x1xi32>
    %689 = arith.sitofp %688 : vector<8x1xi32> to vector<8x1xf32>
    %690 = arith.index_cast %c5_i32 : i32 to index
    %c0_229 = arith.constant 0 : index
    %c0_230 = arith.constant 0 : index
    %691 = vector.load %arg14[%690, %c0_229, %c0_230] : memref<8x8x1xf32, #tpu.memory_space<vmem>>, vector<1x8x1xf32>
    %692 = vector.shape_cast %691 : vector<1x8x1xf32> to vector<8x1xf32>
    %693 = vector.shape_cast %689 : vector<8x1xf32> to vector<1x8x1xf32>
    tpu.vector_store %arg14[%690, %c0_229, %c0_230], %693 {strides = array<i32>} : memref<8x8x1xf32, #tpu.memory_space<vmem>>, vector<1x8x1xf32>,
    %c6_i32 = arith.constant 6 : i32
    %c7_i32_231 = arith.constant 7 : i32
    %694 = arith.subi %c7_i32_231, %c6_i32 : i32
    %695 = vector.broadcast %c6_i32 : i32 to vector<8x1xi32>
    %696 = arith.cmpi slt, %695, %15 : vector<8x1xi32>
    %697 = vector.broadcast %694 : i32 to vector<8x1xi32>
    %698 = arith.cmpi slt, %697, %15 : vector<8x1xi32>
    %c0_232 = arith.constant 0 : index
    %c0_233 = arith.constant 0 : index
    %699 = vector.load %arg15[%c0_232, %c0_233] : memref<8x64xf32, #tpu.memory_space<vmem>>, vector<8x64xf32>
    %700 = arith.truncf %699 : vector<8x64xf32> to vector<8x64xbf16>
    %c0_234 = arith.constant 0 : index
    %c0_235 = arith.constant 0 : index
    %701 = vector.load %arg4[%c0_234, %c0_235] : memref<64x256xbf16, #tpu.memory_space<vmem>>, vector<64x256xbf16>
    %cst_236 = arith.constant dense<0.000000e+00> : vector<8x256xf32>
    %702 = tpu.matmul %700, %701, %cst_236 {dimension_numbers = #tpu.dot_dimension_numbers<[1], [0], [0], [1], [0, 0, 1, 1], [], []>} : vector<8x64xbf16>, vector<64x256xbf16>, vector<8x256xf32> -> vector<8x256xf32>
    %c8_i32_237 = arith.constant 8 : i32
    %703 = arith.muli %c6_i32, %c8_i32_237 : i32
    %704 = tpu.assume_multiple %703, 8 : i32
    %c8_i32_238 = arith.constant 8 : i32
    %705 = arith.muli %694, %c8_i32_238 : i32
    %706 = tpu.assume_multiple %705, 8 : i32
    %707 = vector.extract_strided_slice %702 {offsets = [0, 0], sizes = [8, 128], strides = [1, 1]} : vector<8x256xf32> to vector<8x128xf32>
    %708 = arith.index_cast %704 : i32 to index
    %c0_239 = arith.constant 0 : index
    %709 = vector.load %arg12[%708, %c0_239] : memref<64x256xf32, #tpu.memory_space<vmem>>, vector<8x128xf32>
    %710 = arith.addf %707, %709 : vector<8x128xf32>
    %711 = vector.extract_strided_slice %702 {offsets = [0, 128], sizes = [8, 128], strides = [1, 1]} : vector<8x256xf32> to vector<8x128xf32>
    %712 = arith.index_cast %706 : i32 to index
    %c128_240 = arith.constant 128 : index
    %713 = vector.load %arg12[%712, %c128_240] : memref<64x256xf32, #tpu.memory_space<vmem>>, vector<8x128xf32>
    %714 = arith.addf %711, %713 : vector<8x128xf32>
    %c0_241 = arith.constant 0 : index
    %c0_242 = arith.constant 0 : index
    %715 = vector.load %arg16[%c0_241, %c0_242] : memref<8x32xf32, #tpu.memory_space<vmem>>, vector<8x32xf32>
    %716 = vector.extract_strided_slice %699 {offsets = [0, 0], sizes = [8, 32], strides = [1, 1]} : vector<8x64xf32> to vector<8x32xf32>
    %717 = vector.extract_strided_slice %710 {offsets = [0, 0], sizes = [8, 32], strides = [1, 1]} : vector<8x128xf32> to vector<8x32xf32>
    %718 = arith.negf %717 : vector<8x32xf32>
    %719 = math.exp %718 : vector<8x32xf32>
    %cst_243 = arith.constant 1.000000e+00 : f32
    %720 = vector.broadcast %cst_243 : f32 to vector<8x32xf32>
    %721 = arith.addf %720, %719 : vector<8x32xf32>
    %722 = arith.divf %720, %721 : vector<8x32xf32>
    %723 = vector.extract_strided_slice %710 {offsets = [0, 32], sizes = [8, 32], strides = [1, 1]} : vector<8x128xf32> to vector<8x32xf32>
    %724 = arith.negf %723 : vector<8x32xf32>
    %725 = math.exp %724 : vector<8x32xf32>
    %cst_244 = arith.constant 1.000000e+00 : f32
    %726 = vector.broadcast %cst_244 : f32 to vector<8x32xf32>
    %727 = arith.addf %726, %725 : vector<8x32xf32>
    %728 = arith.divf %726, %727 : vector<8x32xf32>
    %729 = vector.extract_strided_slice %710 {offsets = [0, 64], sizes = [8, 32], strides = [1, 1]} : vector<8x128xf32> to vector<8x32xf32>
    %730 = math.tanh %729 : vector<8x32xf32>
    %731 = vector.extract_strided_slice %710 {offsets = [0, 96], sizes = [8, 32], strides = [1, 1]} : vector<8x128xf32> to vector<8x32xf32>
    %732 = arith.negf %731 : vector<8x32xf32>
    %733 = math.exp %732 : vector<8x32xf32>
    %cst_245 = arith.constant 1.000000e+00 : f32
    %734 = vector.broadcast %cst_245 : f32 to vector<8x32xf32>
    %735 = arith.addf %734, %733 : vector<8x32xf32>
    %736 = arith.divf %734, %735 : vector<8x32xf32>
    %737 = arith.mulf %728, %715 : vector<8x32xf32>
    %738 = arith.mulf %722, %730 : vector<8x32xf32>
    %739 = arith.addf %737, %738 : vector<8x32xf32>
    %740 = math.tanh %739 : vector<8x32xf32>
    %741 = arith.mulf %736, %740 : vector<8x32xf32>
    %742 = vector.shape_cast %696 : vector<8x1xi1> to vector<8x1xi1>
    %743 = vector.broadcast %742 : vector<8x1xi1> to vector<8x32xi1>
    %744 = arith.select %743, %741, %716 : vector<8x32xi1>, vector<8x32xf32>
    %745 = vector.shape_cast %696 : vector<8x1xi1> to vector<8x1xi1>
    %746 = vector.broadcast %745 : vector<8x1xi1> to vector<8x32xi1>
    %747 = arith.select %746, %739, %715 : vector<8x32xi1>, vector<8x32xf32>
    %c0_246 = arith.constant 0 : index
    %c0_247 = arith.constant 0 : index
    %748 = vector.load %arg17[%c0_246, %c0_247] : memref<8x32xf32, #tpu.memory_space<vmem>>, vector<8x32xf32>
    %749 = vector.extract_strided_slice %699 {offsets = [0, 32], sizes = [8, 32], strides = [1, 1]} : vector<8x64xf32> to vector<8x32xf32>
    %750 = vector.extract_strided_slice %714 {offsets = [0, 0], sizes = [8, 32], strides = [1, 1]} : vector<8x128xf32> to vector<8x32xf32>
    %751 = arith.negf %750 : vector<8x32xf32>
    %752 = math.exp %751 : vector<8x32xf32>
    %cst_248 = arith.constant 1.000000e+00 : f32
    %753 = vector.broadcast %cst_248 : f32 to vector<8x32xf32>
    %754 = arith.addf %753, %752 : vector<8x32xf32>
    %755 = arith.divf %753, %754 : vector<8x32xf32>
    %756 = vector.extract_strided_slice %714 {offsets = [0, 32], sizes = [8, 32], strides = [1, 1]} : vector<8x128xf32> to vector<8x32xf32>
    %757 = arith.negf %756 : vector<8x32xf32>
    %758 = math.exp %757 : vector<8x32xf32>
    %cst_249 = arith.constant 1.000000e+00 : f32
    %759 = vector.broadcast %cst_249 : f32 to vector<8x32xf32>
    %760 = arith.addf %759, %758 : vector<8x32xf32>
    %761 = arith.divf %759, %760 : vector<8x32xf32>
    %762 = vector.extract_strided_slice %714 {offsets = [0, 64], sizes = [8, 32], strides = [1, 1]} : vector<8x128xf32> to vector<8x32xf32>
    %763 = math.tanh %762 : vector<8x32xf32>
    %764 = vector.extract_strided_slice %714 {offsets = [0, 96], sizes = [8, 32], strides = [1, 1]} : vector<8x128xf32> to vector<8x32xf32>
    %765 = arith.negf %764 : vector<8x32xf32>
    %766 = math.exp %765 : vector<8x32xf32>
    %cst_250 = arith.constant 1.000000e+00 : f32
    %767 = vector.broadcast %cst_250 : f32 to vector<8x32xf32>
    %768 = arith.addf %767, %766 : vector<8x32xf32>
    %769 = arith.divf %767, %768 : vector<8x32xf32>
    %770 = arith.mulf %761, %748 : vector<8x32xf32>
    %771 = arith.mulf %755, %763 : vector<8x32xf32>
    %772 = arith.addf %770, %771 : vector<8x32xf32>
    %773 = math.tanh %772 : vector<8x32xf32>
    %774 = arith.mulf %769, %773 : vector<8x32xf32>
    %775 = vector.shape_cast %698 : vector<8x1xi1> to vector<8x1xi1>
    %776 = vector.broadcast %775 : vector<8x1xi1> to vector<8x32xi1>
    %777 = arith.select %776, %774, %749 : vector<8x32xi1>, vector<8x32xf32>
    %778 = vector.shape_cast %698 : vector<8x1xi1> to vector<8x1xi1>
    %779 = vector.broadcast %778 : vector<8x1xi1> to vector<8x32xi1>
    %780 = arith.select %779, %772, %748 : vector<8x32xi1>, vector<8x32xf32>
    %c0_251 = arith.constant 0 : index
    %c0_252 = arith.constant 0 : index
    %781 = vector.load %arg16[%c0_251, %c0_252] : memref<8x32xf32, #tpu.memory_space<vmem>>, vector<8x32xf32>
    tpu.vector_store %arg16[%c0_251, %c0_252], %747 {strides = array<i32>} : memref<8x32xf32, #tpu.memory_space<vmem>>, vector<8x32xf32>,
    %c0_253 = arith.constant 0 : index
    %c0_254 = arith.constant 0 : index
    %782 = vector.load %arg17[%c0_253, %c0_254] : memref<8x32xf32, #tpu.memory_space<vmem>>, vector<8x32xf32>
    tpu.vector_store %arg17[%c0_253, %c0_254], %780 {strides = array<i32>} : memref<8x32xf32, #tpu.memory_space<vmem>>, vector<8x32xf32>,
    %c0_255 = arith.constant 0 : index
    %c0_256 = arith.constant 0 : index
    %783 = vector.load %arg15[%c0_255, %c0_256] : memref<8x64xf32, #tpu.memory_space<vmem>>, vector<8x32xf32>
    tpu.vector_store %arg15[%c0_255, %c0_256], %744 {strides = array<i32>} : memref<8x64xf32, #tpu.memory_space<vmem>>, vector<8x32xf32>,
    %c0_257 = arith.constant 0 : index
    %c32_258 = arith.constant 32 : index
    %784 = vector.load %arg15[%c0_257, %c32_258] : memref<8x64xf32, #tpu.memory_space<vmem>>, vector<8x32xf32>
    tpu.vector_store %arg15[%c0_257, %c32_258], %777 {strides = array<i32>} : memref<8x64xf32, #tpu.memory_space<vmem>>, vector<8x32xf32>,
    %cst_259 = arith.constant 0.000000e+00 : f32
    %785 = vector.shape_cast %696 : vector<8x1xi1> to vector<8x1xi1>
    %786 = vector.broadcast %785 : vector<8x1xi1> to vector<8x32xi1>
    %787 = vector.broadcast %cst_259 : f32 to vector<8x32xf32>
    %788 = arith.select %786, %744, %787 : vector<8x32xi1>, vector<8x32xf32>
    %789 = arith.index_cast %c6_i32 : i32 to index
    %c0_260 = arith.constant 0 : index
    %c0_261 = arith.constant 0 : index
    %790 = vector.load %arg13[%789, %c0_260, %c0_261] : memref<8x8x64xf32, #tpu.memory_space<vmem>>, vector<1x8x32xf32>
    %791 = vector.shape_cast %790 : vector<1x8x32xf32> to vector<8x32xf32>
    %792 = vector.shape_cast %788 : vector<8x32xf32> to vector<1x8x32xf32>
    tpu.vector_store %arg13[%789, %c0_260, %c0_261], %792 {strides = array<i32>} : memref<8x8x64xf32, #tpu.memory_space<vmem>>, vector<1x8x32xf32>,
    %cst_262 = arith.constant 0.000000e+00 : f32
    %793 = vector.shape_cast %698 : vector<8x1xi1> to vector<8x1xi1>
    %794 = vector.broadcast %793 : vector<8x1xi1> to vector<8x32xi1>
    %795 = vector.broadcast %cst_262 : f32 to vector<8x32xf32>
    %796 = arith.select %794, %777, %795 : vector<8x32xi1>, vector<8x32xf32>
    %797 = arith.index_cast %694 : i32 to index
    %c0_263 = arith.constant 0 : index
    %c32_264 = arith.constant 32 : index
    %798 = vector.load %arg13[%797, %c0_263, %c32_264] : memref<8x8x64xf32, #tpu.memory_space<vmem>>, vector<1x8x32xf32>
    %799 = vector.shape_cast %798 : vector<1x8x32xf32> to vector<8x32xf32>
    %800 = vector.shape_cast %796 : vector<8x32xf32> to vector<1x8x32xf32>
    tpu.vector_store %arg13[%797, %c0_263, %c32_264], %800 {strides = array<i32>} : memref<8x8x64xf32, #tpu.memory_space<vmem>>, vector<1x8x32xf32>,
    %801 = arith.extui %696 : vector<8x1xi1> to vector<8x1xi32>
    %802 = arith.sitofp %801 : vector<8x1xi32> to vector<8x1xf32>
    %803 = arith.index_cast %c6_i32 : i32 to index
    %c0_265 = arith.constant 0 : index
    %c0_266 = arith.constant 0 : index
    %804 = vector.load %arg14[%803, %c0_265, %c0_266] : memref<8x8x1xf32, #tpu.memory_space<vmem>>, vector<1x8x1xf32>
    %805 = vector.shape_cast %804 : vector<1x8x1xf32> to vector<8x1xf32>
    %806 = vector.shape_cast %802 : vector<8x1xf32> to vector<1x8x1xf32>
    tpu.vector_store %arg14[%803, %c0_265, %c0_266], %806 {strides = array<i32>} : memref<8x8x1xf32, #tpu.memory_space<vmem>>, vector<1x8x1xf32>,
    %c7_i32_267 = arith.constant 7 : i32
    %c7_i32_268 = arith.constant 7 : i32
    %807 = arith.subi %c7_i32_268, %c7_i32_267 : i32
    %808 = vector.broadcast %c7_i32_267 : i32 to vector<8x1xi32>
    %809 = arith.cmpi slt, %808, %15 : vector<8x1xi32>
    %810 = vector.broadcast %807 : i32 to vector<8x1xi32>
    %811 = arith.cmpi slt, %810, %15 : vector<8x1xi32>
    %c0_269 = arith.constant 0 : index
    %c0_270 = arith.constant 0 : index
    %812 = vector.load %arg15[%c0_269, %c0_270] : memref<8x64xf32, #tpu.memory_space<vmem>>, vector<8x64xf32>
    %813 = arith.truncf %812 : vector<8x64xf32> to vector<8x64xbf16>
    %c0_271 = arith.constant 0 : index
    %c0_272 = arith.constant 0 : index
    %814 = vector.load %arg4[%c0_271, %c0_272] : memref<64x256xbf16, #tpu.memory_space<vmem>>, vector<64x256xbf16>
    %cst_273 = arith.constant dense<0.000000e+00> : vector<8x256xf32>
    %815 = tpu.matmul %813, %814, %cst_273 {dimension_numbers = #tpu.dot_dimension_numbers<[1], [0], [0], [1], [0, 0, 1, 1], [], []>} : vector<8x64xbf16>, vector<64x256xbf16>, vector<8x256xf32> -> vector<8x256xf32>
    %c8_i32_274 = arith.constant 8 : i32
    %816 = arith.muli %c7_i32_267, %c8_i32_274 : i32
    %817 = tpu.assume_multiple %816, 8 : i32
    %c8_i32_275 = arith.constant 8 : i32
    %818 = arith.muli %807, %c8_i32_275 : i32
    %819 = tpu.assume_multiple %818, 8 : i32
    %820 = vector.extract_strided_slice %815 {offsets = [0, 0], sizes = [8, 128], strides = [1, 1]} : vector<8x256xf32> to vector<8x128xf32>
    %821 = arith.index_cast %817 : i32 to index
    %c0_276 = arith.constant 0 : index
    %822 = vector.load %arg12[%821, %c0_276] : memref<64x256xf32, #tpu.memory_space<vmem>>, vector<8x128xf32>
    %823 = arith.addf %820, %822 : vector<8x128xf32>
    %824 = vector.extract_strided_slice %815 {offsets = [0, 128], sizes = [8, 128], strides = [1, 1]} : vector<8x256xf32> to vector<8x128xf32>
    %825 = arith.index_cast %819 : i32 to index
    %c128_277 = arith.constant 128 : index
    %826 = vector.load %arg12[%825, %c128_277] : memref<64x256xf32, #tpu.memory_space<vmem>>, vector<8x128xf32>
    %827 = arith.addf %824, %826 : vector<8x128xf32>
    %c0_278 = arith.constant 0 : index
    %c0_279 = arith.constant 0 : index
    %828 = vector.load %arg16[%c0_278, %c0_279] : memref<8x32xf32, #tpu.memory_space<vmem>>, vector<8x32xf32>
    %829 = vector.extract_strided_slice %812 {offsets = [0, 0], sizes = [8, 32], strides = [1, 1]} : vector<8x64xf32> to vector<8x32xf32>
    %830 = vector.extract_strided_slice %823 {offsets = [0, 0], sizes = [8, 32], strides = [1, 1]} : vector<8x128xf32> to vector<8x32xf32>
    %831 = arith.negf %830 : vector<8x32xf32>
    %832 = math.exp %831 : vector<8x32xf32>
    %cst_280 = arith.constant 1.000000e+00 : f32
    %833 = vector.broadcast %cst_280 : f32 to vector<8x32xf32>
    %834 = arith.addf %833, %832 : vector<8x32xf32>
    %835 = arith.divf %833, %834 : vector<8x32xf32>
    %836 = vector.extract_strided_slice %823 {offsets = [0, 32], sizes = [8, 32], strides = [1, 1]} : vector<8x128xf32> to vector<8x32xf32>
    %837 = arith.negf %836 : vector<8x32xf32>
    %838 = math.exp %837 : vector<8x32xf32>
    %cst_281 = arith.constant 1.000000e+00 : f32
    %839 = vector.broadcast %cst_281 : f32 to vector<8x32xf32>
    %840 = arith.addf %839, %838 : vector<8x32xf32>
    %841 = arith.divf %839, %840 : vector<8x32xf32>
    %842 = vector.extract_strided_slice %823 {offsets = [0, 64], sizes = [8, 32], strides = [1, 1]} : vector<8x128xf32> to vector<8x32xf32>
    %843 = math.tanh %842 : vector<8x32xf32>
    %844 = vector.extract_strided_slice %823 {offsets = [0, 96], sizes = [8, 32], strides = [1, 1]} : vector<8x128xf32> to vector<8x32xf32>
    %845 = arith.negf %844 : vector<8x32xf32>
    %846 = math.exp %845 : vector<8x32xf32>
    %cst_282 = arith.constant 1.000000e+00 : f32
    %847 = vector.broadcast %cst_282 : f32 to vector<8x32xf32>
    %848 = arith.addf %847, %846 : vector<8x32xf32>
    %849 = arith.divf %847, %848 : vector<8x32xf32>
    %850 = arith.mulf %841, %828 : vector<8x32xf32>
    %851 = arith.mulf %835, %843 : vector<8x32xf32>
    %852 = arith.addf %850, %851 : vector<8x32xf32>
    %853 = math.tanh %852 : vector<8x32xf32>
    %854 = arith.mulf %849, %853 : vector<8x32xf32>
    %855 = vector.shape_cast %809 : vector<8x1xi1> to vector<8x1xi1>
    %856 = vector.broadcast %855 : vector<8x1xi1> to vector<8x32xi1>
    %857 = arith.select %856, %854, %829 : vector<8x32xi1>, vector<8x32xf32>
    %858 = vector.shape_cast %809 : vector<8x1xi1> to vector<8x1xi1>
    %859 = vector.broadcast %858 : vector<8x1xi1> to vector<8x32xi1>
    %860 = arith.select %859, %852, %828 : vector<8x32xi1>, vector<8x32xf32>
    %c0_283 = arith.constant 0 : index
    %c0_284 = arith.constant 0 : index
    %861 = vector.load %arg17[%c0_283, %c0_284] : memref<8x32xf32, #tpu.memory_space<vmem>>, vector<8x32xf32>
    %862 = vector.extract_strided_slice %812 {offsets = [0, 32], sizes = [8, 32], strides = [1, 1]} : vector<8x64xf32> to vector<8x32xf32>
    %863 = vector.extract_strided_slice %827 {offsets = [0, 0], sizes = [8, 32], strides = [1, 1]} : vector<8x128xf32> to vector<8x32xf32>
    %864 = arith.negf %863 : vector<8x32xf32>
    %865 = math.exp %864 : vector<8x32xf32>
    %cst_285 = arith.constant 1.000000e+00 : f32
    %866 = vector.broadcast %cst_285 : f32 to vector<8x32xf32>
    %867 = arith.addf %866, %865 : vector<8x32xf32>
    %868 = arith.divf %866, %867 : vector<8x32xf32>
    %869 = vector.extract_strided_slice %827 {offsets = [0, 32], sizes = [8, 32], strides = [1, 1]} : vector<8x128xf32> to vector<8x32xf32>
    %870 = arith.negf %869 : vector<8x32xf32>
    %871 = math.exp %870 : vector<8x32xf32>
    %cst_286 = arith.constant 1.000000e+00 : f32
    %872 = vector.broadcast %cst_286 : f32 to vector<8x32xf32>
    %873 = arith.addf %872, %871 : vector<8x32xf32>
    %874 = arith.divf %872, %873 : vector<8x32xf32>
    %875 = vector.extract_strided_slice %827 {offsets = [0, 64], sizes = [8, 32], strides = [1, 1]} : vector<8x128xf32> to vector<8x32xf32>
    %876 = math.tanh %875 : vector<8x32xf32>
    %877 = vector.extract_strided_slice %827 {offsets = [0, 96], sizes = [8, 32], strides = [1, 1]} : vector<8x128xf32> to vector<8x32xf32>
    %878 = arith.negf %877 : vector<8x32xf32>
    %879 = math.exp %878 : vector<8x32xf32>
    %cst_287 = arith.constant 1.000000e+00 : f32
    %880 = vector.broadcast %cst_287 : f32 to vector<8x32xf32>
    %881 = arith.addf %880, %879 : vector<8x32xf32>
    %882 = arith.divf %880, %881 : vector<8x32xf32>
    %883 = arith.mulf %874, %861 : vector<8x32xf32>
    %884 = arith.mulf %868, %876 : vector<8x32xf32>
    %885 = arith.addf %883, %884 : vector<8x32xf32>
    %886 = math.tanh %885 : vector<8x32xf32>
    %887 = arith.mulf %882, %886 : vector<8x32xf32>
    %888 = vector.shape_cast %811 : vector<8x1xi1> to vector<8x1xi1>
    %889 = vector.broadcast %888 : vector<8x1xi1> to vector<8x32xi1>
    %890 = arith.select %889, %887, %862 : vector<8x32xi1>, vector<8x32xf32>
    %891 = vector.shape_cast %811 : vector<8x1xi1> to vector<8x1xi1>
    %892 = vector.broadcast %891 : vector<8x1xi1> to vector<8x32xi1>
    %893 = arith.select %892, %885, %861 : vector<8x32xi1>, vector<8x32xf32>
    %c0_288 = arith.constant 0 : index
    %c0_289 = arith.constant 0 : index
    %894 = vector.load %arg16[%c0_288, %c0_289] : memref<8x32xf32, #tpu.memory_space<vmem>>, vector<8x32xf32>
    tpu.vector_store %arg16[%c0_288, %c0_289], %860 {strides = array<i32>} : memref<8x32xf32, #tpu.memory_space<vmem>>, vector<8x32xf32>,
    %c0_290 = arith.constant 0 : index
    %c0_291 = arith.constant 0 : index
    %895 = vector.load %arg17[%c0_290, %c0_291] : memref<8x32xf32, #tpu.memory_space<vmem>>, vector<8x32xf32>
    tpu.vector_store %arg17[%c0_290, %c0_291], %893 {strides = array<i32>} : memref<8x32xf32, #tpu.memory_space<vmem>>, vector<8x32xf32>,
    %c0_292 = arith.constant 0 : index
    %c0_293 = arith.constant 0 : index
    %896 = vector.load %arg15[%c0_292, %c0_293] : memref<8x64xf32, #tpu.memory_space<vmem>>, vector<8x32xf32>
    tpu.vector_store %arg15[%c0_292, %c0_293], %857 {strides = array<i32>} : memref<8x64xf32, #tpu.memory_space<vmem>>, vector<8x32xf32>,
    %c0_294 = arith.constant 0 : index
    %c32_295 = arith.constant 32 : index
    %897 = vector.load %arg15[%c0_294, %c32_295] : memref<8x64xf32, #tpu.memory_space<vmem>>, vector<8x32xf32>
    tpu.vector_store %arg15[%c0_294, %c32_295], %890 {strides = array<i32>} : memref<8x64xf32, #tpu.memory_space<vmem>>, vector<8x32xf32>,
    %cst_296 = arith.constant 0.000000e+00 : f32
    %898 = vector.shape_cast %809 : vector<8x1xi1> to vector<8x1xi1>
    %899 = vector.broadcast %898 : vector<8x1xi1> to vector<8x32xi1>
    %900 = vector.broadcast %cst_296 : f32 to vector<8x32xf32>
    %901 = arith.select %899, %857, %900 : vector<8x32xi1>, vector<8x32xf32>
    %902 = arith.index_cast %c7_i32_267 : i32 to index
    %c0_297 = arith.constant 0 : index
    %c0_298 = arith.constant 0 : index
    %903 = vector.load %arg13[%902, %c0_297, %c0_298] : memref<8x8x64xf32, #tpu.memory_space<vmem>>, vector<1x8x32xf32>
    %904 = vector.shape_cast %903 : vector<1x8x32xf32> to vector<8x32xf32>
    %905 = vector.shape_cast %901 : vector<8x32xf32> to vector<1x8x32xf32>
    tpu.vector_store %arg13[%902, %c0_297, %c0_298], %905 {strides = array<i32>} : memref<8x8x64xf32, #tpu.memory_space<vmem>>, vector<1x8x32xf32>,
    %cst_299 = arith.constant 0.000000e+00 : f32
    %906 = vector.shape_cast %811 : vector<8x1xi1> to vector<8x1xi1>
    %907 = vector.broadcast %906 : vector<8x1xi1> to vector<8x32xi1>
    %908 = vector.broadcast %cst_299 : f32 to vector<8x32xf32>
    %909 = arith.select %907, %890, %908 : vector<8x32xi1>, vector<8x32xf32>
    %910 = arith.index_cast %807 : i32 to index
    %c0_300 = arith.constant 0 : index
    %c32_301 = arith.constant 32 : index
    %911 = vector.load %arg13[%910, %c0_300, %c32_301] : memref<8x8x64xf32, #tpu.memory_space<vmem>>, vector<1x8x32xf32>
    %912 = vector.shape_cast %911 : vector<1x8x32xf32> to vector<8x32xf32>
    %913 = vector.shape_cast %909 : vector<8x32xf32> to vector<1x8x32xf32>
    tpu.vector_store %arg13[%910, %c0_300, %c32_301], %913 {strides = array<i32>} : memref<8x8x64xf32, #tpu.memory_space<vmem>>, vector<1x8x32xf32>,
    %914 = arith.extui %809 : vector<8x1xi1> to vector<8x1xi32>
    %915 = arith.sitofp %914 : vector<8x1xi32> to vector<8x1xf32>
    %916 = arith.index_cast %c7_i32_267 : i32 to index
    %c0_302 = arith.constant 0 : index
    %c0_303 = arith.constant 0 : index
    %917 = vector.load %arg14[%916, %c0_302, %c0_303] : memref<8x8x1xf32, #tpu.memory_space<vmem>>, vector<1x8x1xf32>
    %918 = vector.shape_cast %917 : vector<1x8x1xf32> to vector<8x1xf32>
    %919 = vector.shape_cast %915 : vector<8x1xf32> to vector<1x8x1xf32>
    tpu.vector_store %arg14[%916, %c0_302, %c0_303], %919 {strides = array<i32>} : memref<8x8x1xf32, #tpu.memory_space<vmem>>, vector<1x8x1xf32>,
    %c8_i32_304 = arith.constant 8 : i32
    %c0_305 = arith.constant 0 : index
    %c0_306 = arith.constant 0 : index
    %c0_307 = arith.constant 0 : index
    %920 = vector.load %arg13[%c0_305, %c0_306, %c0_307] : memref<8x8x64xf32, #tpu.memory_space<vmem>>, vector<8x8x64xf32>
    %921 = vector.shape_cast %920 : vector<8x8x64xf32> to vector<64x64xf32>
    %922 = arith.truncf %921 : vector<64x64xf32> to vector<64x64xbf16>
    %c0_308 = arith.constant 0 : index
    %c0_309 = arith.constant 0 : index
    %923 = vector.load %arg6[%c0_308, %c0_309] : memref<64x32xbf16, #tpu.memory_space<vmem>>, vector<64x32xbf16>
    %cst_310 = arith.constant dense<0.000000e+00> : vector<64x32xf32>
    %924 = tpu.matmul %922, %923, %cst_310 {dimension_numbers = #tpu.dot_dimension_numbers<[1], [0], [0], [1], [0, 0, 1, 1], [], []>} : vector<64x64xbf16>, vector<64x32xbf16>, vector<64x32xf32> -> vector<64x32xf32>
    %c0_311 = arith.constant 0 : index
    %c0_312 = arith.constant 0 : index
    %925 = vector.load %arg7[%c0_311, %c0_312] : memref<1x32xf32, #tpu.memory_space<vmem>>, vector<1x32xf32>
    %926 = vector.broadcast %925 : vector<1x32xf32> to vector<64x32xf32>
    %927 = arith.addf %924, %926 : vector<64x32xf32>
    %928 = math.tanh %927 : vector<64x32xf32>
    %929 = arith.truncf %928 : vector<64x32xf32> to vector<64x32xbf16>
    %c0_313 = arith.constant 0 : index
    %c0_314 = arith.constant 0 : index
    %930 = vector.load %arg8[%c0_313, %c0_314] : memref<32x1xbf16, #tpu.memory_space<vmem>>, vector<32x1xbf16>
    %cst_315 = arith.constant dense<0.000000e+00> : vector<64x1xf32>
    %931 = tpu.matmul %929, %930, %cst_315 {dimension_numbers = #tpu.dot_dimension_numbers<[1], [0], [0], [1], [0, 0, 1, 1], [], []>} : vector<64x32xbf16>, vector<32x1xbf16>, vector<64x1xf32> -> vector<64x1xf32>
    %932 = vector.shape_cast %931 : vector<64x1xf32> to vector<8x8x1xf32>
    %c0_316 = arith.constant 0 : index
    %c0_317 = arith.constant 0 : index
    %c0_318 = arith.constant 0 : index
    %933 = vector.load %arg14[%c0_316, %c0_317, %c0_318] : memref<8x8x1xf32, #tpu.memory_space<vmem>>, vector<8x8x1xf32>
    %cst_319 = arith.constant 0.000000e+00 : f32
    %934 = vector.broadcast %cst_319 : f32 to vector<8x8x1xf32>
    %935 = arith.cmpf ogt, %933, %934 : vector<8x8x1xf32>
    %cst_320 = arith.constant -1.000000e+30 : f32
    %936 = vector.broadcast %cst_320 : f32 to vector<8x8x1xf32>
    %937 = arith.select %935, %932, %936 : vector<8x8x1xi1>, vector<8x8x1xf32>
    %cst_321 = arith.constant dense<0xFF800000> : vector<8x1xf32>
    %938 = vector.multi_reduction <maximumf>, %937, %cst_321 [0] : vector<8x8x1xf32> to vector<8x1xf32>
    %939 = vector.shape_cast %938 : vector<8x1xf32> to vector<1x8x1xf32>
    %940 = vector.broadcast %939 : vector<1x8x1xf32> to vector<8x8x1xf32>
    %941 = arith.subf %937, %940 : vector<8x8x1xf32>
    %942 = math.exp %941 : vector<8x8x1xf32>
    %943 = arith.mulf %942, %933 : vector<8x8x1xf32>
    %cst_322 = arith.constant dense<0.000000e+00> : vector<8x1xf32>
    %944 = vector.multi_reduction <add>, %943, %cst_322 [0] : vector<8x8x1xf32> to vector<8x1xf32>
    %945 = vector.shape_cast %944 : vector<8x1xf32> to vector<1x8x1xf32>
    %cst_323 = arith.constant 1.000000e-30 : f32
    %946 = vector.broadcast %cst_323 : f32 to vector<1x8x1xf32>
    %947 = arith.maximumf %945, %946 : vector<1x8x1xf32>
    %948 = vector.broadcast %947 : vector<1x8x1xf32> to vector<8x8x1xf32>
    %949 = arith.divf %943, %948 : vector<8x8x1xf32>
    %c0_324 = arith.constant 0 : index
    %c0_325 = arith.constant 0 : index
    %c0_326 = arith.constant 0 : index
    %950 = vector.load %arg13[%c0_324, %c0_325, %c0_326] : memref<8x8x64xf32, #tpu.memory_space<vmem>>, vector<8x8x64xf32>
    %951 = vector.broadcast %949 : vector<8x8x1xf32> to vector<8x8x64xf32>
    %952 = arith.mulf %951, %950 : vector<8x8x64xf32>
    %cst_327 = arith.constant dense<0.000000e+00> : vector<8x64xf32>
    %953 = vector.multi_reduction <add>, %952, %cst_327 [0] : vector<8x8x64xf32> to vector<8x64xf32>
    %954 = arith.truncf %953 : vector<8x64xf32> to vector<8x64xbf16>
    %c0_328 = arith.constant 0 : index
    %c0_329 = arith.constant 0 : index
    %955 = vector.load %arg9[%c0_328, %c0_329] : memref<64x128xbf16, #tpu.memory_space<vmem>>, vector<64x128xbf16>
    %cst_330 = arith.constant dense<0.000000e+00> : vector<8x128xf32>
    %956 = tpu.matmul %954, %955, %cst_330 {dimension_numbers = #tpu.dot_dimension_numbers<[1], [0], [0], [1], [0, 0, 1, 1], [], []>} : vector<8x64xbf16>, vector<64x128xbf16>, vector<8x128xf32> -> vector<8x128xf32>
    %c0_331 = arith.constant 0 : index
    %c0_332 = arith.constant 0 : index
    %957 = vector.load %arg10[%c0_331, %c0_332] : memref<1x128xf32, #tpu.memory_space<vmem>>, vector<1x128xf32>
    %958 = vector.broadcast %957 : vector<1x128xf32> to vector<8x128xf32>
    %959 = arith.addf %956, %958 : vector<8x128xf32>
    %c0_333 = arith.constant 0 : index
    %c0_334 = arith.constant 0 : index
    %960 = vector.load %arg11[%c0_333, %c0_334] : memref<8x128xf32, #tpu.memory_space<vmem>>, vector<8x128xf32>
    tpu.vector_store %arg11[%c0_333, %c0_334], %959 {strides = array<i32>} : memref<8x128xf32, #tpu.memory_space<vmem>>, vector<8x128xf32>,
    return
  }
  func.func @transform_0(%arg0: i32) -> (i32, i32) {
    %c0_i32 = arith.constant 0 : i32
    %c0_i32_0 = arith.constant 0 : i32
    return %arg0, %c0_i32 : i32, i32
  }
  func.func @transform_1(%arg0: i32) -> (i32, i32, i32) {
    %c0_i32 = arith.constant 0 : i32
    %c0_i32_0 = arith.constant 0 : i32
    %c0_i32_1 = arith.constant 0 : i32
    return %c0_i32, %arg0, %c0_i32_0 : i32, i32, i32
  }
  func.func @transform_2(%arg0: i32) -> (i32, i32) {
    %c0_i32 = arith.constant 0 : i32
    %c0_i32_0 = arith.constant 0 : i32
    %c0_i32_1 = arith.constant 0 : i32
    return %c0_i32, %c0_i32_0 : i32, i32
  }
  func.func @transform_3(%arg0: i32) -> (i32, i32) {
    %c0_i32 = arith.constant 0 : i32
    %c0_i32_0 = arith.constant 0 : i32
    %c0_i32_1 = arith.constant 0 : i32
    return %c0_i32, %c0_i32_0 : i32, i32
  }
  func.func @transform_4(%arg0: i32) -> (i32, i32) {
    %c0_i32 = arith.constant 0 : i32
    %c0_i32_0 = arith.constant 0 : i32
    %c0_i32_1 = arith.constant 0 : i32
    return %c0_i32, %c0_i32_0 : i32, i32
  }
  func.func @transform_5(%arg0: i32) -> (i32, i32) {
    %c0_i32 = arith.constant 0 : i32
    %c0_i32_0 = arith.constant 0 : i32
    %c0_i32_1 = arith.constant 0 : i32
    return %c0_i32, %c0_i32_0 : i32, i32
  }
  func.func @transform_6(%arg0: i32) -> (i32, i32) {
    %c0_i32 = arith.constant 0 : i32
    %c0_i32_0 = arith.constant 0 : i32
    %c0_i32_1 = arith.constant 0 : i32
    return %c0_i32, %c0_i32_0 : i32, i32
  }
  func.func @transform_7(%arg0: i32) -> (i32, i32) {
    %c0_i32 = arith.constant 0 : i32
    %c0_i32_0 = arith.constant 0 : i32
    %c0_i32_1 = arith.constant 0 : i32
    return %c0_i32, %c0_i32_0 : i32, i32
  }
  func.func @transform_8(%arg0: i32) -> (i32, i32) {
    %c0_i32 = arith.constant 0 : i32
    %c0_i32_0 = arith.constant 0 : i32
    %c0_i32_1 = arith.constant 0 : i32
    return %c0_i32, %c0_i32_0 : i32, i32
  }
  func.func @transform_9(%arg0: i32) -> (i32, i32) {
    %c0_i32 = arith.constant 0 : i32
    %c0_i32_0 = arith.constant 0 : i32
    %c0_i32_1 = arith.constant 0 : i32
    return %c0_i32, %c0_i32_0 : i32, i32
  }
  func.func @transform_10(%arg0: i32) -> (i32, i32) {
    %c0_i32 = arith.constant 0 : i32
    %c0_i32_0 = arith.constant 0 : i32
    return %arg0, %c0_i32 : i32, i32
  }
}

</mosaic_0001>

<llo_original>
// kernel: _lambda_.1
$region0: #{_lambda_.1}
  #allocation0 [shape = 'u32[]', space=smem, size = 0x4, offset = 0x4, fixed_abs, tag = 'smem constant byte address 0x4 - core index']
  #allocation1 [shape = 'u32[144,128]{1,0:T(1,128)}', space=vmem, size = 0x12000, scoped, tag = 'internal scratch']
  #allocation2 [shape = 'f32[64,256]{1,0:T(8,128)}', space=vmem, size = 0x10000, scoped, tag = 'scratch operand']
  #allocation3 [shape = 'f32[8,8,64]{2,1,0:T(8,128)}', space=vmem, size = 0x8000, scoped, tag = 'scratch operand']
  #allocation4 [shape = 'f32[8,8,1]{2,1,0:T(8,128)}', space=vmem, size = 0x8000, scoped, tag = 'scratch operand']
  #allocation5 [shape = 'f32[8,64]{1,0:T(8,128)}', space=vmem, size = 0x1000, scoped, tag = 'scratch operand']
  #allocation6 [shape = 'f32[8,32]{1,0:T(8,128)}', space=vmem, size = 0x1000, scoped, tag = 'scratch operand']
  #allocation7 [shape = 'f32[8,32]{1,0:T(8,128)}', space=vmem, size = 0x1000, scoped, tag = 'scratch operand']
  %s0 = inlined_call_operand.vmem [shape: s32[8,1], index: 0, kind: input, shape index: {}]
  %s1 = inlined_call_operand.vmem [shape: f32[8,8,32], index: 1, kind: input, shape index: {}]
  %s2 = inlined_call_operand.vmem [shape: bf16[32,256], index: 2, kind: input, shape index: {}]
  %s3 = inlined_call_operand.vmem [shape: bf16[64,256], index: 3, kind: input, shape index: {}]
  %s4 = inlined_call_operand.vmem [shape: f32[1,256], index: 4, kind: input, shape index: {}]
  %s5 = inlined_call_operand.vmem [shape: bf16[64,32], index: 5, kind: input, shape index: {}]
  %s6 = inlined_call_operand.vmem [shape: f32[1,32], index: 6, kind: input, shape index: {}]
  %s7 = inlined_call_operand.vmem [shape: bf16[32,1], index: 7, kind: input, shape index: {}]
  %s8 = inlined_call_operand.vmem [shape: bf16[64,128], index: 8, kind: input, shape index: {}]
  %s9 = inlined_call_operand.vmem [shape: f32[1,128], index: 9, kind: input, shape index: {}]
  %s10 = inlined_call_operand.vmem [shape: f32[8,128], index: 10, kind: output, shape index: {}]
  %s11 = sld [smem:[#allocation0]]
  $region50: #{_lambda_.1} parent=0
    _
  %s13 = ssub.s32 1, %s11
  %s14 = scalar_select 0, %s13, %s11
  // Predicated region
  $region2: #{_lambda_.1} parent=0 // pred_check
    _
  $region3: #{_lambda_.1} parent=0 // pred_check_branch
    %16 = sbr.rel (0) target = $region5
  $region4: #{_lambda_.1} parent=0 // pred_region
    _
  $region5: #{_lambda_.1} parent=0 // pred_fallthru
    _
  // Predicated region
  $region6: #{_lambda_.1} parent=0 // pred_check
    _
  $region7: #{_lambda_.1} parent=0 // pred_check_branch
    %18 = sbr.rel (0) target = $region9
  $region8: #{_lambda_.1} parent=0 // pred_region
    _
  $region9: #{_lambda_.1} parent=0 // pred_fallthru
    _
  // Predicated region
  $region10: #{_lambda_.1} parent=0 // pred_check
    _
  $region11: #{_lambda_.1} parent=0 // pred_check_branch
    %20 = sbr.rel (0) target = $region13
  $region12: #{_lambda_.1} parent=0 // pred_region
    _
  $region13: #{_lambda_.1} parent=0 // pred_fallthru
    _
  // Predicated region
  $region14: #{_lambda_.1} parent=0 // pred_check
    _
  $region15: #{_lambda_.1} parent=0 // pred_check_branch
    %22 = sbr.rel (0) target = $region17
  $region16: #{_lambda_.1} parent=0 // pred_region
    _
  $region17: #{_lambda_.1} parent=0 // pred_fallthru
    _
  // Predicated region
  $region18: #{_lambda_.1} parent=0 // pred_check
    _
  $region19: #{_lambda_.1} parent=0 // pred_check_branch
    %24 = sbr.rel (0) target = $region21
  $region20: #{_lambda_.1} parent=0 // pred_region
    _
  $region21: #{_lambda_.1} parent=0 // pred_fallthru
    _
  // Predicated region
  $region22: #{_lambda_.1} parent=0 // pred_check
    _
  $region23: #{_lambda_.1} parent=0 // pred_check_branch
    %26 = sbr.rel (0) target = $region25
  $region24: #{_lambda_.1} parent=0 // pred_region
    _
  $region25: #{_lambda_.1} parent=0 // pred_fallthru
    _
  // Predicated region
  $region26: #{_lambda_.1} parent=0 // pred_check
    _
  $region27: #{_lambda_.1} parent=0 // pred_check_branch
    %28 = sbr.rel (0) target = $region29
  $region28: #{_lambda_.1} parent=0 // pred_region
    _
  $region29: #{_lambda_.1} parent=0 // pred_fallthru
    _
  // Predicated region
  $region30: #{_lambda_.1} parent=0 // pred_check
    _
  $region31: #{_lambda_.1} parent=0 // pred_check_branch
    %30 = sbr.rel (0) target = $region33
  $region32: #{_lambda_.1} parent=0 // pred_region
    _
  $region33: #{_lambda_.1} parent=0 // pred_fallthru
    _
  // Predicated region
  $region34: #{_lambda_.1} parent=0 // pred_check
    _
  $region35: #{_lambda_.1} parent=0 // pred_check_branch
    %32 = sbr.rel (0) target = $region37
  $region36: #{_lambda_.1} parent=0 // pred_region
    _
  $region37: #{_lambda_.1} parent=0 // pred_fallthru
    _
  // Predicated region
  $region38: #{_lambda_.1} parent=0 // pred_check
    _
  $region39: #{_lambda_.1} parent=0 // pred_check_branch
    %34 = sbr.rel (0) target = $region41
  $region40: #{_lambda_.1} parent=0 // pred_region
    _
  $region41: #{_lambda_.1} parent=0 // pred_fallthru
    _
  %v36 = vld [vmem:[%s1] sm:$0xff]
  %v37 = vld [vmem:[%s1 + $0x8] sm:$0xff]
  %v38 = vld [vmem:[%s1 + $0x10] sm:$0xff]
  %v39 = vld [vmem:[%s1 + $0x18] sm:$0xff]
  %v40 = vld [vmem:[%s1 + $0x20] sm:$0xff]
  %v41 = vld [vmem:[%s1 + $0x28] sm:$0xff]
  %v42 = vld [vmem:[%s1 + $0x30] sm:$0xff]
  %v43 = vld [vmem:[%s1 + $0x38] sm:$0xff]
  %v44 = vpack.c.bf16 %v37, %v36
  %v45 = vpack.c.bf16 %v39, %v38
  %v46 = vpack.c.bf16 %v41, %v40
  %v47 = vpack.c.bf16 %v43, %v42
  %v48 = vld [vmem:[%s2] sm:$0xff]
  %v49 = vld [vmem:[%s2 + $0x8] sm:$0xff]
  %v50 = vld [vmem:[%s2 + $0x10] sm:$0xff]
  %v51 = vld [vmem:[%s2 + $0x18] sm:$0xff]
  %v52 = vld [vmem:[%s4] sm:$0x3]
  %v54 = vlaneseq
  %v55 = vshrl.u32 %v54, 7
  %v56 = vsub.s32 0, %v55
  %v57 = vrot.slane %v52, %v56
  %v58 = vlaneseq
  %v59 = vshrl.u32 %v58, 7
  %v60 = vsub.s32 1, %v59
  %v61 = vrot.slane %v52, %v60
  %v68 = vunpack.c.l.b16 %v48
  %v69 = vunpack.c.h.b16 %v48
  %v70 = vunpack.c.l.b16 %v49
  %v71 = vunpack.c.h.b16 %v49
  %v72 = vunpack.c.l.b16 %v50
  %v73 = vunpack.c.h.b16 %v50
  %v74 = vunpack.c.l.b16 %v51
  %v75 = vunpack.c.h.b16 %v51
  %v76 = vpack.c.b16 %v70, %v68
  %v77 = vpack.c.b16 %v71, %v69
  %v78 = vpack.c.b16 %v74, %v72
  %v79 = vpack.c.b16 %v75, %v73
  %vm84 = vcmask 261120
  %v86 = vsel %vm84, %v44, 0
  %v89 = vsel %vm84, %v45, 0
  %v92 = vsel %vm84, %v46, 0
  %v95 = vsel %vm84, %v47, 0
  %97 = vmatprep.subr.bf16.mxu0 0
  %98 = vmatpush1.bf16.msra.mxu0 0
  %99 = vmatprep.subr.bf16.mxu0 0
  %100 = vmatpush1.bf16.msra.mxu0 0
  %101 = vmatprep.subr.bf16.mxu0 0
  %102 = vmatpush1.bf16.msra.mxu0 0
  %103 = vmatprep.subr.bf16.mxu0 0
  %104 = vmatpush1.bf16.msra.mxu0 0
  %105 = vmatprep.subr.bf16.mxu0 0
  %106 = vmatpush1.bf16.msra.mxu0 0
  %107 = vmatprep.subr.bf16.mxu0 0
  %108 = vmatpush1.bf16.msra.mxu0 0
  %109 = vmatprep.subr.bf16.mxu0 %v79
  %110 = vmatpush1.bf16.msra.mxu0 %v78
  %111 = vmatprep.subr.bf16.mxu0 %v77
  %112 = vmatpush1.bf16.msra.mxu0 %v76
  %113 = vmatprep.subr.bf16.mxu0 0
  %114 = vmatpush2.bf16.msra.mxu0 0
  %115 = vmatprep.subr.bf16.mxu0 0
  %116 = vmatpush2.bf16.msra.mxu0 0
  %117 = vmatprep.subr.bf16.mxu0 0
  %118 = vmatpush2.bf16.msra.mxu0 0
  %119 = vmatprep.subr.bf16.mxu0 0
  %120 = vmatpush2.bf16.msra.mxu0 0
  %121 = vmatprep.subr.bf16.mxu0 0
  %122 = vmatpush2.bf16.msra.mxu0 0
  %123 = vmatprep.subr.bf16.mxu0 0
  %124 = vmatpush2.bf16.msra.mxu0 0
  %125 = vmatprep.subr.bf16.mxu0 0
  %126 = vmatpush2.bf16.msra.mxu0 0
  %127 = vmatprep.subr.bf16.mxu0 0
  %128 = vmatpush2.bf16.msra.mxu0 0
  %129 = vmatprep.mubr.bf16.mxu0 0
  %130 = vmatmul.mubr.bf16.gmra.mxu0 %v86
  %v131 = vpop.f32.mrf.mxu0
  %v132 = vadd.f32 %v57, %v131
  %v133 = vpop.f32.mrf.mxu0
  %v134 = vadd.f32 %v61, %v133
  %v135 = vpop.f32.mrf.mxu0
  %v136 = vadd.f32 %v57, %v135
  %v137 = vpop.f32.mrf.mxu0
  %v138 = vadd.f32 %v61, %v137
  %139 = vmatprep.mubr.bf16.mxu0 0
  %140 = vmatmul.mubr.bf16.gmra.mxu0 %v89
  %v141 = vpop.f32.mrf.mxu0
  %v142 = vadd.f32 %v57, %v141
  %v143 = vpop.f32.mrf.mxu0
  %v144 = vadd.f32 %v61, %v143
  %v145 = vpop.f32.mrf.mxu0
  %v146 = vadd.f32 %v57, %v145
  %v147 = vpop.f32.mrf.mxu0
  %v148 = vadd.f32 %v61, %v147
  %149 = vmatprep.mubr.bf16.mxu0 0
  %150 = vmatmul.mubr.bf16.gmra.mxu0 %v92
  %v151 = vpop.f32.mrf.mxu0
  %v152 = vadd.f32 %v57, %v151
  %v153 = vpop.f32.mrf.mxu0
  %v154 = vadd.f32 %v61, %v153
  %v155 = vpop.f32.mrf.mxu0
  %v156 = vadd.f32 %v57, %v155
  %v157 = vpop.f32.mrf.mxu0
  %v158 = vadd.f32 %v61, %v157
  %159 = vmatprep.mubr.bf16.mxu0 0
  %160 = vmatmul.mubr.bf16.gmra.mxu0 %v95
  %v161 = vpop.f32.mrf.mxu0
  %v162 = vadd.f32 %v57, %v161
  %v163 = vpop.f32.mrf.mxu0
  %v164 = vadd.f32 %v61, %v163
  %v165 = vpop.f32.mrf.mxu0
  %v166 = vadd.f32 %v57, %v165
  %v167 = vpop.f32.mrf.mxu0
  %v168 = vadd.f32 %v61, %v167
  %169 = vdwg.mxu0
  %170 = vst [vmem:[#allocation2] sm:$0xff] %v132
  %171 = vst [vmem:[#allocation2 + $0x8] sm:$0xff] %v134
  %172 = vst [vmem:[#allocation2 + $0x10] sm:$0xff] %v136
  %173 = vst [vmem:[#allocation2 + $0x18] sm:$0xff] %v138
  %174 = vst [vmem:[#allocation2 + $0x20] sm:$0xff] %v142
  %175 = vst [vmem:[#allocation2 + $0x28] sm:$0xff] %v144
  %176 = vst [vmem:[#allocation2 + $0x30] sm:$0xff] %v146
  %177 = vst [vmem:[#allocation2 + $0x38] sm:$0xff] %v148
  %178 = vst [vmem:[#allocation2 + $0x40] sm:$0xff] %v152
  %179 = vst [vmem:[#allocation2 + $0x48] sm:$0xff] %v154
  %180 = vst [vmem:[#allocation2 + $0x50] sm:$0xff] %v156
  %181 = vst [vmem:[#allocation2 + $0x58] sm:$0xff] %v158
  %182 = vst [vmem:[#allocation2 + $0x60] sm:$0xff] %v162
  %183 = vst [vmem:[#allocation2 + $0x68] sm:$0xff] %v164
  %184 = vst [vmem:[#allocation2 + $0x70] sm:$0xff] %v166
  %185 = vst [vmem:[#allocation2 + $0x78] sm:$0xff] %v168
  %vm186 = vcmask 523264
  %187 = vst.msk [vmem:[#allocation5] sm:$0xff] %vm186, 0.0
  %188 = vst.msk [vmem:[#allocation6] sm:$0xff] %vm84, 0.0
  %189 = vst.msk [vmem:[#allocation7] sm:$0xff] %vm84, 0.0
  %v190 = vld [vmem:[%s0] sm:$0xff]
  %vm191 = vcmp.gt.s32.totalorder %v190, 0
  %vm192 = vcmp.gt.s32.totalorder %v190, 7
  %v193 = vld [vmem:[#allocation5] sm:$0xff]
  %v194 = vpack.c.bf16 %v193, %v193
  %v195 = vld [vmem:[%s3] sm:$0xff]
  %v196 = vld [vmem:[%s3 + $0x8] sm:$0xff]
  %v197 = vld [vmem:[%s3 + $0x10] sm:$0xff]
  %v198 = vld [vmem:[%s3 + $0x18] sm:$0xff]
  %v199 = vld [vmem:[%s3 + $0x20] sm:$0xff]
  %v200 = vld [vmem:[%s3 + $0x28] sm:$0xff]
  %v201 = vld [vmem:[%s3 + $0x30] sm:$0xff]
  %v202 = vld [vmem:[%s3 + $0x38] sm:$0xff]
  %v211 = vunpack.c.l.b16 %v195
  %v212 = vunpack.c.h.b16 %v195
  %v213 = vunpack.c.l.b16 %v196
  %v214 = vunpack.c.h.b16 %v196
  %v215 = vunpack.c.l.b16 %v197
  %v216 = vunpack.c.h.b16 %v197
  %v217 = vunpack.c.l.b16 %v198
  %v218 = vunpack.c.h.b16 %v198
  %v219 = vunpack.c.l.b16 %v199
  %v220 = vunpack.c.h.b16 %v199
  %v221 = vunpack.c.l.b16 %v200
  %v222 = vunpack.c.h.b16 %v200
  %v223 = vunpack.c.l.b16 %v201
  %v224 = vunpack.c.h.b16 %v201
  %v225 = vunpack.c.l.b16 %v202
  %v226 = vunpack.c.h.b16 %v202
  %v227 = vpack.c.b16 %v213, %v211
  %v228 = vpack.c.b16 %v214, %v212
  %v229 = vpack.c.b16 %v217, %v215
  %v230 = vpack.c.b16 %v218, %v216
  %v231 = vpack.c.b16 %v221, %v219
  %v232 = vpack.c.b16 %v222, %v220
  %v233 = vpack.c.b16 %v225, %v223
  %v234 = vpack.c.b16 %v226, %v224
  %v244 = vsel %vm186, %v194, 0
  %246 = vmatprep.subr.bf16.mxu0 0
  %247 = vmatpush1.bf16.msra.mxu0 0
  %248 = vmatprep.subr.bf16.mxu0 0
  %249 = vmatpush1.bf16.msra.mxu0 0
  %250 = vmatprep.subr.bf16.mxu0 0
  %251 = vmatpush1.bf16.msra.mxu0 0
  %252 = vmatprep.subr.bf16.mxu0 0
  %253 = vmatpush1.bf16.msra.mxu0 0
  %254 = vmatprep.subr.bf16.mxu0 %v234
  %255 = vmatpush1.bf16.msra.mxu0 %v233
  %256 = vmatprep.subr.bf16.mxu0 %v232
  %257 = vmatpush1.bf16.msra.mxu0 %v231
  %258 = vmatprep.subr.bf16.mxu0 %v230
  %259 = vmatpush1.bf16.msra.mxu0 %v229
  %260 = vmatprep.subr.bf16.mxu0 %v228
  %261 = vmatpush1.bf16.msra.mxu0 %v227
  %262 = vmatprep.subr.bf16.mxu0 0
  %263 = vmatpush2.bf16.msra.mxu0 0
  %264 = vmatprep.subr.bf16.mxu0 0
  %265 = vmatpush2.bf16.msra.mxu0 0
  %266 = vmatprep.subr.bf16.mxu0 0
  %267 = vmatpush2.bf16.msra.mxu0 0
  %268 = vmatprep.subr.bf16.mxu0 0
  %269 = vmatpush2.bf16.msra.mxu0 0
  %270 = vmatprep.subr.bf16.mxu0 0
  %271 = vmatpush2.bf16.msra.mxu0 0
  %272 = vmatprep.subr.bf16.mxu0 0
  %273 = vmatpush2.bf16.msra.mxu0 0
  %274 = vmatprep.subr.bf16.mxu0 0
  %275 = vmatpush2.bf16.msra.mxu0 0
  %276 = vmatprep.subr.bf16.mxu0 0
  %277 = vmatpush2.bf16.msra.mxu0 0
  %278 = vmatprep.mubr.bf16.mxu0 0
  %279 = vmatmul.mubr.bf16.gmra.mxu0 %v244
  %v280 = vpop.f32.mrf.mxu0
  %v281 = vadd.f32 0.0, %v280
  %v282 = vpop.f32.mrf.mxu0
  %v283 = vadd.f32 0.0, %v282
  %v284 = vpop.f32.mrf.mxu0
  %v285 = vpop.f32.mrf.mxu0
  %286 = vdwg.mxu0
  %s287 = smul.u32 0, 2
  %s288 = smul.addr %s287, 8
  %s289 = scalar_lea.vmem [#allocation2], %s288
  %v290 = vld [vmem:[%s289] sm:$0xff]
  %v291 = vadd.f32 %v281, %v290
  %s292 = smul.u32 7, 2
  %s293 = smul.addr %s292, 8
  %s294 = scalar_lea.vmem [#allocation2], %s293
  %v295 = vld [vmem:[%s294 + $0x8] sm:$0xff]
  %v296 = vadd.f32 %v283, %v295
  %v297 = vld [vmem:[#allocation6] sm:$0xff]
  %v298 = vxor.u32 %v291, 2147483648
  %v299 = vmul.f32 %v298, 1.442695
  %v300 = vpow.pop %v299
  %v301 = vadd.f32 %v300, 1.0
  %v302 = vrcp.pop %v301
  %v303 = vmul.f32 1.0, %v302
  %v304 = vtanh.pop %v291
  %306 = vrot.lane.b32.xlu0 %v297, 32
  %v307 = vpop.permute.xlu0 %306
  %v309 = vmul.f32 %v303, %v307
  %311 = vrot.lane.b32.xlu0 %v304, 64
  %v312 = vpop.permute.xlu0 %311
  %v314 = vmul.f32 %v303, %v312
  %316 = vrot.lane.b32.xlu0 %v314, 32
  %v317 = vpop.permute.xlu0 %316
  %v319 = vadd.f32 %v309, %v317
  %v320 = vtanh.pop %v319
  %322 = vrot.lane.b32.xlu0 %v320, 64
  %v323 = vpop.permute.xlu0 %322
  %v325 = vmul.f32 %v303, %v323
  %v326 = vsel %vm191, 1, 0
  %327 = vset.pattern.permute.xlu0 0
  %328 = vperm.xlu0 %327, %v326
  %v329 = vpop.permute.xlu0 %328
  %vm330 = vcmp.eq.s32.totalorder %v329, 1
  %332 = vrot.lane.b32.xlu0 %v193, 96
  %v333 = vpop.permute.xlu0 %332
  %v335 = vsel %vm330, %v325, %v333
  %v336 = vsel %vm330, %v319, %v307
  %v337 = vld [vmem:[#allocation7] sm:$0xff]
  %v338 = vxor.u32 %v296, 2147483648
  %v339 = vmul.f32 %v338, 1.442695
  %v340 = vpow.pop %v339
  %v341 = vadd.f32 %v340, 1.0
  %v342 = vrcp.pop %v341
  %v343 = vmul.f32 1.0, %v342
  %v344 = vtanh.pop %v296
  %346 = vrot.lane.b32.xlu0 %v337, 32
  %v347 = vpop.permute.xlu0 %346
  %v349 = vmul.f32 %v343, %v347
  %351 = vrot.lane.b32.xlu0 %v344, 64
  %v352 = vpop.permute.xlu0 %351
  %v354 = vmul.f32 %v343, %v352
  %356 = vrot.lane.b32.xlu0 %v354, 32
  %v357 = vpop.permute.xlu0 %356
  %v359 = vadd.f32 %v349, %v357
  %v360 = vtanh.pop %v359
  %362 = vrot.lane.b32.xlu0 %v360, 64
  %v363 = vpop.permute.xlu0 %362
  %v365 = vmul.f32 %v343, %v363
  %v366 = vsel %vm192, 1, 0
  %367 = vset.pattern.permute.xlu0 0
  %368 = vperm.xlu0 %367, %v366
  %v369 = vpop.permute.xlu0 %368
  %vm370 = vcmp.eq.s32.totalorder %v369, 1
  %371 = vrot.lane.b32.xlu0 %v193, 64
  %v372 = vpop.permute.xlu0 %371
  %v374 = vsel %vm370, %v365, %v372
  %v375 = vsel %vm370, %v359, %v347
  %377 = vrot.lane.b32.xlu0 %v336, 96
  %v378 = vpop.permute.xlu0 %377
  %380 = vst.msk [vmem:[#allocation6] sm:$0xff] %vm84, %v378
  %382 = vrot.lane.b32.xlu0 %v375, 96
  %v383 = vpop.permute.xlu0 %382
  %385 = vst.msk [vmem:[#allocation7] sm:$0xff] %vm84, %v383
  %387 = vrot.lane.b32.xlu0 %v335, 32
  %v388 = vpop.permute.xlu0 %387
  %390 = vst.msk [vmem:[#allocation5] sm:$0xff] %vm84, %v388
  %392 = vrot.lane.b32.xlu0 %v374, 64
  %v393 = vpop.permute.xlu0 %392
  %vm395 = vcmask 523520
  %396 = vst.msk [vmem:[#allocation5] sm:$0xff] %vm395, %v393
  %v397 = vsel %vm330, %v325, 0.0
  %399 = vrot.lane.b32.xlu0 %v397, 32
  %v400 = vpop.permute.xlu0 %399
  %402 = vst.msk [vmem:[#allocation3] sm:$0xff] %vm84, %v400
  %v403 = vsel %vm370, %v365, 0.0
  %405 = vrot.lane.b32.xlu0 %v403, 64
  %v406 = vpop.permute.xlu0 %405
  %s408 = scalar_lea.vmem [#allocation3], 56
  %409 = vst.msk [vmem:[%s408] sm:$0xff] %vm395, %v406
  %v410 = vcvt.s32.f32 %v326
  %vm411 = vcmask 7168
  %412 = vst.msk [vmem:[#allocation4] sm:$0xff] %vm411, %v410
  %vm413 = vcmp.gt.s32.totalorder %v190, 1
  %vm414 = vcmp.gt.s32.totalorder %v190, 6
  %v415 = vld [vmem:[#allocation5] sm:$0xff]
  %v416 = vpack.c.bf16 %v415, %v415
  %v417 = vld [vmem:[%s3] sm:$0xff]
  %v418 = vld [vmem:[%s3 + $0x8] sm:$0xff]
  %v419 = vld [vmem:[%s3 + $0x10] sm:$0xff]
  %v420 = vld [vmem:[%s3 + $0x18] sm:$0xff]
  %v421 = vld [vmem:[%s3 + $0x20] sm:$0xff]
  %v422 = vld [vmem:[%s3 + $0x28] sm:$0xff]
  %v423 = vld [vmem:[%s3 + $0x30] sm:$0xff]
  %v424 = vld [vmem:[%s3 + $0x38] sm:$0xff]
  %v433 = vunpack.c.l.b16 %v417
  %v434 = vunpack.c.h.b16 %v417
  %v435 = vunpack.c.l.b16 %v418
  %v436 = vunpack.c.h.b16 %v418
  %v437 = vunpack.c.l.b16 %v419
  %v438 = vunpack.c.h.b16 %v419
  %v439 = vunpack.c.l.b16 %v420
  %v440 = vunpack.c.h.b16 %v420
  %v441 = vunpack.c.l.b16 %v421
  %v442 = vunpack.c.h.b16 %v421
  %v443 = vunpack.c.l.b16 %v422
  %v444 = vunpack.c.h.b16 %v422
  %v445 = vunpack.c.l.b16 %v423
  %v446 = vunpack.c.h.b16 %v423
  %v447 = vunpack.c.l.b16 %v424
  %v448 = vunpack.c.h.b16 %v424
  %v449 = vpack.c.b16 %v435, %v433
  %v450 = vpack.c.b16 %v436, %v434
  %v451 = vpack.c.b16 %v439, %v437
  %v452 = vpack.c.b16 %v440, %v438
  %v453 = vpack.c.b16 %v443, %v441
  %v454 = vpack.c.b16 %v444, %v442
  %v455 = vpack.c.b16 %v447, %v445
  %v456 = vpack.c.b16 %v448, %v446
  %v466 = vsel %vm186, %v416, 0
  %468 = vmatprep.subr.bf16.mxu0 0
  %469 = vmatpush1.bf16.msra.mxu0 0
  %470 = vmatprep.subr.bf16.mxu0 0
  %471 = vmatpush1.bf16.msra.mxu0 0
  %472 = vmatprep.subr.bf16.mxu0 0
  %473 = vmatpush1.bf16.msra.mxu0 0
  %474 = vmatprep.subr.bf16.mxu0 0
  %475 = vmatpush1.bf16.msra.mxu0 0
  %476 = vmatprep.subr.bf16.mxu0 %v456
  %477 = vmatpush1.bf16.msra.mxu0 %v455
  %478 = vmatprep.subr.bf16.mxu0 %v454
  %479 = vmatpush1.bf16.msra.mxu0 %v453
  %480 = vmatprep.subr.bf16.mxu0 %v452
  %481 = vmatpush1.bf16.msra.mxu0 %v451
  %482 = vmatprep.subr.bf16.mxu0 %v450
  %483 = vmatpush1.bf16.msra.mxu0 %v449
  %484 = vmatprep.subr.bf16.mxu0 0
  %485 = vmatpush2.bf16.msra.mxu0 0
  %486 = vmatprep.subr.bf16.mxu0 0
  %487 = vmatpush2.bf16.msra.mxu0 0
  %488 = vmatprep.subr.bf16.mxu0 0
  %489 = vmatpush2.bf16.msra.mxu0 0
  %490 = vmatprep.subr.bf16.mxu0 0
  %491 = vmatpush2.bf16.msra.mxu0 0
  %492 = vmatprep.subr.bf16.mxu0 0
  %493 = vmatpush2.bf16.msra.mxu0 0
  %494 = vmatprep.subr.bf16.mxu0 0
  %495 = vmatpush2.bf16.msra.mxu0 0
  %496 = vmatprep.subr.bf16.mxu0 0
  %497 = vmatpush2.bf16.msra.mxu0 0
  %498 = vmatprep.subr.bf16.mxu0 0
  %499 = vmatpush2.bf16.msra.mxu0 0
  %500 = vmatprep.mubr.bf16.mxu0 0
  %501 = vmatmul.mubr.bf16.gmra.mxu0 %v466
  %v502 = vpop.f32.mrf.mxu0
  %v503 = vadd.f32 0.0, %v502
  %v504 = vpop.f32.mrf.mxu0
  %v505 = vadd.f32 0.0, %v504
  %v506 = vpop.f32.mrf.mxu0
  %v507 = vpop.f32.mrf.mxu0
  %508 = vdwg.mxu0
  %s509 = smul.u32 1, 2
  %s510 = smul.addr %s509, 8
  %s511 = scalar_lea.vmem [#allocation2], %s510
  %v512 = vld [vmem:[%s511] sm:$0xff]
  %v513 = vadd.f32 %v503, %v512
  %s514 = smul.u32 6, 2
  %s515 = smul.addr %s514, 8
  %s516 = scalar_lea.vmem [#allocation2], %s515
  %v517 = vld [vmem:[%s516 + $0x8] sm:$0xff]
  %v518 = vadd.f32 %v505, %v517
  %v519 = vld [vmem:[#allocation6] sm:$0xff]
  %v520 = vxor.u32 %v513, 2147483648
  %v521 = vmul.f32 %v520, 1.442695
  %v522 = vpow.pop %v521
  %v523 = vadd.f32 %v522, 1.0
  %v524 = vrcp.pop %v523
  %v525 = vmul.f32 1.0, %v524
  %v526 = vtanh.pop %v513
  %528 = vrot.lane.b32.xlu0 %v519, 32
  %v529 = vpop.permute.xlu0 %528
  %v531 = vmul.f32 %v525, %v529
  %533 = vrot.lane.b32.xlu0 %v526, 64
  %v534 = vpop.permute.xlu0 %533
  %v536 = vmul.f32 %v525, %v534
  %538 = vrot.lane.b32.xlu0 %v536, 32
  %v539 = vpop.permute.xlu0 %538
  %v541 = vadd.f32 %v531, %v539
  %v542 = vtanh.pop %v541
  %544 = vrot.lane.b32.xlu0 %v542, 64
  %v545 = vpop.permute.xlu0 %544
  %v547 = vmul.f32 %v525, %v545
  %v548 = vsel %vm413, 1, 0
  %549 = vset.pattern.permute.xlu0 0
  %550 = vperm.xlu0 %549, %v548
  %v551 = vpop.permute.xlu0 %550
  %vm552 = vcmp.eq.s32.totalorder %v551, 1
  %554 = vrot.lane.b32.xlu0 %v415, 96
  %v555 = vpop.permute.xlu0 %554
  %v557 = vsel %vm552, %v547, %v555
  %v558 = vsel %vm552, %v541, %v529
  %v559 = vld [vmem:[#allocation7] sm:$0xff]
  %v560 = vxor.u32 %v518, 2147483648
  %v561 = vmul.f32 %v560, 1.442695
  %v562 = vpow.pop %v561
  %v563 = vadd.f32 %v562, 1.0
  %v564 = vrcp.pop %v563
  %v565 = vmul.f32 1.0, %v564
  %v566 = vtanh.pop %v518
  %568 = vrot.lane.b32.xlu0 %v559, 32
  %v569 = vpop.permute.xlu0 %568
  %v571 = vmul.f32 %v565, %v569
  %573 = vrot.lane.b32.xlu0 %v566, 64
  %v574 = vpop.permute.xlu0 %573
  %v576 = vmul.f32 %v565, %v574
  %578 = vrot.lane.b32.xlu0 %v576, 32
  %v579 = vpop.permute.xlu0 %578
  %v581 = vadd.f32 %v571, %v579
  %v582 = vtanh.pop %v581
  %584 = vrot.lane.b32.xlu0 %v582, 64
  %v585 = vpop.permute.xlu0 %584
  %v587 = vmul.f32 %v565, %v585
  %v588 = vsel %vm414, 1, 0
  %589 = vset.pattern.permute.xlu0 0
  %590 = vperm.xlu0 %589, %v588
  %v591 = vpop.permute.xlu0 %590
  %vm592 = vcmp.eq.s32.totalorder %v591, 1
  %593 = vrot.lane.b32.xlu0 %v415, 64
  %v594 = vpop.permute.xlu0 %593
  %v596 = vsel %vm592, %v587, %v594
  %v597 = vsel %vm592, %v581, %v569
  %599 = vrot.lane.b32.xlu0 %v558, 96
  %v600 = vpop.permute.xlu0 %599
  %602 = vst.msk [vmem:[#allocation6] sm:$0xff] %vm84, %v600
  %604 = vrot.lane.b32.xlu0 %v597, 96
  %v605 = vpop.permute.xlu0 %604
  %607 = vst.msk [vmem:[#allocation7] sm:$0xff] %vm84, %v605
  %609 = vrot.lane.b32.xlu0 %v557, 32
  %v610 = vpop.permute.xlu0 %609
  %612 = vst.msk [vmem:[#allocation5] sm:$0xff] %vm84, %v610
  %614 = vrot.lane.b32.xlu0 %v596, 64
  %v615 = vpop.permute.xlu0 %614
  %617 = vst.msk [vmem:[#allocation5] sm:$0xff] %vm395, %v615
  %v618 = vsel %vm552, %v547, 0.0
  %620 = vrot.lane.b32.xlu0 %v618, 32
  %v621 = vpop.permute.xlu0 %620
  %s623 = scalar_lea.vmem [#allocation3], 8
  %624 = vst.msk [vmem:[%s623] sm:$0xff] %vm84, %v621
  %v625 = vsel %vm592, %v587, 0.0
  %627 = vrot.lane.b32.xlu0 %v625, 64
  %v628 = vpop.permute.xlu0 %627
  %s630 = scalar_lea.vmem [#allocation3], 48
  %631 = vst.msk [vmem:[%s630] sm:$0xff] %vm395, %v628
  %v632 = vcvt.s32.f32 %v548
  %s633 = scalar_lea.vmem [#allocation4], 8
  %634 = vst.msk [vmem:[%s633] sm:$0xff] %vm411, %v632
  %vm635 = vcmp.gt.s32.totalorder %v190, 2
  %vm636 = vcmp.gt.s32.totalorder %v190, 5
  %v637 = vld [vmem:[#allocation5] sm:$0xff]
  %v638 = vpack.c.bf16 %v637, %v637
  %v639 = vld [vmem:[%s3] sm:$0xff]
  %v640 = vld [vmem:[%s3 + $0x8] sm:$0xff]
  %v641 = vld [vmem:[%s3 + $0x10] sm:$0xff]
  %v642 = vld [vmem:[%s3 + $0x18] sm:$0xff]
  %v643 = vld [vmem:[%s3 + $0x20] sm:$0xff]
  %v644 = vld [vmem:[%s3 + $0x28] sm:$0xff]
  %v645 = vld [vmem:[%s3 + $0x30] sm:$0xff]
  %v646 = vld [vmem:[%s3 + $0x38] sm:$0xff]
  %v655 = vunpack.c.l.b16 %v639
  %v656 = vunpack.c.h.b16 %v639
  %v657 = vunpack.c.l.b16 %v640
  %v658 = vunpack.c.h.b16 %v640
  %v659 = vunpack.c.l.b16 %v641
  %v660 = vunpack.c.h.b16 %v641
  %v661 = vunpack.c.l.b16 %v642
  %v662 = vunpack.c.h.b16 %v642
  %v663 = vunpack.c.l.b16 %v643
  %v664 = vunpack.c.h.b16 %v643
  %v665 = vunpack.c.l.b16 %v644
  %v666 = vunpack.c.h.b16 %v644
  %v667 = vunpack.c.l.b16 %v645
  %v668 = vunpack.c.h.b16 %v645
  %v669 = vunpack.c.l.b16 %v646
  %v670 = vunpack.c.h.b16 %v646
  %v671 = vpack.c.b16 %v657, %v655
  %v672 = vpack.c.b16 %v658, %v656
  %v673 = vpack.c.b16 %v661, %v659
  %v674 = vpack.c.b16 %v662, %v660
  %v675 = vpack.c.b16 %v665, %v663
  %v676 = vpack.c.b16 %v666, %v664
  %v677 = vpack.c.b16 %v669, %v667
  %v678 = vpack.c.b16 %v670, %v668
  %v688 = vsel %vm186, %v638, 0
  %690 = vmatprep.subr.bf16.mxu0 0
  %691 = vmatpush1.bf16.msra.mxu0 0
  %692 = vmatprep.subr.bf16.mxu0 0
  %693 = vmatpush1.bf16.msra.mxu0 0
  %694 = vmatprep.subr.bf16.mxu0 0
  %695 = vmatpush1.bf16.msra.mxu0 0
  %696 = vmatprep.subr.bf16.mxu0 0
  %697 = vmatpush1.bf16.msra.mxu0 0
  %698 = vmatprep.subr.bf16.mxu0 %v678
  %699 = vmatpush1.bf16.msra.mxu0 %v677
  %700 = vmatprep.subr.bf16.mxu0 %v676
  %701 = vmatpush1.bf16.msra.mxu0 %v675
  %702 = vmatprep.subr.bf16.mxu0 %v674
  %703 = vmatpush1.bf16.msra.mxu0 %v673
  %704 = vmatprep.subr.bf16.mxu0 %v672
  %705 = vmatpush1.bf16.msra.mxu0 %v671
  %706 = vmatprep.subr.bf16.mxu0 0
  %707 = vmatpush2.bf16.msra.mxu0 0
  %708 = vmatprep.subr.bf16.mxu0 0
  %709 = vmatpush2.bf16.msra.mxu0 0
  %710 = vmatprep.subr.bf16.mxu0 0
  %711 = vmatpush2.bf16.msra.mxu0 0
  %712 = vmatprep.subr.bf16.mxu0 0
  %713 = vmatpush2.bf16.msra.mxu0 0
  %714 = vmatprep.subr.bf16.mxu0 0
  %715 = vmatpush2.bf16.msra.mxu0 0
  %716 = vmatprep.subr.bf16.mxu0 0
  %717 = vmatpush2.bf16.msra.mxu0 0
  %718 = vmatprep.subr.bf16.mxu0 0
  %719 = vmatpush2.bf16.msra.mxu0 0
  %720 = vmatprep.subr.bf16.mxu0 0
  %721 = vmatpush2.bf16.msra.mxu0 0
  %722 = vmatprep.mubr.bf16.mxu0 0
  %723 = vmatmul.mubr.bf16.gmra.mxu0 %v688
  %v724 = vpop.f32.mrf.mxu0
  %v725 = vadd.f32 0.0, %v724
  %v726 = vpop.f32.mrf.mxu0
  %v727 = vadd.f32 0.0, %v726
  %v728 = vpop.f32.mrf.mxu0
  %v729 = vpop.f32.mrf.mxu0
  %730 = vdwg.mxu0
  %s731 = smul.u32 2, 2
  %s732 = smul.addr %s731, 8
  %s733 = scalar_lea.vmem [#allocation2], %s732
  %v734 = vld [vmem:[%s733] sm:$0xff]
  %v735 = vadd.f32 %v725, %v734
  %s736 = smul.u32 5, 2
  %s737 = smul.addr %s736, 8
  %s738 = scalar_lea.vmem [#allocation2], %s737
  %v739 = vld [vmem:[%s738 + $0x8] sm:$0xff]
  %v740 = vadd.f32 %v727, %v739
  %v741 = vld [vmem:[#allocation6] sm:$0xff]
  %v742 = vxor.u32 %v735, 2147483648
  %v743 = vmul.f32 %v742, 1.442695
  %v744 = vpow.pop %v743
  %v745 = vadd.f32 %v744, 1.0
  %v746 = vrcp.pop %v745
  %v747 = vmul.f32 1.0, %v746
  %v748 = vtanh.pop %v735
  %750 = vrot.lane.b32.xlu0 %v741, 32
  %v751 = vpop.permute.xlu0 %750
  %v753 = vmul.f32 %v747, %v751
  %755 = vrot.lane.b32.xlu0 %v748, 64
  %v756 = vpop.permute.xlu0 %755
  %v758 = vmul.f32 %v747, %v756
  %760 = vrot.lane.b32.xlu0 %v758, 32
  %v761 = vpop.permute.xlu0 %760
  %v763 = vadd.f32 %v753, %v761
  %v764 = vtanh.pop %v763
  %766 = vrot.lane.b32.xlu0 %v764, 64
  %v767 = vpop.permute.xlu0 %766
  %v769 = vmul.f32 %v747, %v767
  %v770 = vsel %vm635, 1, 0
  %771 = vset.pattern.permute.xlu0 0
  %772 = vperm.xlu0 %771, %v770
  %v773 = vpop.permute.xlu0 %772
  %vm774 = vcmp.eq.s32.totalorder %v773, 1
  %776 = vrot.lane.b32.xlu0 %v637, 96
  %v777 = vpop.permute.xlu0 %776
  %v779 = vsel %vm774, %v769, %v777
  %v780 = vsel %vm774, %v763, %v751
  %v781 = vld [vmem:[#allocation7] sm:$0xff]
  %v782 = vxor.u32 %v740, 2147483648
  %v783 = vmul.f32 %v782, 1.442695
  %v784 = vpow.pop %v783
  %v785 = vadd.f32 %v784, 1.0
  %v786 = vrcp.pop %v785
  %v787 = vmul.f32 1.0, %v786
  %v788 = vtanh.pop %v740
  %790 = vrot.lane.b32.xlu0 %v781, 32
  %v791 = vpop.permute.xlu0 %790
  %v793 = vmul.f32 %v787, %v791
  %795 = vrot.lane.b32.xlu0 %v788, 64
  %v796 = vpop.permute.xlu0 %795
  %v798 = vmul.f32 %v787, %v796
  %800 = vrot.lane.b32.xlu0 %v798, 32
  %v801 = vpop.permute.xlu0 %800
  %v803 = vadd.f32 %v793, %v801
  %v804 = vtanh.pop %v803
  %806 = vrot.lane.b32.xlu0 %v804, 64
  %v807 = vpop.permute.xlu0 %806
  %v809 = vmul.f32 %v787, %v807
  %v810 = vsel %vm636, 1, 0
  %811 = vset.pattern.permute.xlu0 0
  %812 = vperm.xlu0 %811, %v810
  %v813 = vpop.permute.xlu0 %812
  %vm814 = vcmp.eq.s32.totalorder %v813, 1
  %815 = vrot.lane.b32.xlu0 %v637, 64
  %v816 = vpop.permute.xlu0 %815
  %v818 = vsel %vm814, %v809, %v816
  %v819 = vsel %vm814, %v803, %v791
  %821 = vrot.lane.b32.xlu0 %v780, 96
  %v822 = vpop.permute.xlu0 %821
  %824 = vst.msk [vmem:[#allocation6] sm:$0xff] %vm84, %v822
  %826 = vrot.lane.b32.xlu0 %v819, 96
  %v827 = vpop.permute.xlu0 %826
  %829 = vst.msk [vmem:[#allocation7] sm:$0xff] %vm84, %v827
  %831 = vrot.lane.b32.xlu0 %v779, 32
  %v832 = vpop.permute.xlu0 %831
  %834 = vst.msk [vmem:[#allocation5] sm:$0xff] %vm84, %v832
  %836 = vrot.lane.b32.xlu0 %v818, 64
  %v837 = vpop.permute.xlu0 %836
  %839 = vst.msk [vmem:[#allocation5] sm:$0xff] %vm395, %v837
  %v840 = vsel %vm774, %v769, 0.0
  %842 = vrot.lane.b32.xlu0 %v840, 32
  %v843 = vpop.permute.xlu0 %842
  %s845 = scalar_lea.vmem [#allocation3], 16
  %846 = vst.msk [vmem:[%s845] sm:$0xff] %vm84, %v843
  %v847 = vsel %vm814, %v809, 0.0
  %849 = vrot.lane.b32.xlu0 %v847, 64
  %v850 = vpop.permute.xlu0 %849
  %s852 = scalar_lea.vmem [#allocation3], 40
  %853 = vst.msk [vmem:[%s852] sm:$0xff] %vm395, %v850
  %v854 = vcvt.s32.f32 %v770
  %s855 = scalar_lea.vmem [#allocation4], 16
  %856 = vst.msk [vmem:[%s855] sm:$0xff] %vm411, %v854
  %vm857 = vcmp.gt.s32.totalorder %v190, 3
  %vm858 = vcmp.gt.s32.totalorder %v190, 4
  %v859 = vld [vmem:[#allocation5] sm:$0xff]
  %v860 = vpack.c.bf16 %v859, %v859
  %v861 = vld [vmem:[%s3] sm:$0xff]
  %v862 = vld [vmem:[%s3 + $0x8] sm:$0xff]
  %v863 = vld [vmem:[%s3 + $0x10] sm:$0xff]
  %v864 = vld [vmem:[%s3 + $0x18] sm:$0xff]
  %v865 = vld [vmem:[%s3 + $0x20] sm:$0xff]
  %v866 = vld [vmem:[%s3 + $0x28] sm:$0xff]
  %v867 = vld [vmem:[%s3 + $0x30] sm:$0xff]
  %v868 = vld [vmem:[%s3 + $0x38] sm:$0xff]
  %v877 = vunpack.c.l.b16 %v861
  %v878 = vunpack.c.h.b16 %v861
  %v879 = vunpack.c.l.b16 %v862
  %v880 = vunpack.c.h.b16 %v862
  %v881 = vunpack.c.l.b16 %v863
  %v882 = vunpack.c.h.b16 %v863
  %v883 = vunpack.c.l.b16 %v864
  %v884 = vunpack.c.h.b16 %v864
  %v885 = vunpack.c.l.b16 %v865
  %v886 = vunpack.c.h.b16 %v865
  %v887 = vunpack.c.l.b16 %v866
  %v888 = vunpack.c.h.b16 %v866
  %v889 = vunpack.c.l.b16 %v867
  %v890 = vunpack.c.h.b16 %v867
  %v891 = vunpack.c.l.b16 %v868
  %v892 = vunpack.c.h.b16 %v868
  %v893 = vpack.c.b16 %v879, %v877
  %v894 = vpack.c.b16 %v880, %v878
  %v895 = vpack.c.b16 %v883, %v881
  %v896 = vpack.c.b16 %v884, %v882
  %v897 = vpack.c.b16 %v887, %v885
  %v898 = vpack.c.b16 %v888, %v886
  %v899 = vpack.c.b16 %v891, %v889
  %v900 = vpack.c.b16 %v892, %v890
  %v910 = vsel %vm186, %v860, 0
  %912 = vmatprep.subr.bf16.mxu0 0
  %913 = vmatpush1.bf16.msra.mxu0 0
  %914 = vmatprep.subr.bf16.mxu0 0
  %915 = vmatpush1.bf16.msra.mxu0 0
  %916 = vmatprep.subr.bf16.mxu0 0
  %917 = vmatpush1.bf16.msra.mxu0 0
  %918 = vmatprep.subr.bf16.mxu0 0
  %919 = vmatpush1.bf16.msra.mxu0 0
  %920 = vmatprep.subr.bf16.mxu0 %v900
  %921 = vmatpush1.bf16.msra.mxu0 %v899
  %922 = vmatprep.subr.bf16.mxu0 %v898
  %923 = vmatpush1.bf16.msra.mxu0 %v897
  %924 = vmatprep.subr.bf16.mxu0 %v896
  %925 = vmatpush1.bf16.msra.mxu0 %v895
  %926 = vmatprep.subr.bf16.mxu0 %v894
  %927 = vmatpush1.bf16.msra.mxu0 %v893
  %928 = vmatprep.subr.bf16.mxu0 0
  %929 = vmatpush2.bf16.msra.mxu0 0
  %930 = vmatprep.subr.bf16.mxu0 0
  %931 = vmatpush2.bf16.msra.mxu0 0
  %932 = vmatprep.subr.bf16.mxu0 0
  %933 = vmatpush2.bf16.msra.mxu0 0
  %934 = vmatprep.subr.bf16.mxu0 0
  %935 = vmatpush2.bf16.msra.mxu0 0
  %936 = vmatprep.subr.bf16.mxu0 0
  %937 = vmatpush2.bf16.msra.mxu0 0
  %938 = vmatprep.subr.bf16.mxu0 0
  %939 = vmatpush2.bf16.msra.mxu0 0
  %940 = vmatprep.subr.bf16.mxu0 0
  %941 = vmatpush2.bf16.msra.mxu0 0
  %942 = vmatprep.subr.bf16.mxu0 0
  %943 = vmatpush2.bf16.msra.mxu0 0
  %944 = vmatprep.mubr.bf16.mxu0 0
  %945 = vmatmul.mubr.bf16.gmra.mxu0 %v910
  %v946 = vpop.f32.mrf.mxu0
  %v947 = vadd.f32 0.0, %v946
  %v948 = vpop.f32.mrf.mxu0
  %v949 = vadd.f32 0.0, %v948
  %v950 = vpop.f32.mrf.mxu0
  %v951 = vpop.f32.mrf.mxu0
  %952 = vdwg.mxu0
  %s953 = smul.u32 3, 2
  %s954 = smul.addr %s953, 8
  %s955 = scalar_lea.vmem [#allocation2], %s954
  %v956 = vld [vmem:[%s955] sm:$0xff]
  %v957 = vadd.f32 %v947, %v956
  %s958 = smul.u32 4, 2
  %s959 = smul.addr %s958, 8
  %s960 = scalar_lea.vmem [#allocation2], %s959
  %v961 = vld [vmem:[%s960 + $0x8] sm:$0xff]
  %v962 = vadd.f32 %v949, %v961
  %v963 = vld [vmem:[#allocation6] sm:$0xff]
  %v964 = vxor.u32 %v957, 2147483648
  %v965 = vmul.f32 %v964, 1.442695
  %v966 = vpow.pop %v965
  %v967 = vadd.f32 %v966, 1.0
  %v968 = vrcp.pop %v967
  %v969 = vmul.f32 1.0, %v968
  %v970 = vtanh.pop %v957
  %972 = vrot.lane.b32.xlu0 %v963, 32
  %v973 = vpop.permute.xlu0 %972
  %v975 = vmul.f32 %v969, %v973
  %977 = vrot.lane.b32.xlu0 %v970, 64
  %v978 = vpop.permute.xlu0 %977
  %v980 = vmul.f32 %v969, %v978
  %982 = vrot.lane.b32.xlu0 %v980, 32
  %v983 = vpop.permute.xlu0 %982
  %v985 = vadd.f32 %v975, %v983
  %v986 = vtanh.pop %v985
  %988 = vrot.lane.b32.xlu0 %v986, 64
  %v989 = vpop.permute.xlu0 %988
  %v991 = vmul.f32 %v969, %v989
  %v992 = vsel %vm857, 1, 0
  %993 = vset.pattern.permute.xlu0 0
  %994 = vperm.xlu0 %993, %v992
  %v995 = vpop.permute.xlu0 %994
  %vm996 = vcmp.eq.s32.totalorder %v995, 1
  %998 = vrot.lane.b32.xlu0 %v859, 96
  %v999 = vpop.permute.xlu0 %998
  %v1001 = vsel %vm996, %v991, %v999
  %v1002 = vsel %vm996, %v985, %v973
  %v1003 = vld [vmem:[#allocation7] sm:$0xff]
  %v1004 = vxor.u32 %v962, 2147483648
  %v1005 = vmul.f32 %v1004, 1.442695
  %v1006 = vpow.pop %v1005
  %v1007 = vadd.f32 %v1006, 1.0
  %v1008 = vrcp.pop %v1007
  %v1009 = vmul.f32 1.0, %v1008
  %v1010 = vtanh.pop %v962
  %1012 = vrot.lane.b32.xlu0 %v1003, 32
  %v1013 = vpop.permute.xlu0 %1012
  %v1015 = vmul.f32 %v1009, %v1013
  %1017 = vrot.lane.b32.xlu0 %v1010, 64
  %v1018 = vpop.permute.xlu0 %1017
  %v1020 = vmul.f32 %v1009, %v1018
  %1022 = vrot.lane.b32.xlu0 %v1020, 32
  %v1023 = vpop.permute.xlu0 %1022
  %v1025 = vadd.f32 %v1015, %v1023
  %v1026 = vtanh.pop %v1025
  %1028 = vrot.lane.b32.xlu0 %v1026, 64
  %v1029 = vpop.permute.xlu0 %1028
  %v1031 = vmul.f32 %v1009, %v1029
  %v1032 = vsel %vm858, 1, 0
  %1033 = vset.pattern.permute.xlu0 0
  %1034 = vperm.xlu0 %1033, %v1032
  %v1035 = vpop.permute.xlu0 %1034
  %vm1036 = vcmp.eq.s32.totalorder %v1035, 1
  %1037 = vrot.lane.b32.xlu0 %v859, 64
  %v1038 = vpop.permute.xlu0 %1037
  %v1040 = vsel %vm1036, %v1031, %v1038
  %v1041 = vsel %vm1036, %v1025, %v1013
  %1043 = vrot.lane.b32.xlu0 %v1002, 96
  %v1044 = vpop.permute.xlu0 %1043
  %1046 = vst.msk [vmem:[#allocation6] sm:$0xff] %vm84, %v1044
  %1048 = vrot.lane.b32.xlu0 %v1041, 96
  %v1049 = vpop.permute.xlu0 %1048
  %1051 = vst.msk [vmem:[#allocation7] sm:$0xff] %vm84, %v1049
  %1053 = vrot.lane.b32.xlu0 %v1001, 32
  %v1054 = vpop.permute.xlu0 %1053
  %1056 = vst.msk [vmem:[#allocation5] sm:$0xff] %vm84, %v1054
  %1058 = vrot.lane.b32.xlu0 %v1040, 64
  %v1059 = vpop.permute.xlu0 %1058
  %1061 = vst.msk [vmem:[#allocation5] sm:$0xff] %vm395, %v1059
  %v1062 = vsel %vm996, %v991, 0.0
  %1064 = vrot.lane.b32.xlu0 %v1062, 32
  %v1065 = vpop.permute.xlu0 %1064
  %s1067 = scalar_lea.vmem [#allocation3], 24
  %1068 = vst.msk [vmem:[%s1067] sm:$0xff] %vm84, %v1065
  %v1069 = vsel %vm1036, %v1031, 0.0
  %1071 = vrot.lane.b32.xlu0 %v1069, 64
  %v1072 = vpop.permute.xlu0 %1071
  %s1074 = scalar_lea.vmem [#allocation3], 32
  %1075 = vst.msk [vmem:[%s1074] sm:$0xff] %vm395, %v1072
  %v1076 = vcvt.s32.f32 %v992
  %s1077 = scalar_lea.vmem [#allocation4], 24
  %1078 = vst.msk [vmem:[%s1077] sm:$0xff] %vm411, %v1076
  %v1079 = vld [vmem:[#allocation5] sm:$0xff]
  %v1080 = vpack.c.bf16 %v1079, %v1079
  %v1081 = vld [vmem:[%s3] sm:$0xff]
  %v1082 = vld [vmem:[%s3 + $0x8] sm:$0xff]
  %v1083 = vld [vmem:[%s3 + $0x10] sm:$0xff]
  %v1084 = vld [vmem:[%s3 + $0x18] sm:$0xff]
  %v1085 = vld [vmem:[%s3 + $0x20] sm:$0xff]
  %v1086 = vld [vmem:[%s3 + $0x28] sm:$0xff]
  %v1087 = vld [vmem:[%s3 + $0x30] sm:$0xff]
  %v1088 = vld [vmem:[%s3 + $0x38] sm:$0xff]
  %v1097 = vunpack.c.l.b16 %v1081
  %v1098 = vunpack.c.h.b16 %v1081
  %v1099 = vunpack.c.l.b16 %v1082
  %v1100 = vunpack.c.h.b16 %v1082
  %v1101 = vunpack.c.l.b16 %v1083
  %v1102 = vunpack.c.h.b16 %v1083
  %v1103 = vunpack.c.l.b16 %v1084
  %v1104 = vunpack.c.h.b16 %v1084
  %v1105 = vunpack.c.l.b16 %v1085
  %v1106 = vunpack.c.h.b16 %v1085
  %v1107 = vunpack.c.l.b16 %v1086
  %v1108 = vunpack.c.h.b16 %v1086
  %v1109 = vunpack.c.l.b16 %v1087
  %v1110 = vunpack.c.h.b16 %v1087
  %v1111 = vunpack.c.l.b16 %v1088
  %v1112 = vunpack.c.h.b16 %v1088
  %v1113 = vpack.c.b16 %v1099, %v1097
  %v1114 = vpack.c.b16 %v1100, %v1098
  %v1115 = vpack.c.b16 %v1103, %v1101
  %v1116 = vpack.c.b16 %v1104, %v1102
  %v1117 = vpack.c.b16 %v1107, %v1105
  %v1118 = vpack.c.b16 %v1108, %v1106
  %v1119 = vpack.c.b16 %v1111, %v1109
  %v1120 = vpack.c.b16 %v1112, %v1110
  %v1130 = vsel %vm186, %v1080, 0
  %1132 = vmatprep.subr.bf16.mxu0 0
  %1133 = vmatpush1.bf16.msra.mxu0 0
  %1134 = vmatprep.subr.bf16.mxu0 0
  %1135 = vmatpush1.bf16.msra.mxu0 0
  %1136 = vmatprep.subr.bf16.mxu0 0
  %1137 = vmatpush1.bf16.msra.mxu0 0
  %1138 = vmatprep.subr.bf16.mxu0 0
  %1139 = vmatpush1.bf16.msra.mxu0 0
  %1140 = vmatprep.subr.bf16.mxu0 %v1120
  %1141 = vmatpush1.bf16.msra.mxu0 %v1119
  %1142 = vmatprep.subr.bf16.mxu0 %v1118
  %1143 = vmatpush1.bf16.msra.mxu0 %v1117
  %1144 = vmatprep.subr.bf16.mxu0 %v1116
  %1145 = vmatpush1.bf16.msra.mxu0 %v1115
  %1146 = vmatprep.subr.bf16.mxu0 %v1114
  %1147 = vmatpush1.bf16.msra.mxu0 %v1113
  %1148 = vmatprep.subr.bf16.mxu0 0
  %1149 = vmatpush2.bf16.msra.mxu0 0
  %1150 = vmatprep.subr.bf16.mxu0 0
  %1151 = vmatpush2.bf16.msra.mxu0 0
  %1152 = vmatprep.subr.bf16.mxu0 0
  %1153 = vmatpush2.bf16.msra.mxu0 0
  %1154 = vmatprep.subr.bf16.mxu0 0
  %1155 = vmatpush2.bf16.msra.mxu0 0
  %1156 = vmatprep.subr.bf16.mxu0 0
  %1157 = vmatpush2.bf16.msra.mxu0 0
  %1158 = vmatprep.subr.bf16.mxu0 0
  %1159 = vmatpush2.bf16.msra.mxu0 0
  %1160 = vmatprep.subr.bf16.mxu0 0
  %1161 = vmatpush2.bf16.msra.mxu0 0
  %1162 = vmatprep.subr.bf16.mxu0 0
  %1163 = vmatpush2.bf16.msra.mxu0 0
  %1164 = vmatprep.mubr.bf16.mxu0 0
  %1165 = vmatmul.mubr.bf16.gmra.mxu0 %v1130
  %v1166 = vpop.f32.mrf.mxu0
  %v1167 = vadd.f32 0.0, %v1166
  %v1168 = vpop.f32.mrf.mxu0
  %v1169 = vadd.f32 0.0, %v1168
  %v1170 = vpop.f32.mrf.mxu0
  %v1171 = vpop.f32.mrf.mxu0
  %1172 = vdwg.mxu0
  %v1173 = vld [vmem:[%s960] sm:$0xff]
  %v1174 = vadd.f32 %v1167, %v1173
  %v1175 = vld [vmem:[%s955 + $0x8] sm:$0xff]
  %v1176 = vadd.f32 %v1169, %v1175
  %v1177 = vld [vmem:[#allocation6] sm:$0xff]
  %v1178 = vxor.u32 %v1174, 2147483648
  %v1179 = vmul.f32 %v1178, 1.442695
  %v1180 = vpow.pop %v1179
  %v1181 = vadd.f32 %v1180, 1.0
  %v1182 = vrcp.pop %v1181
  %v1183 = vmul.f32 1.0, %v1182
  %v1184 = vtanh.pop %v1174
  %1186 = vrot.lane.b32.xlu0 %v1177, 32
  %v1187 = vpop.permute.xlu0 %1186
  %v1189 = vmul.f32 %v1183, %v1187
  %1191 = vrot.lane.b32.xlu0 %v1184, 64
  %v1192 = vpop.permute.xlu0 %1191
  %v1194 = vmul.f32 %v1183, %v1192
  %1196 = vrot.lane.b32.xlu0 %v1194, 32
  %v1197 = vpop.permute.xlu0 %1196
  %v1199 = vadd.f32 %v1189, %v1197
  %v1200 = vtanh.pop %v1199
  %1202 = vrot.lane.b32.xlu0 %v1200, 64
  %v1203 = vpop.permute.xlu0 %1202
  %v1205 = vmul.f32 %v1183, %v1203
  %1207 = vrot.lane.b32.xlu0 %v1079, 96
  %v1208 = vpop.permute.xlu0 %1207
  %v1210 = vsel %vm1036, %v1205, %v1208
  %v1211 = vsel %vm1036, %v1199, %v1187
  %v1212 = vld [vmem:[#allocation7] sm:$0xff]
  %v1213 = vxor.u32 %v1176, 2147483648
  %v1214 = vmul.f32 %v1213, 1.442695
  %v1215 = vpow.pop %v1214
  %v1216 = vadd.f32 %v1215, 1.0
  %v1217 = vrcp.pop %v1216
  %v1218 = vmul.f32 1.0, %v1217
  %v1219 = vtanh.pop %v1176
  %1221 = vrot.lane.b32.xlu0 %v1212, 32
  %v1222 = vpop.permute.xlu0 %1221
  %v1224 = vmul.f32 %v1218, %v1222
  %1226 = vrot.lane.b32.xlu0 %v1219, 64
  %v1227 = vpop.permute.xlu0 %1226
  %v1229 = vmul.f32 %v1218, %v1227
  %1231 = vrot.lane.b32.xlu0 %v1229, 32
  %v1232 = vpop.permute.xlu0 %1231
  %v1234 = vadd.f32 %v1224, %v1232
  %v1235 = vtanh.pop %v1234
  %1237 = vrot.lane.b32.xlu0 %v1235, 64
  %v1238 = vpop.permute.xlu0 %1237
  %v1240 = vmul.f32 %v1218, %v1238
  %1241 = vrot.lane.b32.xlu0 %v1079, 64
  %v1242 = vpop.permute.xlu0 %1241
  %v1244 = vsel %vm996, %v1240, %v1242
  %v1245 = vsel %vm996, %v1234, %v1222
  %1247 = vrot.lane.b32.xlu0 %v1211, 96
  %v1248 = vpop.permute.xlu0 %1247
  %1250 = vst.msk [vmem:[#allocation6] sm:$0xff] %vm84, %v1248
  %1252 = vrot.lane.b32.xlu0 %v1245, 96
  %v1253 = vpop.permute.xlu0 %1252
  %1255 = vst.msk [vmem:[#allocation7] sm:$0xff] %vm84, %v1253
  %1257 = vrot.lane.b32.xlu0 %v1210, 32
  %v1258 = vpop.permute.xlu0 %1257
  %1260 = vst.msk [vmem:[#allocation5] sm:$0xff] %vm84, %v1258
  %1262 = vrot.lane.b32.xlu0 %v1244, 64
  %v1263 = vpop.permute.xlu0 %1262
  %1265 = vst.msk [vmem:[#allocation5] sm:$0xff] %vm395, %v1263
  %v1266 = vsel %vm1036, %v1205, 0.0
  %1268 = vrot.lane.b32.xlu0 %v1266, 32
  %v1269 = vpop.permute.xlu0 %1268
  %1271 = vst.msk [vmem:[%s1074] sm:$0xff] %vm84, %v1269
  %v1272 = vsel %vm996, %v1240, 0.0
  %1274 = vrot.lane.b32.xlu0 %v1272, 64
  %v1275 = vpop.permute.xlu0 %1274
  %1277 = vst.msk [vmem:[%s1067] sm:$0xff] %vm395, %v1275
  %v1278 = vcvt.s32.f32 %v1032
  %s1279 = scalar_lea.vmem [#allocation4], 32
  %1280 = vst.msk [vmem:[%s1279] sm:$0xff] %vm411, %v1278
  %v1281 = vld [vmem:[#allocation5] sm:$0xff]
  %v1282 = vpack.c.bf16 %v1281, %v1281
  %v1283 = vld [vmem:[%s3] sm:$0xff]
  %v1284 = vld [vmem:[%s3 + $0x8] sm:$0xff]
  %v1285 = vld [vmem:[%s3 + $0x10] sm:$0xff]
  %v1286 = vld [vmem:[%s3 + $0x18] sm:$0xff]
  %v1287 = vld [vmem:[%s3 + $0x20] sm:$0xff]
  %v1288 = vld [vmem:[%s3 + $0x28] sm:$0xff]
  %v1289 = vld [vmem:[%s3 + $0x30] sm:$0xff]
  %v1290 = vld [vmem:[%s3 + $0x38] sm:$0xff]
  %v1299 = vunpack.c.l.b16 %v1283
  %v1300 = vunpack.c.h.b16 %v1283
  %v1301 = vunpack.c.l.b16 %v1284
  %v1302 = vunpack.c.h.b16 %v1284
  %v1303 = vunpack.c.l.b16 %v1285
  %v1304 = vunpack.c.h.b16 %v1285
  %v1305 = vunpack.c.l.b16 %v1286
  %v1306 = vunpack.c.h.b16 %v1286
  %v1307 = vunpack.c.l.b16 %v1287
  %v1308 = vunpack.c.h.b16 %v1287
  %v1309 = vunpack.c.l.b16 %v1288
  %v1310 = vunpack.c.h.b16 %v1288
  %v1311 = vunpack.c.l.b16 %v1289
  %v1312 = vunpack.c.h.b16 %v1289
  %v1313 = vunpack.c.l.b16 %v1290
  %v1314 = vunpack.c.h.b16 %v1290
  %v1315 = vpack.c.b16 %v1301, %v1299
  %v1316 = vpack.c.b16 %v1302, %v1300
  %v1317 = vpack.c.b16 %v1305, %v1303
  %v1318 = vpack.c.b16 %v1306, %v1304
  %v1319 = vpack.c.b16 %v1309, %v1307
  %v1320 = vpack.c.b16 %v1310, %v1308
  %v1321 = vpack.c.b16 %v1313, %v1311
  %v1322 = vpack.c.b16 %v1314, %v1312
  %v1332 = vsel %vm186, %v1282, 0
  %1334 = vmatprep.subr.bf16.mxu0 0
  %1335 = vmatpush1.bf16.msra.mxu0 0
  %1336 = vmatprep.subr.bf16.mxu0 0
  %1337 = vmatpush1.bf16.msra.mxu0 0
  %1338 = vmatprep.subr.bf16.mxu0 0
  %1339 = vmatpush1.bf16.msra.mxu0 0
  %1340 = vmatprep.subr.bf16.mxu0 0
  %1341 = vmatpush1.bf16.msra.mxu0 0
  %1342 = vmatprep.subr.bf16.mxu0 %v1322
  %1343 = vmatpush1.bf16.msra.mxu0 %v1321
  %1344 = vmatprep.subr.bf16.mxu0 %v1320
  %1345 = vmatpush1.bf16.msra.mxu0 %v1319
  %1346 = vmatprep.subr.bf16.mxu0 %v1318
  %1347 = vmatpush1.bf16.msra.mxu0 %v1317
  %1348 = vmatprep.subr.bf16.mxu0 %v1316
  %1349 = vmatpush1.bf16.msra.mxu0 %v1315
  %1350 = vmatprep.subr.bf16.mxu0 0
  %1351 = vmatpush2.bf16.msra.mxu0 0
  %1352 = vmatprep.subr.bf16.mxu0 0
  %1353 = vmatpush2.bf16.msra.mxu0 0
  %1354 = vmatprep.subr.bf16.mxu0 0
  %1355 = vmatpush2.bf16.msra.mxu0 0
  %1356 = vmatprep.subr.bf16.mxu0 0
  %1357 = vmatpush2.bf16.msra.mxu0 0
  %1358 = vmatprep.subr.bf16.mxu0 0
  %1359 = vmatpush2.bf16.msra.mxu0 0
  %1360 = vmatprep.subr.bf16.mxu0 0
  %1361 = vmatpush2.bf16.msra.mxu0 0
  %1362 = vmatprep.subr.bf16.mxu0 0
  %1363 = vmatpush2.bf16.msra.mxu0 0
  %1364 = vmatprep.subr.bf16.mxu0 0
  %1365 = vmatpush2.bf16.msra.mxu0 0
  %1366 = vmatprep.mubr.bf16.mxu0 0
  %1367 = vmatmul.mubr.bf16.gmra.mxu0 %v1332
  %v1368 = vpop.f32.mrf.mxu0
  %v1369 = vadd.f32 0.0, %v1368
  %v1370 = vpop.f32.mrf.mxu0
  %v1371 = vadd.f32 0.0, %v1370
  %v1372 = vpop.f32.mrf.mxu0
  %v1373 = vpop.f32.mrf.mxu0
  %1374 = vdwg.mxu0
  %v1375 = vld [vmem:[%s738] sm:$0xff]
  %v1376 = vadd.f32 %v1369, %v1375
  %v1377 = vld [vmem:[%s733 + $0x8] sm:$0xff]
  %v1378 = vadd.f32 %v1371, %v1377
  %v1379 = vld [vmem:[#allocation6] sm:$0xff]
  %v1380 = vxor.u32 %v1376, 2147483648
  %v1381 = vmul.f32 %v1380, 1.442695
  %v1382 = vpow.pop %v1381
  %v1383 = vadd.f32 %v1382, 1.0
  %v1384 = vrcp.pop %v1383
  %v1385 = vmul.f32 1.0, %v1384
  %v1386 = vtanh.pop %v1376
  %1388 = vrot.lane.b32.xlu0 %v1379, 32
  %v1389 = vpop.permute.xlu0 %1388
  %v1391 = vmul.f32 %v1385, %v1389
  %1393 = vrot.lane.b32.xlu0 %v1386, 64
  %v1394 = vpop.permute.xlu0 %1393
  %v1396 = vmul.f32 %v1385, %v1394
  %1398 = vrot.lane.b32.xlu0 %v1396, 32
  %v1399 = vpop.permute.xlu0 %1398
  %v1401 = vadd.f32 %v1391, %v1399
  %v1402 = vtanh.pop %v1401
  %1404 = vrot.lane.b32.xlu0 %v1402, 64
  %v1405 = vpop.permute.xlu0 %1404
  %v1407 = vmul.f32 %v1385, %v1405
  %1409 = vrot.lane.b32.xlu0 %v1281, 96
  %v1410 = vpop.permute.xlu0 %1409
  %v1412 = vsel %vm814, %v1407, %v1410
  %v1413 = vsel %vm814, %v1401, %v1389
  %v1414 = vld [vmem:[#allocation7] sm:$0xff]
  %v1415 = vxor.u32 %v1378, 2147483648
  %v1416 = vmul.f32 %v1415, 1.442695
  %v1417 = vpow.pop %v1416
  %v1418 = vadd.f32 %v1417, 1.0
  %v1419 = vrcp.pop %v1418
  %v1420 = vmul.f32 1.0, %v1419
  %v1421 = vtanh.pop %v1378
  %1423 = vrot.lane.b32.xlu0 %v1414, 32
  %v1424 = vpop.permute.xlu0 %1423
  %v1426 = vmul.f32 %v1420, %v1424
  %1428 = vrot.lane.b32.xlu0 %v1421, 64
  %v1429 = vpop.permute.xlu0 %1428
  %v1431 = vmul.f32 %v1420, %v1429
  %1433 = vrot.lane.b32.xlu0 %v1431, 32
  %v1434 = vpop.permute.xlu0 %1433
  %v1436 = vadd.f32 %v1426, %v1434
  %v1437 = vtanh.pop %v1436
  %1439 = vrot.lane.b32.xlu0 %v1437, 64
  %v1440 = vpop.permute.xlu0 %1439
  %v1442 = vmul.f32 %v1420, %v1440
  %1443 = vrot.lane.b32.xlu0 %v1281, 64
  %v1444 = vpop.permute.xlu0 %1443
  %v1446 = vsel %vm774, %v1442, %v1444
  %v1447 = vsel %vm774, %v1436, %v1424
  %1449 = vrot.lane.b32.xlu0 %v1413, 96
  %v1450 = vpop.permute.xlu0 %1449
  %1452 = vst.msk [vmem:[#allocation6] sm:$0xff] %vm84, %v1450
  %1454 = vrot.lane.b32.xlu0 %v1447, 96
  %v1455 = vpop.permute.xlu0 %1454
  %1457 = vst.msk [vmem:[#allocation7] sm:$0xff] %vm84, %v1455
  %1459 = vrot.lane.b32.xlu0 %v1412, 32
  %v1460 = vpop.permute.xlu0 %1459
  %1462 = vst.msk [vmem:[#allocation5] sm:$0xff] %vm84, %v1460
  %1464 = vrot.lane.b32.xlu0 %v1446, 64
  %v1465 = vpop.permute.xlu0 %1464
  %1467 = vst.msk [vmem:[#allocation5] sm:$0xff] %vm395, %v1465
  %v1468 = vsel %vm814, %v1407, 0.0
  %1470 = vrot.lane.b32.xlu0 %v1468, 32
  %v1471 = vpop.permute.xlu0 %1470
  %1473 = vst.msk [vmem:[%s852] sm:$0xff] %vm84, %v1471
  %v1474 = vsel %vm774, %v1442, 0.0
  %1476 = vrot.lane.b32.xlu0 %v1474, 64
  %v1477 = vpop.permute.xlu0 %1476
  %1479 = vst.msk [vmem:[%s845] sm:$0xff] %vm395, %v1477
  %v1480 = vcvt.s32.f32 %v810
  %s1481 = scalar_lea.vmem [#allocation4], 40
  %1482 = vst.msk [vmem:[%s1481] sm:$0xff] %vm411, %v1480
  %v1483 = vld [vmem:[#allocation5] sm:$0xff]
  %v1484 = vpack.c.bf16 %v1483, %v1483
  %v1485 = vld [vmem:[%s3] sm:$0xff]
  %v1486 = vld [vmem:[%s3 + $0x8] sm:$0xff]
  %v1487 = vld [vmem:[%s3 + $0x10] sm:$0xff]
  %v1488 = vld [vmem:[%s3 + $0x18] sm:$0xff]
  %v1489 = vld [vmem:[%s3 + $0x20] sm:$0xff]
  %v1490 = vld [vmem:[%s3 + $0x28] sm:$0xff]
  %v1491 = vld [vmem:[%s3 + $0x30] sm:$0xff]
  %v1492 = vld [vmem:[%s3 + $0x38] sm:$0xff]
  %v1501 = vunpack.c.l.b16 %v1485
  %v1502 = vunpack.c.h.b16 %v1485
  %v1503 = vunpack.c.l.b16 %v1486
  %v1504 = vunpack.c.h.b16 %v1486
  %v1505 = vunpack.c.l.b16 %v1487
  %v1506 = vunpack.c.h.b16 %v1487
  %v1507 = vunpack.c.l.b16 %v1488
  %v1508 = vunpack.c.h.b16 %v1488
  %v1509 = vunpack.c.l.b16 %v1489
  %v1510 = vunpack.c.h.b16 %v1489
  %v1511 = vunpack.c.l.b16 %v1490
  %v1512 = vunpack.c.h.b16 %v1490
  %v1513 = vunpack.c.l.b16 %v1491
  %v1514 = vunpack.c.h.b16 %v1491
  %v1515 = vunpack.c.l.b16 %v1492
  %v1516 = vunpack.c.h.b16 %v1492
  %v1517 = vpack.c.b16 %v1503, %v1501
  %v1518 = vpack.c.b16 %v1504, %v1502
  %v1519 = vpack.c.b16 %v1507, %v1505
  %v1520 = vpack.c.b16 %v1508, %v1506
  %v1521 = vpack.c.b16 %v1511, %v1509
  %v1522 = vpack.c.b16 %v1512, %v1510
  %v1523 = vpack.c.b16 %v1515, %v1513
  %v1524 = vpack.c.b16 %v1516, %v1514
  %v1534 = vsel %vm186, %v1484, 0
  %1536 = vmatprep.subr.bf16.mxu0 0
  %1537 = vmatpush1.bf16.msra.mxu0 0
  %1538 = vmatprep.subr.bf16.mxu0 0
  %1539 = vmatpush1.bf16.msra.mxu0 0
  %1540 = vmatprep.subr.bf16.mxu0 0
  %1541 = vmatpush1.bf16.msra.mxu0 0
  %1542 = vmatprep.subr.bf16.mxu0 0
  %1543 = vmatpush1.bf16.msra.mxu0 0
  %1544 = vmatprep.subr.bf16.mxu0 %v1524
  %1545 = vmatpush1.bf16.msra.mxu0 %v1523
  %1546 = vmatprep.subr.bf16.mxu0 %v1522
  %1547 = vmatpush1.bf16.msra.mxu0 %v1521
  %1548 = vmatprep.subr.bf16.mxu0 %v1520
  %1549 = vmatpush1.bf16.msra.mxu0 %v1519
  %1550 = vmatprep.subr.bf16.mxu0 %v1518
  %1551 = vmatpush1.bf16.msra.mxu0 %v1517
  %1552 = vmatprep.subr.bf16.mxu0 0
  %1553 = vmatpush2.bf16.msra.mxu0 0
  %1554 = vmatprep.subr.bf16.mxu0 0
  %1555 = vmatpush2.bf16.msra.mxu0 0
  %1556 = vmatprep.subr.bf16.mxu0 0
  %1557 = vmatpush2.bf16.msra.mxu0 0
  %1558 = vmatprep.subr.bf16.mxu0 0
  %1559 = vmatpush2.bf16.msra.mxu0 0
  %1560 = vmatprep.subr.bf16.mxu0 0
  %1561 = vmatpush2.bf16.msra.mxu0 0
  %1562 = vmatprep.subr.bf16.mxu0 0
  %1563 = vmatpush2.bf16.msra.mxu0 0
  %1564 = vmatprep.subr.bf16.mxu0 0
  %1565 = vmatpush2.bf16.msra.mxu0 0
  %1566 = vmatprep.subr.bf16.mxu0 0
  %1567 = vmatpush2.bf16.msra.mxu0 0
  %1568 = vmatprep.mubr.bf16.mxu0 0
  %1569 = vmatmul.mubr.bf16.gmra.mxu0 %v1534
  %v1570 = vpop.f32.mrf.mxu0
  %v1571 = vadd.f32 0.0, %v1570
  %v1572 = vpop.f32.mrf.mxu0
  %v1573 = vadd.f32 0.0, %v1572
  %v1574 = vpop.f32.mrf.mxu0
  %v1575 = vpop.f32.mrf.mxu0
  %1576 = vdwg.mxu0
  %v1577 = vld [vmem:[%s516] sm:$0xff]
  %v1578 = vadd.f32 %v1571, %v1577
  %v1579 = vld [vmem:[%s511 + $0x8] sm:$0xff]
  %v1580 = vadd.f32 %v1573, %v1579
  %v1581 = vld [vmem:[#allocation6] sm:$0xff]
  %v1582 = vxor.u32 %v1578, 2147483648
  %v1583 = vmul.f32 %v1582, 1.442695
  %v1584 = vpow.pop %v1583
  %v1585 = vadd.f32 %v1584, 1.0
  %v1586 = vrcp.pop %v1585
  %v1587 = vmul.f32 1.0, %v1586
  %v1588 = vtanh.pop %v1578
  %1590 = vrot.lane.b32.xlu0 %v1581, 32
  %v1591 = vpop.permute.xlu0 %1590
  %v1593 = vmul.f32 %v1587, %v1591
  %1595 = vrot.lane.b32.xlu0 %v1588, 64
  %v1596 = vpop.permute.xlu0 %1595
  %v1598 = vmul.f32 %v1587, %v1596
  %1600 = vrot.lane.b32.xlu0 %v1598, 32
  %v1601 = vpop.permute.xlu0 %1600
  %v1603 = vadd.f32 %v1593, %v1601
  %v1604 = vtanh.pop %v1603
  %1606 = vrot.lane.b32.xlu0 %v1604, 64
  %v1607 = vpop.permute.xlu0 %1606
  %v1609 = vmul.f32 %v1587, %v1607
  %1611 = vrot.lane.b32.xlu0 %v1483, 96
  %v1612 = vpop.permute.xlu0 %1611
  %v1614 = vsel %vm592, %v1609, %v1612
  %v1615 = vsel %vm592, %v1603, %v1591
  %v1616 = vld [vmem:[#allocation7] sm:$0xff]
  %v1617 = vxor.u32 %v1580, 2147483648
  %v1618 = vmul.f32 %v1617, 1.442695
  %v1619 = vpow.pop %v1618
  %v1620 = vadd.f32 %v1619, 1.0
  %v1621 = vrcp.pop %v1620
  %v1622 = vmul.f32 1.0, %v1621
  %v1623 = vtanh.pop %v1580
  %1625 = vrot.lane.b32.xlu0 %v1616, 32
  %v1626 = vpop.permute.xlu0 %1625
  %v1628 = vmul.f32 %v1622, %v1626
  %1630 = vrot.lane.b32.xlu0 %v1623, 64
  %v1631 = vpop.permute.xlu0 %1630
  %v1633 = vmul.f32 %v1622, %v1631
  %1635 = vrot.lane.b32.xlu0 %v1633, 32
  %v1636 = vpop.permute.xlu0 %1635
  %v1638 = vadd.f32 %v1628, %v1636
  %v1639 = vtanh.pop %v1638
  %1641 = vrot.lane.b32.xlu0 %v1639, 64
  %v1642 = vpop.permute.xlu0 %1641
  %v1644 = vmul.f32 %v1622, %v1642
  %1645 = vrot.lane.b32.xlu0 %v1483, 64
  %v1646 = vpop.permute.xlu0 %1645
  %v1648 = vsel %vm552, %v1644, %v1646
  %v1649 = vsel %vm552, %v1638, %v1626
  %1651 = vrot.lane.b32.xlu0 %v1615, 96
  %v1652 = vpop.permute.xlu0 %1651
  %1654 = vst.msk [vmem:[#allocation6] sm:$0xff] %vm84, %v1652
  %1656 = vrot.lane.b32.xlu0 %v1649, 96
  %v1657 = vpop.permute.xlu0 %1656
  %1659 = vst.msk [vmem:[#allocation7] sm:$0xff] %vm84, %v1657
  %1661 = vrot.lane.b32.xlu0 %v1614, 32
  %v1662 = vpop.permute.xlu0 %1661
  %1664 = vst.msk [vmem:[#allocation5] sm:$0xff] %vm84, %v1662
  %1666 = vrot.lane.b32.xlu0 %v1648, 64
  %v1667 = vpop.permute.xlu0 %1666
  %1669 = vst.msk [vmem:[#allocation5] sm:$0xff] %vm395, %v1667
  %v1670 = vsel %vm592, %v1609, 0.0
  %1672 = vrot.lane.b32.xlu0 %v1670, 32
  %v1673 = vpop.permute.xlu0 %1672
  %1675 = vst.msk [vmem:[%s630] sm:$0xff] %vm84, %v1673
  %v1676 = vsel %vm552, %v1644, 0.0
  %1678 = vrot.lane.b32.xlu0 %v1676, 64
  %v1679 = vpop.permute.xlu0 %1678
  %1681 = vst.msk [vmem:[%s623] sm:$0xff] %vm395, %v1679
  %v1682 = vcvt.s32.f32 %v588
  %s1683 = scalar_lea.vmem [#allocation4], 48
  %1684 = vst.msk [vmem:[%s1683] sm:$0xff] %vm411, %v1682
  %v1685 = vld [vmem:[#allocation5] sm:$0xff]
  %v1686 = vpack.c.bf16 %v1685, %v1685
  %v1687 = vld [vmem:[%s3] sm:$0xff]
  %v1688 = vld [vmem:[%s3 + $0x8] sm:$0xff]
  %v1689 = vld [vmem:[%s3 + $0x10] sm:$0xff]
  %v1690 = vld [vmem:[%s3 + $0x18] sm:$0xff]
  %v1691 = vld [vmem:[%s3 + $0x20] sm:$0xff]
  %v1692 = vld [vmem:[%s3 + $0x28] sm:$0xff]
  %v1693 = vld [vmem:[%s3 + $0x30] sm:$0xff]
  %v1694 = vld [vmem:[%s3 + $0x38] sm:$0xff]
  %v1703 = vunpack.c.l.b16 %v1687
  %v1704 = vunpack.c.h.b16 %v1687
  %v1705 = vunpack.c.l.b16 %v1688
  %v1706 = vunpack.c.h.b16 %v1688
  %v1707 = vunpack.c.l.b16 %v1689
  %v1708 = vunpack.c.h.b16 %v1689
  %v1709 = vunpack.c.l.b16 %v1690
  %v1710 = vunpack.c.h.b16 %v1690
  %v1711 = vunpack.c.l.b16 %v1691
  %v1712 = vunpack.c.h.b16 %v1691
  %v1713 = vunpack.c.l.b16 %v1692
  %v1714 = vunpack.c.h.b16 %v1692
  %v1715 = vunpack.c.l.b16 %v1693
  %v1716 = vunpack.c.h.b16 %v1693
  %v1717 = vunpack.c.l.b16 %v1694
  %v1718 = vunpack.c.h.b16 %v1694
  %v1719 = vpack.c.b16 %v1705, %v1703
  %v1720 = vpack.c.b16 %v1706, %v1704
  %v1721 = vpack.c.b16 %v1709, %v1707
  %v1722 = vpack.c.b16 %v1710, %v1708
  %v1723 = vpack.c.b16 %v1713, %v1711
  %v1724 = vpack.c.b16 %v1714, %v1712
  %v1725 = vpack.c.b16 %v1717, %v1715
  %v1726 = vpack.c.b16 %v1718, %v1716
  %v1736 = vsel %vm186, %v1686, 0
  %1738 = vmatprep.subr.bf16.mxu0 0
  %1739 = vmatpush1.bf16.msra.mxu0 0
  %1740 = vmatprep.subr.bf16.mxu0 0
  %1741 = vmatpush1.bf16.msra.mxu0 0
  %1742 = vmatprep.subr.bf16.mxu0 0
  %1743 = vmatpush1.bf16.msra.mxu0 0
  %1744 = vmatprep.subr.bf16.mxu0 0
  %1745 = vmatpush1.bf16.msra.mxu0 0
  %1746 = vmatprep.subr.bf16.mxu0 %v1726
  %1747 = vmatpush1.bf16.msra.mxu0 %v1725
  %1748 = vmatprep.subr.bf16.mxu0 %v1724
  %1749 = vmatpush1.bf16.msra.mxu0 %v1723
  %1750 = vmatprep.subr.bf16.mxu0 %v1722
  %1751 = vmatpush1.bf16.msra.mxu0 %v1721
  %1752 = vmatprep.subr.bf16.mxu0 %v1720
  %1753 = vmatpush1.bf16.msra.mxu0 %v1719
  %1754 = vmatprep.subr.bf16.mxu0 0
  %1755 = vmatpush2.bf16.msra.mxu0 0
  %1756 = vmatprep.subr.bf16.mxu0 0
  %1757 = vmatpush2.bf16.msra.mxu0 0
  %1758 = vmatprep.subr.bf16.mxu0 0
  %1759 = vmatpush2.bf16.msra.mxu0 0
  %1760 = vmatprep.subr.bf16.mxu0 0
  %1761 = vmatpush2.bf16.msra.mxu0 0
  %1762 = vmatprep.subr.bf16.mxu0 0
  %1763 = vmatpush2.bf16.msra.mxu0 0
  %1764 = vmatprep.subr.bf16.mxu0 0
  %1765 = vmatpush2.bf16.msra.mxu0 0
  %1766 = vmatprep.subr.bf16.mxu0 0
  %1767 = vmatpush2.bf16.msra.mxu0 0
  %1768 = vmatprep.subr.bf16.mxu0 0
  %1769 = vmatpush2.bf16.msra.mxu0 0
  %1770 = vmatprep.mubr.bf16.mxu0 0
  %1771 = vmatmul.mubr.bf16.gmra.mxu0 %v1736
  %v1772 = vpop.f32.mrf.mxu0
  %v1773 = vadd.f32 0.0, %v1772
  %v1774 = vpop.f32.mrf.mxu0
  %v1775 = vadd.f32 0.0, %v1774
  %v1776 = vpop.f32.mrf.mxu0
  %v1777 = vpop.f32.mrf.mxu0
  %1778 = vdwg.mxu0
  %v1779 = vld [vmem:[%s294] sm:$0xff]
  %v1780 = vadd.f32 %v1773, %v1779
  %v1781 = vld [vmem:[%s289 + $0x8] sm:$0xff]
  %v1782 = vadd.f32 %v1775, %v1781
  %v1783 = vld [vmem:[#allocation6] sm:$0xff]
  %v1784 = vxor.u32 %v1780, 2147483648
  %v1785 = vmul.f32 %v1784, 1.442695
  %v1786 = vpow.pop %v1785
  %v1787 = vadd.f32 %v1786, 1.0
  %v1788 = vrcp.pop %v1787
  %v1789 = vmul.f32 1.0, %v1788
  %v1790 = vtanh.pop %v1780
  %1792 = vrot.lane.b32.xlu0 %v1783, 32
  %v1793 = vpop.permute.xlu0 %1792
  %v1795 = vmul.f32 %v1789, %v1793
  %1797 = vrot.lane.b32.xlu0 %v1790, 64
  %v1798 = vpop.permute.xlu0 %1797
  %v1800 = vmul.f32 %v1789, %v1798
  %1802 = vrot.lane.b32.xlu0 %v1800, 32
  %v1803 = vpop.permute.xlu0 %1802
  %v1805 = vadd.f32 %v1795, %v1803
  %v1806 = vtanh.pop %v1805
  %1808 = vrot.lane.b32.xlu0 %v1806, 64
  %v1809 = vpop.permute.xlu0 %1808
  %v1811 = vmul.f32 %v1789, %v1809
  %1813 = vrot.lane.b32.xlu0 %v1685, 96
  %v1814 = vpop.permute.xlu0 %1813
  %v1816 = vsel %vm370, %v1811, %v1814
  %v1817 = vsel %vm370, %v1805, %v1793
  %v1818 = vld [vmem:[#allocation7] sm:$0xff]
  %v1819 = vxor.u32 %v1782, 2147483648
  %v1820 = vmul.f32 %v1819, 1.442695
  %v1821 = vpow.pop %v1820
  %v1822 = vadd.f32 %v1821, 1.0
  %v1823 = vrcp.pop %v1822
  %v1824 = vmul.f32 1.0, %v1823
  %v1825 = vtanh.pop %v1782
  %1827 = vrot.lane.b32.xlu0 %v1818, 32
  %v1828 = vpop.permute.xlu0 %1827
  %v1830 = vmul.f32 %v1824, %v1828
  %1832 = vrot.lane.b32.xlu0 %v1825, 64
  %v1833 = vpop.permute.xlu0 %1832
  %v1835 = vmul.f32 %v1824, %v1833
  %1837 = vrot.lane.b32.xlu0 %v1835, 32
  %v1838 = vpop.permute.xlu0 %1837
  %v1840 = vadd.f32 %v1830, %v1838
  %v1841 = vtanh.pop %v1840
  %1843 = vrot.lane.b32.xlu0 %v1841, 64
  %v1844 = vpop.permute.xlu0 %1843
  %v1846 = vmul.f32 %v1824, %v1844
  %1847 = vrot.lane.b32.xlu0 %v1685, 64
  %v1848 = vpop.permute.xlu0 %1847
  %v1850 = vsel %vm330, %v1846, %v1848
  %v1851 = vsel %vm330, %v1840, %v1828
  %1853 = vrot.lane.b32.xlu0 %v1817, 96
  %v1854 = vpop.permute.xlu0 %1853
  %1856 = vst.msk [vmem:[#allocation6] sm:$0xff] %vm84, %v1854
  %1858 = vrot.lane.b32.xlu0 %v1851, 96
  %v1859 = vpop.permute.xlu0 %1858
  %1861 = vst.msk [vmem:[#allocation7] sm:$0xff] %vm84, %v1859
  %1863 = vrot.lane.b32.xlu0 %v1816, 32
  %v1864 = vpop.permute.xlu0 %1863
  %1866 = vst.msk [vmem:[#allocation5] sm:$0xff] %vm84, %v1864
  %1868 = vrot.lane.b32.xlu0 %v1850, 64
  %v1869 = vpop.permute.xlu0 %1868
  %1871 = vst.msk [vmem:[#allocation5] sm:$0xff] %vm395, %v1869
  %v1872 = vsel %vm370, %v1811, 0.0
  %1874 = vrot.lane.b32.xlu0 %v1872, 32
  %v1875 = vpop.permute.xlu0 %1874
  %1877 = vst.msk [vmem:[%s408] sm:$0xff] %vm84, %v1875
  %v1878 = vsel %vm330, %v1846, 0.0
  %1880 = vrot.lane.b32.xlu0 %v1878, 64
  %v1881 = vpop.permute.xlu0 %1880
  %1883 = vst.msk [vmem:[#allocation3] sm:$0xff] %vm395, %v1881
  %v1884 = vcvt.s32.f32 %v366
  %s1885 = scalar_lea.vmem [#allocation4], 56
  %1886 = vst.msk [vmem:[%s1885] sm:$0xff] %vm411, %v1884
  %v1887 = vld [vmem:[#allocation3] sm:$0xff]
  %v1888 = vld [vmem:[#allocation3 + $0x8] sm:$0xff]
  %v1889 = vld [vmem:[#allocation3 + $0x10] sm:$0xff]
  %v1890 = vld [vmem:[#allocation3 + $0x18] sm:$0xff]
  %v1891 = vld [vmem:[#allocation3 + $0x20] sm:$0xff]
  %v1892 = vld [vmem:[#allocation3 + $0x28] sm:$0xff]
  %v1893 = vld [vmem:[#allocation3 + $0x30] sm:$0xff]
  %v1894 = vld [vmem:[#allocation3 + $0x38] sm:$0xff]
  %v1895 = vpack.c.bf16 %v1888, %v1887
  %v1896 = vpack.c.bf16 %v1890, %v1889
  %v1897 = vpack.c.bf16 %v1892, %v1891
  %v1898 = vpack.c.bf16 %v1894, %v1893
  %v1899 = vld [vmem:[%s5] sm:$0xf]
  %v1900 = vld [vmem:[%s5 + $0x4] sm:$0xf]
  %v1901 = vld [vmem:[%s5 + $0x8] sm:$0xf]
  %v1902 = vld [vmem:[%s5 + $0xc] sm:$0xf]
  %v1903 = vld [vmem:[%s5 + $0x10] sm:$0xf]
  %v1904 = vld [vmem:[%s5 + $0x14] sm:$0xf]
  %v1905 = vld [vmem:[%s5 + $0x18] sm:$0xf]
  %v1906 = vld [vmem:[%s5 + $0x1c] sm:$0xf]
  %v1907 = vld [vmem:[%s6] sm:$0x1]
  %v1909 = vlaneseq
  %v1910 = vshrl.u32 %v1909, 7
  %v1911 = vsub.s32 0, %v1910
  %v1912 = vrot.slane %v1907, %v1911
  %v1922 = vunpack.c.l.b16 %v1899
  %v1923 = vunpack.c.l.b16 %v1900
  %v1924 = vunpack.c.l.b16 %v1901
  %v1925 = vunpack.c.l.b16 %v1902
  %v1926 = vunpack.c.l.b16 %v1903
  %v1927 = vunpack.c.l.b16 %v1904
  %v1928 = vunpack.c.l.b16 %v1905
  %v1929 = vunpack.c.l.b16 %v1906
  %v1930 = vpack.c.b16 %v1923, %v1922
  %v1931 = vpack.c.b16 %v1925, %v1924
  %v1932 = vpack.c.b16 %v1927, %v1926
  %v1933 = vpack.c.b16 %v1929, %v1928
  %v1939 = vsel %vm186, %v1895, 0
  %v1942 = vsel %vm186, %v1896, 0
  %v1945 = vsel %vm186, %v1897, 0
  %v1948 = vsel %vm186, %v1898, 0
  %1950 = vmatprep.subr.bf16.mxu0 0
  %1951 = vmatpush1.bf16.msra.mxu0 0
  %1952 = vmatprep.subr.bf16.mxu0 0
  %1953 = vmatpush1.bf16.msra.mxu0 0
  %1954 = vmatprep.subr.bf16.mxu0 0
  %1955 = vmatpush1.bf16.msra.mxu0 0
  %1956 = vmatprep.subr.bf16.mxu0 0
  %1957 = vmatpush1.bf16.msra.mxu0 0
  %1958 = vmatprep.subr.bf16.mxu0 0
  %1959 = vmatpush1.bf16.msra.mxu0 %v1933
  %1960 = vmatprep.subr.bf16.mxu0 0
  %1961 = vmatpush1.bf16.msra.mxu0 %v1932
  %1962 = vmatprep.subr.bf16.mxu0 0
  %1963 = vmatpush1.bf16.msra.mxu0 %v1931
  %1964 = vmatprep.subr.bf16.mxu0 0
  %1965 = vmatpush1.bf16.msra.mxu0 %v1930
  %1966 = vmatprep.subr.bf16.mxu0 0
  %1967 = vmatpush2.bf16.msra.mxu0 0
  %1968 = vmatprep.subr.bf16.mxu0 0
  %1969 = vmatpush2.bf16.msra.mxu0 0
  %1970 = vmatprep.subr.bf16.mxu0 0
  %1971 = vmatpush2.bf16.msra.mxu0 0
  %1972 = vmatprep.subr.bf16.mxu0 0
  %1973 = vmatpush2.bf16.msra.mxu0 0
  %1974 = vmatprep.subr.bf16.mxu0 0
  %1975 = vmatpush2.bf16.msra.mxu0 0
  %1976 = vmatprep.subr.bf16.mxu0 0
  %1977 = vmatpush2.bf16.msra.mxu0 0
  %1978 = vmatprep.subr.bf16.mxu0 0
  %1979 = vmatpush2.bf16.msra.mxu0 0
  %1980 = vmatprep.subr.bf16.mxu0 0
  %1981 = vmatpush2.bf16.msra.mxu0 0
  %1982 = vmatprep.mubr.bf16.mxu0 0
  %1983 = vmatmul.mubr.bf16.gmra.mxu0 %v1939
  %v1984 = vpop.f32.mrf.mxu0
  %v1985 = vadd.f32 %v1912, %v1984
  %v1986 = vpop.f32.mrf.mxu0
  %v1987 = vpop.f32.mrf.mxu0
  %v1988 = vadd.f32 %v1912, %v1987
  %v1989 = vpop.f32.mrf.mxu0
  %1990 = vmatprep.mubr.bf16.mxu0 0
  %1991 = vmatmul.mubr.bf16.gmra.mxu0 %v1942
  %v1992 = vpop.f32.mrf.mxu0
  %v1993 = vadd.f32 %v1912, %v1992
  %v1994 = vpop.f32.mrf.mxu0
  %v1995 = vpop.f32.mrf.mxu0
  %v1996 = vadd.f32 %v1912, %v1995
  %v1997 = vpop.f32.mrf.mxu0
  %1998 = vmatprep.mubr.bf16.mxu0 0
  %1999 = vmatmul.mubr.bf16.gmra.mxu0 %v1945
  %v2000 = vpop.f32.mrf.mxu0
  %v2001 = vadd.f32 %v1912, %v2000
  %v2002 = vpop.f32.mrf.mxu0
  %v2003 = vpop.f32.mrf.mxu0
  %v2004 = vadd.f32 %v1912, %v2003
  %v2005 = vpop.f32.mrf.mxu0
  %2006 = vmatprep.mubr.bf16.mxu0 0
  %2007 = vmatmul.mubr.bf16.gmra.mxu0 %v1948
  %v2008 = vpop.f32.mrf.mxu0
  %v2009 = vadd.f32 %v1912, %v2008
  %v2010 = vpop.f32.mrf.mxu0
  %v2011 = vpop.f32.mrf.mxu0
  %v2012 = vadd.f32 %v1912, %v2011
  %v2013 = vpop.f32.mrf.mxu0
  %2014 = vdwg.mxu0
  %v2015 = vtanh.pop %v1985
  %v2016 = vtanh.pop %v1988
  %v2017 = vtanh.pop %v1993
  %v2018 = vtanh.pop %v1996
  %v2019 = vtanh.pop %v2001
  %v2020 = vtanh.pop %v2004
  %v2021 = vtanh.pop %v2009
  %v2022 = vtanh.pop %v2012
  %v2023 = vpack.c.bf16 %v2016, %v2015
  %v2024 = vpack.c.bf16 %v2018, %v2017
  %v2025 = vpack.c.bf16 %v2020, %v2019
  %v2026 = vpack.c.bf16 %v2022, %v2021
  %v2027 = vld [vmem:[%s7] sm:$0xf]
  %v2028 = vld [vmem:[%s7 + $0x4] sm:$0xf]
  %v2029 = vld [vmem:[%s7 + $0x8] sm:$0xf]
  %v2030 = vld [vmem:[%s7 + $0xc] sm:$0xf]
  %v2035 = vunpack.c.l.b16 %v2027
  %v2036 = vunpack.c.l.b16 %v2028
  %v2037 = vunpack.c.l.b16 %v2029
  %v2038 = vunpack.c.l.b16 %v2030
  %v2039 = vpack.c.b16 %v2036, %v2035
  %v2040 = vpack.c.b16 %v2038, %v2037
  %v2044 = vsel %vm84, %v2023, 0
  %v2047 = vsel %vm84, %v2024, 0
  %v2050 = vsel %vm84, %v2025, 0
  %v2053 = vsel %vm84, %v2026, 0
  %2055 = vmatprep.subr.bf16.mxu0 0
  %2056 = vmatpush1.bf16.msra.mxu0 0
  %2057 = vmatprep.subr.bf16.mxu0 0
  %2058 = vmatpush1.bf16.msra.mxu0 0
  %2059 = vmatprep.subr.bf16.mxu0 0
  %2060 = vmatpush1.bf16.msra.mxu0 0
  %2061 = vmatprep.subr.bf16.mxu0 0
  %2062 = vmatpush1.bf16.msra.mxu0 0
  %2063 = vmatprep.subr.bf16.mxu0 0
  %2064 = vmatpush1.bf16.msra.mxu0 0
  %2065 = vmatprep.subr.bf16.mxu0 0
  %2066 = vmatpush1.bf16.msra.mxu0 0
  %2067 = vmatprep.subr.bf16.mxu0 0
  %2068 = vmatpush1.bf16.msra.mxu0 %v2040
  %2069 = vmatprep.subr.bf16.mxu0 0
  %2070 = vmatpush1.bf16.msra.mxu0 %v2039
  %2071 = vmatprep.subr.bf16.mxu0 0
  %2072 = vmatpush2.bf16.msra.mxu0 0
  %2073 = vmatprep.subr.bf16.mxu0 0
  %2074 = vmatpush2.bf16.msra.mxu0 0
  %2075 = vmatprep.subr.bf16.mxu0 0
  %2076 = vmatpush2.bf16.msra.mxu0 0
  %2077 = vmatprep.subr.bf16.mxu0 0
  %2078 = vmatpush2.bf16.msra.mxu0 0
  %2079 = vmatprep.subr.bf16.mxu0 0
  %2080 = vmatpush2.bf16.msra.mxu0 0
  %2081 = vmatprep.subr.bf16.mxu0 0
  %2082 = vmatpush2.bf16.msra.mxu0 0
  %2083 = vmatprep.subr.bf16.mxu0 0
  %2084 = vmatpush2.bf16.msra.mxu0 0
  %2085 = vmatprep.subr.bf16.mxu0 0
  %2086 = vmatpush2.bf16.msra.mxu0 0
  %2087 = vmatprep.mubr.bf16.mxu0 0
  %2088 = vmatmul.mubr.bf16.gmra.mxu0 %v2044
  %v2089 = vpop.f32.mrf.mxu0
  %v2090 = vadd.f32 0.0, %v2089
  %v2091 = vpop.f32.mrf.mxu0
  %v2092 = vpop.f32.mrf.mxu0
  %v2093 = vadd.f32 0.0, %v2092
  %v2094 = vpop.f32.mrf.mxu0
  %2095 = vmatprep.mubr.bf16.mxu0 0
  %2096 = vmatmul.mubr.bf16.gmra.mxu0 %v2047
  %v2097 = vpop.f32.mrf.mxu0
  %v2098 = vadd.f32 0.0, %v2097
  %v2099 = vpop.f32.mrf.mxu0
  %v2100 = vpop.f32.mrf.mxu0
  %v2101 = vadd.f32 0.0, %v2100
  %v2102 = vpop.f32.mrf.mxu0
  %2103 = vmatprep.mubr.bf16.mxu0 0
  %2104 = vmatmul.mubr.bf16.gmra.mxu0 %v2050
  %v2105 = vpop.f32.mrf.mxu0
  %v2106 = vadd.f32 0.0, %v2105
  %v2107 = vpop.f32.mrf.mxu0
  %v2108 = vpop.f32.mrf.mxu0
  %v2109 = vadd.f32 0.0, %v2108
  %v2110 = vpop.f32.mrf.mxu0
  %2111 = vmatprep.mubr.bf16.mxu0 0
  %2112 = vmatmul.mubr.bf16.gmra.mxu0 %v2053
  %v2113 = vpop.f32.mrf.mxu0
  %v2114 = vadd.f32 0.0, %v2113
  %v2115 = vpop.f32.mrf.mxu0
  %v2116 = vpop.f32.mrf.mxu0
  %v2117 = vadd.f32 0.0, %v2116
  %v2118 = vpop.f32.mrf.mxu0
  %2119 = vdwg.mxu0
  %v2120 = vld [vmem:[#allocation4] sm:$0xff]
  %v2121 = vld [vmem:[#allocation4 + $0x8] sm:$0xff]
  %v2122 = vld [vmem:[#allocation4 + $0x10] sm:$0xff]
  %v2123 = vld [vmem:[#allocation4 + $0x18] sm:$0xff]
  %v2124 = vld [vmem:[#allocation4 + $0x20] sm:$0xff]
  %v2125 = vld [vmem:[#allocation4 + $0x28] sm:$0xff]
  %v2126 = vld [vmem:[#allocation4 + $0x30] sm:$0xff]
  %v2127 = vld [vmem:[#allocation4 + $0x38] sm:$0xff]
  %vm2128 = vcmp.gt.f32.partialorder %v2120, 0.0
  %vm2129 = vcmp.gt.f32.partialorder %v2121, 0.0
  %vm2130 = vcmp.gt.f32.partialorder %v2122, 0.0
  %vm2131 = vcmp.gt.f32.partialorder %v2123, 0.0
  %vm2132 = vcmp.gt.f32.partialorder %v2124, 0.0
  %vm2133 = vcmp.gt.f32.partialorder %v2125, 0.0
  %vm2134 = vcmp.gt.f32.partialorder %v2126, 0.0
  %vm2135 = vcmp.gt.f32.partialorder %v2127, 0.0
  %v2136 = vsel %vm2128, %v2090, -1e+30
  %v2137 = vsel %vm2129, %v2093, -1e+30
  %v2138 = vsel %vm2130, %v2098, -1e+30
  %v2139 = vsel %vm2131, %v2101, -1e+30
  %v2140 = vsel %vm2132, %v2106, -1e+30
  %v2141 = vsel %vm2133, %v2109, -1e+30
  %v2142 = vsel %vm2134, %v2114, -1e+30
  %v2143 = vsel %vm2135, %v2117, -1e+30
  %v2144 = vsel %vm411, %v2136, -inf
  %v2145 = vsel %vm411, %v2137, -inf
  %v2146 = vsel %vm411, %v2138, -inf
  %v2147 = vsel %vm411, %v2139, -inf
  %v2148 = vsel %vm411, %v2140, -inf
  %v2149 = vmax.f32 %v2144, %v2148
  %v2150 = vsel %vm411, %v2141, -inf
  %v2151 = vmax.f32 %v2145, %v2150
  %v2152 = vsel %vm411, %v2142, -inf
  %v2153 = vmax.f32 %v2146, %v2152
  %v2154 = vsel %vm411, %v2143, -inf
  %v2155 = vmax.f32 %v2147, %v2154
  %v2156 = vmax.f32 %v2149, %v2151
  %v2157 = vmax.f32 %v2153, %v2155
  %v2158 = vmax.f32 %v2156, %v2157
  %v2159 = vsub.f32 %v2136, %v2158
  %v2160 = vsub.f32 %v2137, %v2158
  %v2161 = vsub.f32 %v2138, %v2158
  %v2162 = vsub.f32 %v2139, %v2158
  %v2163 = vsub.f32 %v2140, %v2158
  %v2164 = vsub.f32 %v2141, %v2158
  %v2165 = vsub.f32 %v2142, %v2158
  %v2166 = vsub.f32 %v2143, %v2158
  %v2167 = vmul.f32 %v2159, 1.442695
  %v2168 = vpow.pop %v2167
  %v2169 = vmul.f32 %v2160, 1.442695
  %v2170 = vpow.pop %v2169
  %v2171 = vmul.f32 %v2161, 1.442695
  %v2172 = vpow.pop %v2171
  %v2173 = vmul.f32 %v2162, 1.442695
  %v2174 = vpow.pop %v2173
  %v2175 = vmul.f32 %v2163, 1.442695
  %v2176 = vpow.pop %v2175
  %v2177 = vmul.f32 %v2164, 1.442695
  %v2178 = vpow.pop %v2177
  %v2179 = vmul.f32 %v2165, 1.442695
  %v2180 = vpow.pop %v2179
  %v2181 = vmul.f32 %v2166, 1.442695
  %v2182 = vpow.pop %v2181
  %v2183 = vmul.f32 %v2168, %v2120
  %v2184 = vmul.f32 %v2170, %v2121
  %v2185 = vmul.f32 %v2172, %v2122
  %v2186 = vmul.f32 %v2174, %v2123
  %v2187 = vmul.f32 %v2176, %v2124
  %v2188 = vmul.f32 %v2178, %v2125
  %v2189 = vmul.f32 %v2180, %v2126
  %v2190 = vmul.f32 %v2182, %v2127
  %v2191 = vsel %vm411, %v2183, 0.0
  %v2192 = vsel %vm411, %v2184, 0.0
  %v2193 = vadd.f32 %v2191, %v2192
  %v2194 = vsel %vm411, %v2185, 0.0
  %v2195 = vadd.f32 %v2193, %v2194
  %v2196 = vsel %vm411, %v2186, 0.0
  %v2197 = vadd.f32 %v2195, %v2196
  %v2198 = vsel %vm411, %v2187, 0.0
  %v2199 = vadd.f32 %v2197, %v2198
  %v2200 = vsel %vm411, %v2188, 0.0
  %v2201 = vadd.f32 %v2199, %v2200
  %v2202 = vsel %vm411, %v2189, 0.0
  %v2203 = vadd.f32 %v2201, %v2202
  %v2204 = vsel %vm411, %v2190, 0.0
  %v2205 = vadd.f32 %v2203, %v2204
  %v2206 = vmax.f32 %v2205, 1e-30
  %v2207 = vrcp.pop %v2206
  %v2208 = vmul.f32 %v2183, %v2207
  %v2209 = vmul.f32 %v2184, %v2207
  %v2210 = vmul.f32 %v2185, %v2207
  %v2211 = vmul.f32 %v2186, %v2207
  %v2212 = vmul.f32 %v2187, %v2207
  %v2213 = vmul.f32 %v2188, %v2207
  %v2214 = vmul.f32 %v2189, %v2207
  %v2215 = vmul.f32 %v2190, %v2207
  %2217 = vset.pattern.permute.xlu0 0
  %2218 = vperm.xlu0 %2217, %v2208
  %v2219 = vpop.permute.xlu0 %2218
  %2222 = vset.pattern.permute.xlu0 0
  %2223 = vperm.xlu0 %2222, %v2209
  %v2224 = vpop.permute.xlu0 %2223
  %2227 = vset.pattern.permute.xlu0 0
  %2228 = vperm.xlu0 %2227, %v2210
  %v2229 = vpop.permute.xlu0 %2228
  %2232 = vset.pattern.permute.xlu0 0
  %2233 = vperm.xlu0 %2232, %v2211
  %v2234 = vpop.permute.xlu0 %2233
  %2237 = vset.pattern.permute.xlu0 0
  %2238 = vperm.xlu0 %2237, %v2212
  %v2239 = vpop.permute.xlu0 %2238
  %2242 = vset.pattern.permute.xlu0 0
  %2243 = vperm.xlu0 %2242, %v2213
  %v2244 = vpop.permute.xlu0 %2243
  %2247 = vset.pattern.permute.xlu0 0
  %2248 = vperm.xlu0 %2247, %v2214
  %v2249 = vpop.permute.xlu0 %2248
  %2252 = vset.pattern.permute.xlu0 0
  %2253 = vperm.xlu0 %2252, %v2215
  %v2254 = vpop.permute.xlu0 %2253
  %v2256 = vmul.f32 %v2219, %v1887
  %v2257 = vmul.f32 %v2224, %v1888
  %v2258 = vmul.f32 %v2229, %v1889
  %v2259 = vmul.f32 %v2234, %v1890
  %v2260 = vmul.f32 %v2239, %v1891
  %v2261 = vmul.f32 %v2244, %v1892
  %v2262 = vmul.f32 %v2249, %v1893
  %v2263 = vmul.f32 %v2254, %v1894
  %v2264 = vsel %vm186, %v2256, 0.0
  %v2265 = vsel %vm186, %v2257, 0.0
  %v2266 = vadd.f32 %v2264, %v2265
  %v2267 = vsel %vm186, %v2258, 0.0
  %v2268 = vadd.f32 %v2266, %v2267
  %v2269 = vsel %vm186, %v2259, 0.0
  %v2270 = vadd.f32 %v2268, %v2269
  %v2271 = vsel %vm186, %v2260, 0.0
  %v2272 = vadd.f32 %v2270, %v2271
  %v2273 = vsel %vm186, %v2261, 0.0
  %v2274 = vadd.f32 %v2272, %v2273
  %v2275 = vsel %vm186, %v2262, 0.0
  %v2276 = vadd.f32 %v2274, %v2275
  %v2277 = vsel %vm186, %v2263, 0.0
  %v2278 = vadd.f32 %v2276, %v2277
  %v2279 = vpack.c.bf16 %v2278, %v2278
  %v2280 = vld [vmem:[%s8] sm:$0xf]
  %v2281 = vld [vmem:[%s8 + $0x4] sm:$0xf]
  %v2282 = vld [vmem:[%s8 + $0x8] sm:$0xf]
  %v2283 = vld [vmem:[%s8 + $0xc] sm:$0xf]
  %v2284 = vld [vmem:[%s8 + $0x10] sm:$0xf]
  %v2285 = vld [vmem:[%s8 + $0x14] sm:$0xf]
  %v2286 = vld [vmem:[%s8 + $0x18] sm:$0xf]
  %v2287 = vld [vmem:[%s8 + $0x1c] sm:$0xf]
  %v2288 = vld [vmem:[%s9] sm:$0x1]
  %v2290 = vlaneseq
  %v2291 = vshrl.u32 %v2290, 7
  %v2292 = vsub.s32 0, %v2291
  %v2293 = vrot.slane %v2288, %v2292
  %v2303 = vunpack.c.l.b16 %v2280
  %v2304 = vunpack.c.l.b16 %v2281
  %v2305 = vunpack.c.l.b16 %v2282
  %v2306 = vunpack.c.l.b16 %v2283
  %v2307 = vunpack.c.l.b16 %v2284
  %v2308 = vunpack.c.l.b16 %v2285
  %v2309 = vunpack.c.l.b16 %v2286
  %v2310 = vunpack.c.l.b16 %v2287
  %v2311 = vpack.c.b16 %v2304, %v2303
  %v2312 = vpack.c.b16 %v2306, %v2305
  %v2313 = vpack.c.b16 %v2308, %v2307
  %v2314 = vpack.c.b16 %v2310, %v2309
  %v2320 = vsel %vm186, %v2279, 0
  %2322 = vmatprep.subr.bf16.mxu0 0
  %2323 = vmatpush1.bf16.msra.mxu0 0
  %2324 = vmatprep.subr.bf16.mxu0 0
  %2325 = vmatpush1.bf16.msra.mxu0 0
  %2326 = vmatprep.subr.bf16.mxu0 0
  %2327 = vmatpush1.bf16.msra.mxu0 0
  %2328 = vmatprep.subr.bf16.mxu0 0
  %2329 = vmatpush1.bf16.msra.mxu0 0
  %2330 = vmatprep.subr.bf16.mxu0 0
  %2331 = vmatpush1.bf16.msra.mxu0 %v2314
  %2332 = vmatprep.subr.bf16.mxu0 0
  %2333 = vmatpush1.bf16.msra.mxu0 %v2313
  %2334 = vmatprep.subr.bf16.mxu0 0
  %2335 = vmatpush1.bf16.msra.mxu0 %v2312
  %2336 = vmatprep.subr.bf16.mxu0 0
  %2337 = vmatpush1.bf16.msra.mxu0 %v2311
  %2338 = vmatprep.subr.bf16.mxu0 0
  %2339 = vmatpush2.bf16.msra.mxu0 0
  %2340 = vmatprep.subr.bf16.mxu0 0
  %2341 = vmatpush2.bf16.msra.mxu0 0
  %2342 = vmatprep.subr.bf16.mxu0 0
  %2343 = vmatpush2.bf16.msra.mxu0 0
  %2344 = vmatprep.subr.bf16.mxu0 0
  %2345 = vmatpush2.bf16.msra.mxu0 0
  %2346 = vmatprep.subr.bf16.mxu0 0
  %2347 = vmatpush2.bf16.msra.mxu0 0
  %2348 = vmatprep.subr.bf16.mxu0 0
  %2349 = vmatpush2.bf16.msra.mxu0 0
  %2350 = vmatprep.subr.bf16.mxu0 0
  %2351 = vmatpush2.bf16.msra.mxu0 0
  %2352 = vmatprep.subr.bf16.mxu0 0
  %2353 = vmatpush2.bf16.msra.mxu0 0
  %2354 = vmatprep.mubr.bf16.mxu0 0
  %2355 = vmatmul.mubr.bf16.gmra.mxu0 %v2320
  %v2356 = vpop.f32.mrf.mxu0
  %v2357 = vadd.f32 %v2293, %v2356
  %v2358 = vpop.f32.mrf.mxu0
  %v2359 = vpop.f32.mrf.mxu0
  %v2360 = vpop.f32.mrf.mxu0
  %2361 = vdwg.mxu0
  %2362 = vst [vmem:[%s10] sm:$0xff] %v2357
  // Predicated region
  $region42: #{_lambda_.1} parent=0 // pred_check
    _
  $region43: #{_lambda_.1} parent=0 // pred_check_branch
    %2364 = sbr.rel (0) target = $region45
  $region44: #{_lambda_.1} parent=0 // pred_region
    _
  $region45: #{_lambda_.1} parent=0 // pred_fallthru
    _
  // Predicated region
  $region46: #{_lambda_.1} parent=0 // pred_check
    _
  $region47: #{_lambda_.1} parent=0 // pred_check_branch
    %2366 = sbr.rel (0) target = $region49
  $region48: #{_lambda_.1} parent=0 // pred_region
    _
  $region49: #{_lambda_.1} parent=0 // pred_fallthru
    _

</llo_original>
